<compile_context>
chip_gen: v5e
topology: v5e:2x2
jax: 0.10.0
libtpu: 0.0.40
codegen_flags: <defaults>
</compile_context>

<pallas_src>
import jax
import jax.numpy as jnp
from jax.experimental import pallas as pl
from jax.experimental.pallas import tpu as pltpu

K = 5              # spatial support of m, g, w kernels
PAD = K // 2       # 'same' padding for one conv stage
LAMBDA = 2.0       # INRF lambda (deterministic synthetic parameter)


def _gauss2d(k, sigma):
    ax = jnp.arange(k, dtype=jnp.float32) - (k - 1) / 2.0
    g = jnp.exp(-(ax ** 2) / (2.0 * sigma ** 2))
    g2 = jnp.outer(g, g)
    return (g2 / jnp.sum(g2)).astype(jnp.float32)


def _round_up(x, m):
    return -(-x // m) * m


def _tensorcores_per_chip():
    """Generation-aware core count: v7x has 2 TensorCores/chip, v5e/v6e have 1."""
    try:
        kind = jax.devices()[0].device_kind.lower()
    except Exception:
        return 1
    return 2 if "7" in kind else 1


def _pick_chunk_planes(n_planes, w, n_cores):
    """Planes per grid step.  Prefer: enough chunks to feed every TensorCore,
    weights that fit comfortably in VMEM, a lane-dense (multiple-of-128) output
    width, lane-aligned window stacking, and then the widest chunk (on 1-TC
    chips this collapses the grid to a single fat step)."""
    we = w + 2 * PAD

    def wbytes(ch):
        L = 2 * ch * w
        lwe = _round_up(2 * ch * we, 128)
        cw = ch * w
        return 4 * K * (L * lwe + L * cw + lwe * cw)

    cands = [d for d in range(1, n_planes + 1)
             if n_planes % d == 0 and wbytes(d) <= (8 << 20)]
    if not cands:
        return 1

    def key(ch):
        g = n_planes // ch
        cw = ch * w
        return (g >= n_cores,            # one chunk per TensorCore (v7x: 2)
                cw % 128 == 0,           # lane-dense acc / output matmul N
                (2 * cw) % 128 == 0,     # lane-aligned window stacking
                cw)                      # then the widest chunk (fewest steps)

    return max(cands, key=key)


def _banded(row_w, in_w, out_w, offset):
    # M[b, j] = row_w[b - j + offset] when the tap lands inside the image;
    # out-of-range taps hit the (implicit) zero padding and are dropped.
    b = jnp.arange(in_w)[:, None]
    j = jnp.arange(out_w)[None, :]
    idx = b - j + offset
    ok = (idx >= 0) & (idx < K)
    return jnp.where(ok, row_w[jnp.clip(idx, 0, K - 1)], 0.0).astype(jnp.float32)


def _kron_blocks(E, A):
    # E:(P,Q), A:(K,a,b) -> (K, P*a, Q*b)  (block-diagonal / signed block lift)
    Kk, a, b = A.shape
    P, Q = E.shape
    out = E[None, :, None, :, None] * A[:, None, :, None, :]
    return out.reshape(Kk, P * a, Q * b)


def _build_weights(CH, W, m_k, g_k, w_k):
    """Fused (tap-stacked) weight matrices for one chunk of CH planes of x and
    CH planes of y packed plane-major on the lane axis.  Built once per shape
    (hoisted out of the per-call path)."""
    f32 = jnp.float32
    We = W + 2 * PAD
    CW = CH * W
    L = 2 * CW                       # lane width of one H-shifted window
    LWe = 2 * CH * We                # lane width of diff/sig (unpadded)
    LWe_p = _round_up(LWe, 128)      # padded so tanh / sig stacking is lane-dense

    A_g = jax.vmap(lambda r: _banded(r, W, We, 2 * PAD))(g_k)        # (K, W, We)
    A_c = (jnp.arange(W)[:, None] ==
           (jnp.arange(We)[None, :] - PAD)).astype(f32)              # center pick
    A_gc = A_g.at[PAD].add(-A_c)                                     # fold "- u"
    A_w = jax.vmap(lambda r: _banded(r, We, W, 0))(w_k) * LAMBDA     # fold LAMBDA
    A_m = jax.vmap(lambda r: _banded(r, W, W, PAD))(m_k)             # (K, W, W)

    eye2 = jnp.eye(2 * CH, dtype=f32)
    sgn = jnp.concatenate([jnp.eye(CH, dtype=f32),
                           -jnp.eye(CH, dtype=f32)], axis=0)         # x:+ , y:-

    GC = _kron_blocks(eye2, A_gc)                                    # (K, L, LWe)
    GC = jnp.pad(GC, ((0, 0), (0, 0), (0, LWe_p - LWe)))
    GC = GC.reshape(K * L, LWe_p)          # tap-stacked g-stage, both images

    MB = _kron_blocks(sgn, A_m).reshape(K * L, CW)     # m-conv on (x - y)

    WB = _kron_blocks(sgn, A_w)                        # (K, LWe, CW)
    WB = jnp.pad(WB, ((0, 0), (0, LWe_p - LWe), (0, 0))).reshape(K * LWe_p, CW)

    return GC, MB, WB, LWe_p


def _inrf_loss_kernel(gc_ref, mb_ref, wb_ref, xy_ref, out_ref, s1_ref, sig_ref):
    """One chunk: CH planes of x then CH planes of y packed along the lane axis."""
    H, L = xy_ref.shape
    He = H + 2 * PAD
    pad2 = 2 * PAD
    f32 = jnp.float32

    # S1 window stack (He, K*L): the K H-shifted, H-zero-padded copies of (x‖y)
    # laid side-by-side on lanes (offsets di*L are multiples of 128 -> aligned).
    # Only the halo rows are zero-filled; W zero padding lives in the matrices.
    xy = xy_ref[...]
    for di in range(K):
        lanes = slice(di * L, (di + 1) * L)
        top = pad2 - di
        if top > 0:
            s1_ref[0:top, lanes] = jnp.zeros((top, L), f32)
        s1_ref[top:top + H, lanes] = xy
        if di > 0:
            s1_ref[top + H:He, lanes] = jnp.zeros((di, L), f32)

    # Stage 1: diff = g ⊛ u - u for BOTH images, all K taps fused into ONE
    # wide-contraction MXU matmul; tanh on the EUP; result kept in VMEM scratch.
    sig_ref[...] = jnp.tanh(
        jnp.dot(s1_ref[...], gc_ref[...], preferred_element_type=f32))

    # Stage 2: acc = m ⊛ (x - y) - LAMBDA * ( w ⊛ (sig_x - sig_y) ).
    # The interior rows of the S1 stack are exactly the m-conv windows -> one
    # matmul; the K H-shifted sig windows are stacked on lanes (offsets di*LWe_p
    # are multiples of 128 -> aligned) -> one matmul.  No zero-init accumulator.
    acc = jnp.dot(s1_ref[PAD:PAD + H, :], mb_ref[...],
                  preferred_element_type=f32)
    sig_w = jnp.concatenate([sig_ref[di:di + H, :] for di in range(K)], axis=-1)
    acc = acc - jnp.dot(sig_w, wb_ref[...], preferred_element_type=f32)

    # Per-chunk partial sum of squares (final mean + sqrt is JAX glue).
    out_ref[...] = jnp.sum(acc * acc).reshape(1, 1)


def make_inrf_iq_loss(shape, m_k, g_k, w_k):
    """Factory: precomputes the fused conv matrices ONCE for `shape` and returns
    a jitted loss(output, target) = sqrt(MSE(INRF_B(output), INRF_B(target)))."""
    B, C, H, W = shape
    N = B * C
    f32 = jnp.float32

    n_cores = _tensorcores_per_chip()
    CH = _pick_chunk_planes(N, W, n_cores)     # planes per grid step
    G = N // CH                                # number of chunks (grid size)
    CW = CH * W
    L = 2 * CW
    He = H + 2 * PAD

    GC, MB, WB, LWe_p = _build_weights(CH, W, m_k.astype(f32),
                                       g_k.astype(f32), w_k.astype(f32))

    grid_call = pl.pallas_call(
        _inrf_loss_kernel,
        out_shape=jax.ShapeDtypeStruct((G, 1, 1), f32),
        grid=(G,),
        in_specs=[
            pl.BlockSpec((K * L, LWe_p), lambda g: (0, 0)),    # GC (constant)
            pl.BlockSpec((K * L, CW), lambda g: (0, 0)),       # MB (constant)
            pl.BlockSpec((K * LWe_p, CW), lambda g: (0, 0)),   # WB (constant)
            pl.BlockSpec((None, H, L), lambda g: (g, 0, 0)),   # per-chunk xy
        ],
        out_specs=pl.BlockSpec((None, 1, 1), lambda g: (g, 0, 0)),
        scratch_shapes=[pltpu.VMEM((He, K * L), f32),      # S1 window stack
                        pltpu.VMEM((He, LWe_p), f32)],     # sig
        compiler_params=pltpu.CompilerParams(
            dimension_semantics=("parallel",)),
    )

    @jax.jit
    def loss_fn(output, target):
        x = output.astype(f32).reshape(N, H, W)
        y = target.astype(f32).reshape(N, H, W)

        def chunk_lanes(a):                       # (N,H,W) -> (G, H, CH*W)
            return a.reshape(G, CH, H, W).transpose(0, 2, 1, 3).reshape(G, H, CW)

        xy = jnp.concatenate([chunk_lanes(x), chunk_lanes(y)], axis=-1)  # (G,H,L)
        partial_ssq = grid_call(GC, MB, WB, xy)
        mse = jnp.sum(partial_ssq) / jnp.float32(N * H * W)
        return jnp.sqrt(mse)

    return loss_fn


def _inrf_iq_loss_ref(output, target, m_k, g_k, w_k):
    """Pure-JAX reference with the original padding/shift (tap-loop) semantics."""
    B, C, H, W = output.shape
    pad = 2 * PAD
    He, We = H + 2 * PAD, W + 2 * PAD

    def resp(x):
        p = jnp.pad(x.astype(jnp.float32),
                    ((0, 0), (0, 0), (pad, pad), (pad, pad)))
        gblur = jnp.zeros((B, C, He, We), jnp.float32)
        for di in range(K):
            for dj in range(K):
                gblur = gblur + g_k[di, dj] * p[:, :, di:di + He, dj:dj + We]
        center = p[:, :, PAD:PAD + He, PAD:PAD + We]
        sig = jnp.tanh(gblur - center)
        wconv = jnp.zeros((B, C, H, W), jnp.float32)
        mconv = jnp.zeros((B, C, H, W), jnp.float32)
        for di in range(K):
            for dj in range(K):
                wconv = wconv + w_k[di, dj] * sig[:, :, di:di + H, dj:dj + W]
                mconv = mconv + m_k[di, dj] * p[:, :, PAD + di:PAD + di + H,
                                                PAD + dj:PAD + dj + W]
        return mconv - LAMBDA * wconv

    d = resp(output) - resp(target)
    return jnp.sqrt(jnp.mean(d * d))


if __name__ == "__main__":
    # Deterministic synthetic INRF_B parameters.
    m_k = _gauss2d(K, 1.0)
    g_k = _gauss2d(K, 1.5)
    w_k = _gauss2d(K, 2.5)

    # Small NCHW inputs consistent with an image-quality metric forward pass.
    shape = (2, 4, 16, 16)
    key = jax.random.PRNGKey(0)
    k1, k2 = jax.random.split(key)
    output = jax.random.uniform(k1, shape, dtype=jnp.float32)
    target = jax.random.uniform(k2, shape, dtype=jnp.float32)

    loss_fn = make_inrf_iq_loss(shape, m_k, g_k, w_k)   # weights built once here
    loss = jax.block_until_ready(loss_fn(output, target))

    loss_ref = jax.block_until_ready(
        _inrf_iq_loss_ref(output, target, m_k, g_k, w_k))
    assert jnp.allclose(loss, loss_ref, rtol=1e-4, atol=1e-5), (loss, loss_ref)

    print("KERNEL_OK")
</pallas_src>

<mosaic_0001>
module attributes {stable_mosaic.version = 11 : i64} {
  func.func @_inrf_loss_kernel(%arg0: i32, %arg1: memref<1280x384xf32, #tpu.memory_space<vmem>>, %arg2: memref<1280x128xf32, #tpu.memory_space<vmem>>, %arg3: memref<1920x128xf32, #tpu.memory_space<vmem>>, %arg4: memref<1x16x256xf32, #tpu.memory_space<vmem>>, %arg5: memref<1x1x1xf32, #tpu.memory_space<vmem>>, %arg6: memref<20x1280xf32, #tpu.memory_space<vmem>>, %arg7: memref<20x384xf32, #tpu.memory_space<vmem>>) attributes {dimension_semantics = [#tpu.dimension_semantics<parallel>], iteration_bounds = array<i64: 1>, scalar_prefetch = 0 : i64, scratch_operands = 2 : i64, tpu.core_type = #tpu.core_type<tc>, window_params = [{pipeline_mode = #tpu.pipeline_mode<synchronous>, transform_indices = @transform_0, window_bounds = array<i64: 1280, 384>}, {pipeline_mode = #tpu.pipeline_mode<synchronous>, transform_indices = @transform_1, window_bounds = array<i64: 1280, 128>}, {pipeline_mode = #tpu.pipeline_mode<synchronous>, transform_indices = @transform_2, window_bounds = array<i64: 1920, 128>}, {transform_indices = @transform_3, window_bounds = array<i64: 1, 16, 256>}, {transform_indices = @transform_4, window_bounds = array<i64: 1, 1, 1>}]} {
    %c0 = arith.constant 0 : index
    %c0_0 = arith.constant 0 : index
    %c0_1 = arith.constant 0 : index
    %0 = vector.load %arg4[%c0, %c0_0, %c0_1] : memref<1x16x256xf32, #tpu.memory_space<vmem>>, vector<1x16x256xf32>
    %1 = vector.shape_cast %0 : vector<1x16x256xf32> to vector<16x256xf32>
    %cst = arith.constant 0.000000e+00 : f32
    %2 = vector.broadcast %cst : f32 to vector<4x256xf32>
    %c0_2 = arith.constant 0 : index
    %c0_3 = arith.constant 0 : index
    %3 = vector.load %arg6[%c0_2, %c0_3] : memref<20x1280xf32, #tpu.memory_space<vmem>>, vector<4x256xf32>
    tpu.vector_store %arg6[%c0_2, %c0_3], %2 {strides = array<i32>} : memref<20x1280xf32, #tpu.memory_space<vmem>>, vector<4x256xf32>,
    %c4 = arith.constant 4 : index
    %c0_4 = arith.constant 0 : index
    %4 = vector.load %arg6[%c4, %c0_4] : memref<20x1280xf32, #tpu.memory_space<vmem>>, vector<16x256xf32>
    tpu.vector_store %arg6[%c4, %c0_4], %1 {strides = array<i32>} : memref<20x1280xf32, #tpu.memory_space<vmem>>, vector<16x256xf32>,
    %cst_5 = arith.constant 0.000000e+00 : f32
    %5 = vector.broadcast %cst_5 : f32 to vector<3x256xf32>
    %c0_6 = arith.constant 0 : index
    %c256 = arith.constant 256 : index
    %6 = vector.load %arg6[%c0_6, %c256] : memref<20x1280xf32, #tpu.memory_space<vmem>>, vector<3x256xf32>
    tpu.vector_store %arg6[%c0_6, %c256], %5 {strides = array<i32>} : memref<20x1280xf32, #tpu.memory_space<vmem>>, vector<3x256xf32>,
    %c3 = arith.constant 3 : index
    %c256_7 = arith.constant 256 : index
    %7 = vector.load %arg6[%c3, %c256_7] : memref<20x1280xf32, #tpu.memory_space<vmem>>, vector<16x256xf32>
    tpu.vector_store %arg6[%c3, %c256_7], %1 {strides = array<i32>} : memref<20x1280xf32, #tpu.memory_space<vmem>>, vector<16x256xf32>,
    %cst_8 = arith.constant 0.000000e+00 : f32
    %8 = vector.broadcast %cst_8 : f32 to vector<1x256xf32>
    %c19 = arith.constant 19 : index
    %c256_9 = arith.constant 256 : index
    %9 = vector.load %arg6[%c19, %c256_9] : memref<20x1280xf32, #tpu.memory_space<vmem>>, vector<1x256xf32>
    tpu.vector_store %arg6[%c19, %c256_9], %8 {strides = array<i32>} : memref<20x1280xf32, #tpu.memory_space<vmem>>, vector<1x256xf32>,
    %cst_10 = arith.constant 0.000000e+00 : f32
    %10 = vector.broadcast %cst_10 : f32 to vector<2x256xf32>
    %c0_11 = arith.constant 0 : index
    %c512 = arith.constant 512 : index
    %11 = vector.load %arg6[%c0_11, %c512] : memref<20x1280xf32, #tpu.memory_space<vmem>>, vector<2x256xf32>
    tpu.vector_store %arg6[%c0_11, %c512], %10 {strides = array<i32>} : memref<20x1280xf32, #tpu.memory_space<vmem>>, vector<2x256xf32>,
    %c2 = arith.constant 2 : index
    %c512_12 = arith.constant 512 : index
    %12 = vector.load %arg6[%c2, %c512_12] : memref<20x1280xf32, #tpu.memory_space<vmem>>, vector<16x256xf32>
    tpu.vector_store %arg6[%c2, %c512_12], %1 {strides = array<i32>} : memref<20x1280xf32, #tpu.memory_space<vmem>>, vector<16x256xf32>,
    %cst_13 = arith.constant 0.000000e+00 : f32
    %13 = vector.broadcast %cst_13 : f32 to vector<2x256xf32>
    %c18 = arith.constant 18 : index
    %c512_14 = arith.constant 512 : index
    %14 = vector.load %arg6[%c18, %c512_14] : memref<20x1280xf32, #tpu.memory_space<vmem>>, vector<2x256xf32>
    tpu.vector_store %arg6[%c18, %c512_14], %13 {strides = array<i32>} : memref<20x1280xf32, #tpu.memory_space<vmem>>, vector<2x256xf32>,
    %cst_15 = arith.constant 0.000000e+00 : f32
    %15 = vector.broadcast %cst_15 : f32 to vector<1x256xf32>
    %c0_16 = arith.constant 0 : index
    %c768 = arith.constant 768 : index
    %16 = vector.load %arg6[%c0_16, %c768] : memref<20x1280xf32, #tpu.memory_space<vmem>>, vector<1x256xf32>
    tpu.vector_store %arg6[%c0_16, %c768], %15 {strides = array<i32>} : memref<20x1280xf32, #tpu.memory_space<vmem>>, vector<1x256xf32>,
    %c1 = arith.constant 1 : index
    %c768_17 = arith.constant 768 : index
    %17 = vector.load %arg6[%c1, %c768_17] : memref<20x1280xf32, #tpu.memory_space<vmem>>, vector<16x256xf32>
    tpu.vector_store %arg6[%c1, %c768_17], %1 {strides = array<i32>} : memref<20x1280xf32, #tpu.memory_space<vmem>>, vector<16x256xf32>,
    %cst_18 = arith.constant 0.000000e+00 : f32
    %18 = vector.broadcast %cst_18 : f32 to vector<3x256xf32>
    %c17 = arith.constant 17 : index
    %c768_19 = arith.constant 768 : index
    %19 = vector.load %arg6[%c17, %c768_19] : memref<20x1280xf32, #tpu.memory_space<vmem>>, vector<3x256xf32>
    tpu.vector_store %arg6[%c17, %c768_19], %18 {strides = array<i32>} : memref<20x1280xf32, #tpu.memory_space<vmem>>, vector<3x256xf32>,
    %c0_20 = arith.constant 0 : index
    %c1024 = arith.constant 1024 : index
    %20 = vector.load %arg6[%c0_20, %c1024] : memref<20x1280xf32, #tpu.memory_space<vmem>>, vector<16x256xf32>
    tpu.vector_store %arg6[%c0_20, %c1024], %1 {strides = array<i32>} : memref<20x1280xf32, #tpu.memory_space<vmem>>, vector<16x256xf32>,
    %cst_21 = arith.constant 0.000000e+00 : f32
    %21 = vector.broadcast %cst_21 : f32 to vector<4x256xf32>
    %c16 = arith.constant 16 : index
    %c1024_22 = arith.constant 1024 : index
    %22 = vector.load %arg6[%c16, %c1024_22] : memref<20x1280xf32, #tpu.memory_space<vmem>>, vector<4x256xf32>
    tpu.vector_store %arg6[%c16, %c1024_22], %21 {strides = array<i32>} : memref<20x1280xf32, #tpu.memory_space<vmem>>, vector<4x256xf32>,
    %c0_23 = arith.constant 0 : index
    %c0_24 = arith.constant 0 : index
    %23 = vector.load %arg6[%c0_23, %c0_24] : memref<20x1280xf32, #tpu.memory_space<vmem>>, vector<20x1280xf32>
    %c0_25 = arith.constant 0 : index
    %c0_26 = arith.constant 0 : index
    %24 = vector.load %arg1[%c0_25, %c0_26] : memref<1280x384xf32, #tpu.memory_space<vmem>>, vector<1280x384xf32>
    %cst_27 = arith.constant dense<0.000000e+00> : vector<20x384xf32>
    %25 = tpu.matmul %23, %24, %cst_27 {dimension_numbers = #tpu.dot_dimension_numbers<[1], [0], [0], [1], [0, 0, 1, 1], [], []>} : vector<20x1280xf32>, vector<1280x384xf32>, vector<20x384xf32> -> vector<20x384xf32>
    %26 = math.tanh %25 : vector<20x384xf32>
    %c0_28 = arith.constant 0 : index
    %c0_29 = arith.constant 0 : index
    %27 = vector.load %arg7[%c0_28, %c0_29] : memref<20x384xf32, #tpu.memory_space<vmem>>, vector<20x384xf32>
    tpu.vector_store %arg7[%c0_28, %c0_29], %26 {strides = array<i32>} : memref<20x384xf32, #tpu.memory_space<vmem>>, vector<20x384xf32>,
    %c2_30 = arith.constant 2 : index
    %c0_31 = arith.constant 0 : index
    %28 = vector.load %arg6[%c2_30, %c0_31] : memref<20x1280xf32, #tpu.memory_space<vmem>>, vector<16x1280xf32>
    %c0_32 = arith.constant 0 : index
    %c0_33 = arith.constant 0 : index
    %29 = vector.load %arg2[%c0_32, %c0_33] : memref<1280x128xf32, #tpu.memory_space<vmem>>, vector<1280x128xf32>
    %cst_34 = arith.constant dense<0.000000e+00> : vector<16x128xf32>
    %30 = tpu.matmul %28, %29, %cst_34 {dimension_numbers = #tpu.dot_dimension_numbers<[1], [0], [0], [1], [0, 0, 1, 1], [], []>} : vector<16x1280xf32>, vector<1280x128xf32>, vector<16x128xf32> -> vector<16x128xf32>
    %c0_35 = arith.constant 0 : index
    %c0_36 = arith.constant 0 : index
    %31 = vector.load %arg7[%c0_35, %c0_36] : memref<20x384xf32, #tpu.memory_space<vmem>>, vector<16x384xf32>
    %c1_37 = arith.constant 1 : index
    %c0_38 = arith.constant 0 : index
    %32 = vector.load %arg7[%c1_37, %c0_38] : memref<20x384xf32, #tpu.memory_space<vmem>>, vector<16x384xf32>
    %c2_39 = arith.constant 2 : index
    %c0_40 = arith.constant 0 : index
    %33 = vector.load %arg7[%c2_39, %c0_40] : memref<20x384xf32, #tpu.memory_space<vmem>>, vector<16x384xf32>
    %c3_41 = arith.constant 3 : index
    %c0_42 = arith.constant 0 : index
    %34 = vector.load %arg7[%c3_41, %c0_42] : memref<20x384xf32, #tpu.memory_space<vmem>>, vector<16x384xf32>
    %c4_43 = arith.constant 4 : index
    %c0_44 = arith.constant 0 : index
    %35 = vector.load %arg7[%c4_43, %c0_44] : memref<20x384xf32, #tpu.memory_space<vmem>>, vector<16x384xf32>
    %36 = tpu.concatenate %31, %32, %33, %34, %35 in 1 : vector<16x384xf32>, vector<16x384xf32>, vector<16x384xf32>, vector<16x384xf32>, vector<16x384xf32> -> vector<16x1920xf32>
    %c0_45 = arith.constant 0 : index
    %c0_46 = arith.constant 0 : index
    %37 = vector.load %arg3[%c0_45, %c0_46] : memref<1920x128xf32, #tpu.memory_space<vmem>>, vector<1920x128xf32>
    %cst_47 = arith.constant dense<0.000000e+00> : vector<16x128xf32>
    %38 = tpu.matmul %36, %37, %cst_47 {dimension_numbers = #tpu.dot_dimension_numbers<[1], [0], [0], [1], [0, 0, 1, 1], [], []>} : vector<16x1920xf32>, vector<1920x128xf32>, vector<16x128xf32> -> vector<16x128xf32>
    %39 = arith.subf %30, %38 : vector<16x128xf32>
    %40 = arith.mulf %39, %39 : vector<16x128xf32>
    %41 = vector.shape_cast %40 : vector<16x128xf32> to vector<1x16x128xf32>
    %cst_48 = arith.constant dense<0.000000e+00> : vector<1xf32>
    %42 = vector.multi_reduction <add>, %41, %cst_48 [1, 2] : vector<1x16x128xf32> to vector<1xf32>
    %43 = vector.shape_cast %42 : vector<1xf32> to vector<1x1x1xf32>
    %44 = vector.extract %43[0, 0, 0] : f32 from vector<1x1x1xf32>
    %45 = vector.broadcast %44 : f32 to vector<1x1xf32>
    %c0_49 = arith.constant 0 : index
    %c0_50 = arith.constant 0 : index
    %c0_51 = arith.constant 0 : index
    %46 = vector.load %arg5[%c0_49, %c0_50, %c0_51] : memref<1x1x1xf32, #tpu.memory_space<vmem>>, vector<1x1x1xf32>
    %47 = vector.shape_cast %46 : vector<1x1x1xf32> to vector<1x1xf32>
    %48 = vector.shape_cast %45 : vector<1x1xf32> to vector<1x1x1xf32>
    tpu.vector_store %arg5[%c0_49, %c0_50, %c0_51], %48 {strides = array<i32>} : memref<1x1x1xf32, #tpu.memory_space<vmem>>, vector<1x1x1xf32>,
    return
  }
  func.func @transform_0(%arg0: i32) -> (i32, i32) {
    %c0_i32 = arith.constant 0 : i32
    %c0_i32_0 = arith.constant 0 : i32
    %c0_i32_1 = arith.constant 0 : i32
    return %c0_i32, %c0_i32_0 : i32, i32
  }
  func.func @transform_1(%arg0: i32) -> (i32, i32) {
    %c0_i32 = arith.constant 0 : i32
    %c0_i32_0 = arith.constant 0 : i32
    %c0_i32_1 = arith.constant 0 : i32
    return %c0_i32, %c0_i32_0 : i32, i32
  }
  func.func @transform_2(%arg0: i32) -> (i32, i32) {
    %c0_i32 = arith.constant 0 : i32
    %c0_i32_0 = arith.constant 0 : i32
    %c0_i32_1 = arith.constant 0 : i32
    return %c0_i32, %c0_i32_0 : i32, i32
  }
  func.func @transform_3(%arg0: i32) -> (i32, i32, i32) {
    %c0_i32 = arith.constant 0 : i32
    %c0_i32_0 = arith.constant 0 : i32
    %c0_i32_1 = arith.constant 0 : i32
    return %arg0, %c0_i32, %c0_i32_0 : i32, i32, i32
  }
  func.func @transform_4(%arg0: i32) -> (i32, i32, i32) {
    %c0_i32 = arith.constant 0 : i32
    %c0_i32_0 = arith.constant 0 : i32
    %c0_i32_1 = arith.constant 0 : i32
    return %arg0, %c0_i32, %c0_i32_0 : i32, i32, i32
  }
}

</mosaic_0001>

<llo_original>
// kernel: loss_fn.1
$region0: #{loss_fn.1}
  #allocation0 [shape = 'u32[]', space=smem, size = 0x4, offset = 0x4, fixed_abs, tag = 'smem constant byte address 0x4 - core index']
  #allocation1 [shape = 'u32[72,128]{1,0:T(1,128)}', space=vmem, size = 0x9000, scoped, tag = 'internal scratch']
  #allocation2 [shape = 'f32[20,1280]{1,0:T(8,128)}', space=vmem, size = 0x1e000, scoped, tag = 'scratch operand']
  #allocation3 [shape = 'f32[20,384]{1,0:T(8,128)}', space=vmem, size = 0x9000, scoped, tag = 'scratch operand']
  %s0 = inlined_call_operand.hbm [shape: f32[1280,384], index: 0, kind: input, shape index: {}]
  %s1 = inlined_call_operand.hbm [shape: f32[1280,128], index: 1, kind: input, shape index: {}]
  %s2 = inlined_call_operand.hbm [shape: f32[1920,128], index: 2, kind: input, shape index: {}]
  %s3 = inlined_call_operand.vmem [shape: f32[1,16,256], index: 3, kind: input, shape index: {}]
  %s4 = inlined_call_operand.hbm [shape: f32[1,1,1], index: 4, kind: output, shape index: {}]
  %s5 = sld [smem:[#allocation0]]
  $region38: #{loss_fn.1} parent=0
    _
  %s7 = ssub.s32 1, %s5
  %s8 = scalar_select 0, %s7, %s5
  $region1: #{loss_fn.1} parent=0
    #allocation4 [shape = 'u8[1966080]{0}', space=vmem, size = 0x1e0000, scoped, tag = 'input window, operand 0, single buffered']
    #allocation5 [shape = 's32[1]{0}', space=sflag, size = 0x4, scoped, tag = 'scoped memory for loss_fn.1']
    #allocation6 [shape = 's32[1]{0}', space=sflag, size = 0x4, scoped, tag = 'scoped memory for loss_fn.1']
    #allocation7 [shape = 'u8[655360]{0}', space=vmem, size = 0xa0000, scoped, tag = 'input window, operand 1, single buffered']
    #allocation8 [shape = 's32[1]{0}', space=sflag, size = 0x4, scoped, tag = 'scoped memory for loss_fn.1']
    #allocation9 [shape = 'u8[983040]{0}', space=vmem, size = 0xf0000, scoped, tag = 'input window, operand 2, single buffered']
    #allocation10 [shape = 'u8[512]{0}', space=vmem, size = 0x400, scoped, tag = 'output window, operand 0, single buffered']
    %9 = vsyncpa [#allocation5], 0
    %10 = vsyncpa [#allocation8], 0
    %11 = vsyncpa [#allocation6], 0
    // Predicated region
    $region2: #{loss_fn.1} parent=1 // pred_check
      _
    $region3: #{loss_fn.1} parent=1 // pred_check_branch
      %13 = sbr.rel (0) target = $region5
    $region4: #{loss_fn.1} parent=1 // pred_region
      %15 = vsyncadd [#allocation5], 0
      %s16 = sshll.u32 %s0, 4
      %s17 = int_to_ptr.hbm [resolvable:$true] %s16
      %s18 = sshll.u32 [#allocation4], 4
      %s19 = int_to_ptr.vmem [resolvable:$true] %s18
      %24 = dma.hbm_to_vmem [thread:$0]  %s17, 61440, %s19, [#allocation5], 384, 384, 24
    $region5: #{loss_fn.1} parent=1 // pred_fallthru
      _
    // Predicated region
    $region6: #{loss_fn.1} parent=1 // pred_check
      _
    $region7: #{loss_fn.1} parent=1 // pred_check_branch
      %26 = sbr.rel (0) target = $region9
    $region8: #{loss_fn.1} parent=1 // pred_region
      %28 = vsyncadd [#allocation8], 0
      %s29 = sshll.u32 %s1, 4
      %s30 = int_to_ptr.hbm [resolvable:$true] %s29
      %s31 = sshll.u32 [#allocation7], 4
      %s32 = int_to_ptr.vmem [resolvable:$true] %s31
      %37 = dma.hbm_to_vmem [thread:$0]  %s30, 20480, %s32, [#allocation8], 128, 128, 8
    $region9: #{loss_fn.1} parent=1 // pred_fallthru
      _
    // Predicated region
    $region10: #{loss_fn.1} parent=1 // pred_check
      _
    $region11: #{loss_fn.1} parent=1 // pred_check_branch
      %39 = sbr.rel (0) target = $region13
    $region12: #{loss_fn.1} parent=1 // pred_region
      %41 = vsyncadd [#allocation8], 0
      %s42 = sshll.u32 %s2, 4
      %s43 = int_to_ptr.hbm [resolvable:$true] %s42
      %s44 = sshll.u32 [#allocation9], 4
      %s45 = int_to_ptr.vmem [resolvable:$true] %s44
      %50 = dma.hbm_to_vmem [thread:$0]  %s43, 30720, %s45, [#allocation8], 128, 128, 8
    $region13: #{loss_fn.1} parent=1 // pred_fallthru
      _
    // Predicated region
    $region14: #{loss_fn.1} parent=1 // pred_check
      _
    $region15: #{loss_fn.1} parent=1 // pred_check_branch
      %52 = sbr.rel (0) target = $region17
    $region16: #{loss_fn.1} parent=1 // pred_region
      _
    $region17: #{loss_fn.1} parent=1 // pred_fallthru
      _
    // Predicated region
    $region18: #{loss_fn.1} parent=1 // pred_check
      _
    $region19: #{loss_fn.1} parent=1 // pred_check_branch
      %54 = sbr.rel (0) target = $region21
    $region20: #{loss_fn.1} parent=1 // pred_region
      %56 = dma.done [#allocation5], 61440
    $region21: #{loss_fn.1} parent=1 // pred_fallthru
      _
    // Predicated region
    $region22: #{loss_fn.1} parent=1 // pred_check
      _
    $region23: #{loss_fn.1} parent=1 // pred_check_branch
      %58 = sbr.rel (0) target = $region25
    $region24: #{loss_fn.1} parent=1 // pred_region
      %60 = dma.done [#allocation8], 20480
    $region25: #{loss_fn.1} parent=1 // pred_fallthru
      _
    // Predicated region
    $region26: #{loss_fn.1} parent=1 // pred_check
      _
    $region27: #{loss_fn.1} parent=1 // pred_check_branch
      %62 = sbr.rel (0) target = $region29
    $region28: #{loss_fn.1} parent=1 // pred_region
      %64 = dma.done [#allocation8], 30720
    $region29: #{loss_fn.1} parent=1 // pred_fallthru
      _
    %v65 = vld [vmem:[%s3] sm:$0xff]
    %v66 = vld [vmem:[%s3 + $0x8] sm:$0xff]
    %v67 = vld [vmem:[%s3 + $0x10] sm:$0xff]
    %v68 = vld [vmem:[%s3 + $0x18] sm:$0xff]
    %69 = vst [vmem:[#allocation2] sm:$0xf] 0.0
    %70 = vst [vmem:[#allocation2 + $0x8] sm:$0xf] 0.0
    %vm75 = vcmask 1043456
    %v76 = vrot.slane %v65, 4
    %v77 = vrot.slane %v66, 4
    %v78 = vrot.slane %v67, 4
    %v79 = vsel %vm75, %v76, %v78
    %v80 = vrot.slane %v68, 4
    %v81 = vsel %vm75, %v77, %v80
    %88 = vst [vmem:[#allocation2] sm:$0xf0] %v76
    %89 = vst [vmem:[#allocation2 + $0x8] sm:$0xf0] %v77
    %90 = vst [vmem:[#allocation2 + $0x50] sm:$0xff] %v79
    %91 = vst [vmem:[#allocation2 + $0x58] sm:$0xff] %v81
    %92 = vst [vmem:[#allocation2 + $0xa0] sm:$0xf] %v78
    %93 = vst [vmem:[#allocation2 + $0xa8] sm:$0xf] %v80
    %94 = vst [vmem:[#allocation2 + $0x10] sm:$0x7] 0.0
    %95 = vst [vmem:[#allocation2 + $0x18] sm:$0x7] 0.0
    %vm96 = vcmask 1042432
    %v97 = vrot.slane %v65, 5
    %v98 = vrot.slane %v66, 5
    %v99 = vrot.slane %v67, 5
    %v100 = vsel %vm96, %v97, %v99
    %v101 = vrot.slane %v68, 5
    %v102 = vsel %vm96, %v98, %v101
    %109 = vst [vmem:[#allocation2 + $0x10] sm:$0xf8] %v97
    %110 = vst [vmem:[#allocation2 + $0x18] sm:$0xf8] %v98
    %111 = vst [vmem:[#allocation2 + $0x60] sm:$0xff] %v100
    %112 = vst [vmem:[#allocation2 + $0x68] sm:$0xff] %v102
    %113 = vst [vmem:[#allocation2 + $0xb0] sm:$0x7] %v99
    %114 = vst [vmem:[#allocation2 + $0xb8] sm:$0x7] %v101
    %v115 = vlaneseq
    %vm116 = vcmp.ge.s32.totalorder %v115, 0
    %vm117 = vcmp.lt.s32.totalorder %v115, 256
    %vm118 = vmand %vm116, %vm117
    %s119 = scalar_lea.vmem [#allocation2], 179
    %120 = vst.msk [vmem:[%s119] ss:$8 sm:$0x3] %vm118, 0.0
    %121 = vst.msk [vmem:[%s119] ss:$8 sm:$0x0] %vm118, 0.0
    %122 = vst [vmem:[#allocation2 + $0x20] sm:$0x3] 0.0
    %123 = vst [vmem:[#allocation2 + $0x28] sm:$0x3] 0.0
    %vm124 = vcmask 1041408
    %v125 = vrot.slane %v65, 6
    %v126 = vrot.slane %v66, 6
    %v127 = vrot.slane %v67, 6
    %v128 = vsel %vm124, %v125, %v127
    %v129 = vrot.slane %v68, 6
    %v130 = vsel %vm124, %v126, %v129
    %137 = vst [vmem:[#allocation2 + $0x20] sm:$0xfc] %v125
    %138 = vst [vmem:[#allocation2 + $0x28] sm:$0xfc] %v126
    %139 = vst [vmem:[#allocation2 + $0x70] sm:$0xff] %v128
    %140 = vst [vmem:[#allocation2 + $0x78] sm:$0xff] %v130
    %141 = vst [vmem:[#allocation2 + $0xc0] sm:$0x3] %v127
    %142 = vst [vmem:[#allocation2 + $0xc8] sm:$0x3] %v129
    %143 = vst [vmem:[#allocation2 + $0xc0] sm:$0xc] 0.0
    %144 = vst [vmem:[#allocation2 + $0xc8] sm:$0xc] 0.0
    %s145 = scalar_lea.vmem [#allocation2], 48
    %146 = vst.msk [vmem:[%s145] ss:$8 sm:$0x3] %vm118, 0.0
    %147 = vst.msk [vmem:[%s145] ss:$8 sm:$0x0] %vm118, 0.0
    %vm148 = vcmask 1040384
    %v149 = vrot.slane %v65, 7
    %v150 = vrot.slane %v66, 7
    %v151 = vrot.slane %v67, 7
    %v152 = vsel %vm148, %v149, %v151
    %v153 = vrot.slane %v68, 7
    %v154 = vsel %vm148, %v150, %v153
    %161 = vst [vmem:[#allocation2 + $0x30] sm:$0xfe] %v149
    %162 = vst [vmem:[#allocation2 + $0x38] sm:$0xfe] %v150
    %163 = vst [vmem:[#allocation2 + $0x80] sm:$0xff] %v152
    %164 = vst [vmem:[#allocation2 + $0x88] sm:$0xff] %v154
    %165 = vst [vmem:[#allocation2 + $0xd0] sm:$0x1] %v151
    %166 = vst [vmem:[#allocation2 + $0xd8] sm:$0x1] %v153
    %167 = vst [vmem:[#allocation2 + $0xd0] sm:$0xe] 0.0
    %168 = vst [vmem:[#allocation2 + $0xd8] sm:$0xe] 0.0
    %169 = vst [vmem:[#allocation2 + $0x40] sm:$0xff] %v65
    %170 = vst [vmem:[#allocation2 + $0x48] sm:$0xff] %v66
    %171 = vst [vmem:[#allocation2 + $0x90] sm:$0xff] %v67
    %172 = vst [vmem:[#allocation2 + $0x98] sm:$0xff] %v68
    %173 = vst [vmem:[#allocation2 + $0xe0] sm:$0xf] 0.0
    %174 = vst [vmem:[#allocation2 + $0xe8] sm:$0xf] 0.0
    %v175 = vld [vmem:[#allocation2] sm:$0xff]
    %v176 = vld [vmem:[#allocation2 + $0x8] sm:$0xff]
    %v177 = vld [vmem:[#allocation2 + $0x10] sm:$0xff]
    %v178 = vld [vmem:[#allocation2 + $0x18] sm:$0xff]
    %v179 = vld [vmem:[#allocation2 + $0x20] sm:$0xff]
    %v180 = vld [vmem:[#allocation2 + $0x28] sm:$0xff]
    %v181 = vld [vmem:[#allocation2 + $0x30] sm:$0xff]
    %v182 = vld [vmem:[#allocation2 + $0x38] sm:$0xff]
    %v183 = vld [vmem:[#allocation2 + $0x40] sm:$0xff]
    %v184 = vld [vmem:[#allocation2 + $0x48] sm:$0xff]
    %v185 = vld [vmem:[#allocation2 + $0x50] sm:$0xff]
    %v186 = vld [vmem:[#allocation2 + $0x58] sm:$0xff]
    %v187 = vld [vmem:[#allocation2 + $0x60] sm:$0xff]
    %v188 = vld [vmem:[#allocation2 + $0x68] sm:$0xff]
    %v189 = vld [vmem:[#allocation2 + $0x70] sm:$0xff]
    %v190 = vld [vmem:[#allocation2 + $0x78] sm:$0xff]
    %v191 = vld [vmem:[#allocation2 + $0x80] sm:$0xff]
    %v192 = vld [vmem:[#allocation2 + $0x88] sm:$0xff]
    %v193 = vld [vmem:[#allocation2 + $0x90] sm:$0xff]
    %v194 = vld [vmem:[#allocation2 + $0x98] sm:$0xff]
    %v195 = vld [vmem:[#allocation2 + $0xa0] sm:$0xf]
    %v196 = vld [vmem:[#allocation2 + $0xa8] sm:$0xf]
    %v197 = vld [vmem:[#allocation2 + $0xb0] sm:$0xf]
    %v198 = vld [vmem:[#allocation2 + $0xb8] sm:$0xf]
    %v199 = vld [vmem:[#allocation2 + $0xc0] sm:$0xf]
    %v200 = vld [vmem:[#allocation2 + $0xc8] sm:$0xf]
    %v201 = vld [vmem:[#allocation2 + $0xd0] sm:$0xf]
    %v202 = vld [vmem:[#allocation2 + $0xd8] sm:$0xf]
    %v203 = vld [vmem:[#allocation2 + $0xe0] sm:$0xf]
    %v204 = vld [vmem:[#allocation2 + $0xe8] sm:$0xf]
    %v205 = vld [vmem:[#allocation4] sm:$0xff]
    %v206 = vld [vmem:[#allocation4 + $0x8] sm:$0xff]
    %v207 = vld [vmem:[#allocation4 + $0x10] sm:$0xff]
    %v208 = vld [vmem:[#allocation4 + $0x18] sm:$0xff]
    %v209 = vld [vmem:[#allocation4 + $0x20] sm:$0xff]
    %v210 = vld [vmem:[#allocation4 + $0x28] sm:$0xff]
    %v211 = vld [vmem:[#allocation4 + $0x30] sm:$0xff]
    %v212 = vld [vmem:[#allocation4 + $0x38] sm:$0xff]
    %v213 = vld [vmem:[#allocation4 + $0x40] sm:$0xff]
    %v214 = vld [vmem:[#allocation4 + $0x48] sm:$0xff]
    %v215 = vld [vmem:[#allocation4 + $0x50] sm:$0xff]
    %v216 = vld [vmem:[#allocation4 + $0x58] sm:$0xff]
    %v217 = vld [vmem:[#allocation4 + $0x60] sm:$0xff]
    %v218 = vld [vmem:[#allocation4 + $0x68] sm:$0xff]
    %v219 = vld [vmem:[#allocation4 + $0x70] sm:$0xff]
    %v220 = vld [vmem:[#allocation4 + $0x78] sm:$0xff]
    %v221 = vld [vmem:[#allocation4 + $0x80] sm:$0xff]
    %v222 = vld [vmem:[#allocation4 + $0x88] sm:$0xff]
    %v223 = vld [vmem:[#allocation4 + $0x90] sm:$0xff]
    %v224 = vld [vmem:[#allocation4 + $0x98] sm:$0xff]
    %v225 = vld [vmem:[#allocation4 + $0xa0] sm:$0xff]
    %v226 = vld [vmem:[#allocation4 + $0xa8] sm:$0xff]
    %v227 = vld [vmem:[#allocation4 + $0xb0] sm:$0xff]
    %v228 = vld [vmem:[#allocation4 + $0xb8] sm:$0xff]
    %v229 = vld [vmem:[#allocation4 + $0xc0] sm:$0xff]
    %v230 = vld [vmem:[#allocation4 + $0xc8] sm:$0xff]
    %v231 = vld [vmem:[#allocation4 + $0xd0] sm:$0xff]
    %v232 = vld [vmem:[#allocation4 + $0xd8] sm:$0xff]
    %v233 = vld [vmem:[#allocation4 + $0xe0] sm:$0xff]
    %v234 = vld [vmem:[#allocation4 + $0xe8] sm:$0xff]
    %v235 = vld [vmem:[#allocation4 + $0xf0] sm:$0xff]
    %v236 = vld [vmem:[#allocation4 + $0xf8] sm:$0xff]
    %v237 = vld [vmem:[#allocation4 + $0x100] sm:$0xff]
    %v238 = vld [vmem:[#allocation4 + $0x108] sm:$0xff]
    %v239 = vld [vmem:[#allocation4 + $0x110] sm:$0xff]
    %v240 = vld [vmem:[#allocation4 + $0x118] sm:$0xff]
    %v241 = vld [vmem:[#allocation4 + $0x120] sm:$0xff]
    %v242 = vld [vmem:[#allocation4 + $0x128] sm:$0xff]
    %v243 = vld [vmem:[#allocation4 + $0x130] sm:$0xff]
    %v244 = vld [vmem:[#allocation4 + $0x138] sm:$0xff]
    %v245 = vld [vmem:[#allocation4 + $0x140] sm:$0xff]
    %v246 = vld [vmem:[#allocation4 + $0x148] sm:$0xff]
    %v247 = vld [vmem:[#allocation4 + $0x150] sm:$0xff]
    %v248 = vld [vmem:[#allocation4 + $0x158] sm:$0xff]
    %v249 = vld [vmem:[#allocation4 + $0x160] sm:$0xff]
    %v250 = vld [vmem:[#allocation4 + $0x168] sm:$0xff]
    %v251 = vld [vmem:[#allocation4 + $0x170] sm:$0xff]
    %v252 = vld [vmem:[#allocation4 + $0x178] sm:$0xff]
    %v253 = vld [vmem:[#allocation4 + $0x180] sm:$0xff]
    %v254 = vld [vmem:[#allocation4 + $0x188] sm:$0xff]
    %v255 = vld [vmem:[#allocation4 + $0x190] sm:$0xff]
    %v256 = vld [vmem:[#allocation4 + $0x198] sm:$0xff]
    %v257 = vld [vmem:[#allocation4 + $0x1a0] sm:$0xff]
    %v258 = vld [vmem:[#allocation4 + $0x1a8] sm:$0xff]
    %v259 = vld [vmem:[#allocation4 + $0x1b0] sm:$0xff]
    %v260 = vld [vmem:[#allocation4 + $0x1b8] sm:$0xff]
    %v261 = vld [vmem:[#allocation4 + $0x1c0] sm:$0xff]
    %v262 = vld [vmem:[#allocation4 + $0x1c8] sm:$0xff]
    %v263 = vld [vmem:[#allocation4 + $0x1d0] sm:$0xff]
    %v264 = vld [vmem:[#allocation4 + $0x1d8] sm:$0xff]
    %v265 = vld [vmem:[#allocation4 + $0x1e0] sm:$0xff]
    %v266 = vld [vmem:[#allocation4 + $0x1e8] sm:$0xff]
    %v267 = vld [vmem:[#allocation4 + $0x1f0] sm:$0xff]
    %v268 = vld [vmem:[#allocation4 + $0x1f8] sm:$0xff]
    %v269 = vld [vmem:[#allocation4 + $0x200] sm:$0xff]
    %v270 = vld [vmem:[#allocation4 + $0x208] sm:$0xff]
    %v271 = vld [vmem:[#allocation4 + $0x210] sm:$0xff]
    %v272 = vld [vmem:[#allocation4 + $0x218] sm:$0xff]
    %v273 = vld [vmem:[#allocation4 + $0x220] sm:$0xff]
    %v274 = vld [vmem:[#allocation4 + $0x228] sm:$0xff]
    %v275 = vld [vmem:[#allocation4 + $0x230] sm:$0xff]
    %v276 = vld [vmem:[#allocation4 + $0x238] sm:$0xff]
    %v277 = vld [vmem:[#allocation4 + $0x240] sm:$0xff]
    %v278 = vld [vmem:[#allocation4 + $0x248] sm:$0xff]
    %v279 = vld [vmem:[#allocation4 + $0x250] sm:$0xff]
    %v280 = vld [vmem:[#allocation4 + $0x258] sm:$0xff]
    %v281 = vld [vmem:[#allocation4 + $0x260] sm:$0xff]
    %v282 = vld [vmem:[#allocation4 + $0x268] sm:$0xff]
    %v283 = vld [vmem:[#allocation4 + $0x270] sm:$0xff]
    %v284 = vld [vmem:[#allocation4 + $0x278] sm:$0xff]
    %v285 = vld [vmem:[#allocation4 + $0x280] sm:$0xff]
    %v286 = vld [vmem:[#allocation4 + $0x288] sm:$0xff]
    %v287 = vld [vmem:[#allocation4 + $0x290] sm:$0xff]
    %v288 = vld [vmem:[#allocation4 + $0x298] sm:$0xff]
    %v289 = vld [vmem:[#allocation4 + $0x2a0] sm:$0xff]
    %v290 = vld [vmem:[#allocation4 + $0x2a8] sm:$0xff]
    %v291 = vld [vmem:[#allocation4 + $0x2b0] sm:$0xff]
    %v292 = vld [vmem:[#allocation4 + $0x2b8] sm:$0xff]
    %v293 = vld [vmem:[#allocation4 + $0x2c0] sm:$0xff]
    %v294 = vld [vmem:[#allocation4 + $0x2c8] sm:$0xff]
    %v295 = vld [vmem:[#allocation4 + $0x2d0] sm:$0xff]
    %v296 = vld [vmem:[#allocation4 + $0x2d8] sm:$0xff]
    %v297 = vld [vmem:[#allocation4 + $0x2e0] sm:$0xff]
    %v298 = vld [vmem:[#allocation4 + $0x2e8] sm:$0xff]
    %v299 = vld [vmem:[#allocation4 + $0x2f0] sm:$0xff]
    %v300 = vld [vmem:[#allocation4 + $0x2f8] sm:$0xff]
    %v301 = vld [vmem:[#allocation4 + $0x300] sm:$0xff]
    %v302 = vld [vmem:[#allocation4 + $0x308] sm:$0xff]
    %v303 = vld [vmem:[#allocation4 + $0x310] sm:$0xff]
    %v304 = vld [vmem:[#allocation4 + $0x318] sm:$0xff]
    %v305 = vld [vmem:[#allocation4 + $0x320] sm:$0xff]
    %v306 = vld [vmem:[#allocation4 + $0x328] sm:$0xff]
    %v307 = vld [vmem:[#allocation4 + $0x330] sm:$0xff]
    %v308 = vld [vmem:[#allocation4 + $0x338] sm:$0xff]
    %v309 = vld [vmem:[#allocation4 + $0x340] sm:$0xff]
    %v310 = vld [vmem:[#allocation4 + $0x348] sm:$0xff]
    %v311 = vld [vmem:[#allocation4 + $0x350] sm:$0xff]
    %v312 = vld [vmem:[#allocation4 + $0x358] sm:$0xff]
    %v313 = vld [vmem:[#allocation4 + $0x360] sm:$0xff]
    %v314 = vld [vmem:[#allocation4 + $0x368] sm:$0xff]
    %v315 = vld [vmem:[#allocation4 + $0x370] sm:$0xff]
    %v316 = vld [vmem:[#allocation4 + $0x378] sm:$0xff]
    %v317 = vld [vmem:[#allocation4 + $0x380] sm:$0xff]
    %v318 = vld [vmem:[#allocation4 + $0x388] sm:$0xff]
    %v319 = vld [vmem:[#allocation4 + $0x390] sm:$0xff]
    %v320 = vld [vmem:[#allocation4 + $0x398] sm:$0xff]
    %v321 = vld [vmem:[#allocation4 + $0x3a0] sm:$0xff]
    %v322 = vld [vmem:[#allocation4 + $0x3a8] sm:$0xff]
    %v323 = vld [vmem:[#allocation4 + $0x3b0] sm:$0xff]
    %v324 = vld [vmem:[#allocation4 + $0x3b8] sm:$0xff]
    %v325 = vld [vmem:[#allocation4 + $0x3c0] sm:$0xff]
    %v326 = vld [vmem:[#allocation4 + $0x3c8] sm:$0xff]
    %v327 = vld [vmem:[#allocation4 + $0x3d0] sm:$0xff]
    %v328 = vld [vmem:[#allocation4 + $0x3d8] sm:$0xff]
    %v329 = vld [vmem:[#allocation4 + $0x3e0] sm:$0xff]
    %v330 = vld [vmem:[#allocation4 + $0x3e8] sm:$0xff]
    %v331 = vld [vmem:[#allocation4 + $0x3f0] sm:$0xff]
    %v332 = vld [vmem:[#allocation4 + $0x3f8] sm:$0xff]
    %v333 = vld [vmem:[#allocation4 + $0x400] sm:$0xff]
    %v334 = vld [vmem:[#allocation4 + $0x408] sm:$0xff]
    %v335 = vld [vmem:[#allocation4 + $0x410] sm:$0xff]
    %v336 = vld [vmem:[#allocation4 + $0x418] sm:$0xff]
    %v337 = vld [vmem:[#allocation4 + $0x420] sm:$0xff]
    %v338 = vld [vmem:[#allocation4 + $0x428] sm:$0xff]
    %v339 = vld [vmem:[#allocation4 + $0x430] sm:$0xff]
    %v340 = vld [vmem:[#allocation4 + $0x438] sm:$0xff]
    %v341 = vld [vmem:[#allocation4 + $0x440] sm:$0xff]
    %v342 = vld [vmem:[#allocation4 + $0x448] sm:$0xff]
    %v343 = vld [vmem:[#allocation4 + $0x450] sm:$0xff]
    %v344 = vld [vmem:[#allocation4 + $0x458] sm:$0xff]
    %v345 = vld [vmem:[#allocation4 + $0x460] sm:$0xff]
    %v346 = vld [vmem:[#allocation4 + $0x468] sm:$0xff]
    %v347 = vld [vmem:[#allocation4 + $0x470] sm:$0xff]
    %v348 = vld [vmem:[#allocation4 + $0x478] sm:$0xff]
    %v349 = vld [vmem:[#allocation4 + $0x480] sm:$0xff]
    %v350 = vld [vmem:[#allocation4 + $0x488] sm:$0xff]
    %v351 = vld [vmem:[#allocation4 + $0x490] sm:$0xff]
    %v352 = vld [vmem:[#allocation4 + $0x498] sm:$0xff]
    %v353 = vld [vmem:[#allocation4 + $0x4a0] sm:$0xff]
    %v354 = vld [vmem:[#allocation4 + $0x4a8] sm:$0xff]
    %v355 = vld [vmem:[#allocation4 + $0x4b0] sm:$0xff]
    %v356 = vld [vmem:[#allocation4 + $0x4b8] sm:$0xff]
    %v357 = vld [vmem:[#allocation4 + $0x4c0] sm:$0xff]
    %v358 = vld [vmem:[#allocation4 + $0x4c8] sm:$0xff]
    %v359 = vld [vmem:[#allocation4 + $0x4d0] sm:$0xff]
    %v360 = vld [vmem:[#allocation4 + $0x4d8] sm:$0xff]
    %v361 = vld [vmem:[#allocation4 + $0x4e0] sm:$0xff]
    %v362 = vld [vmem:[#allocation4 + $0x4e8] sm:$0xff]
    %v363 = vld [vmem:[#allocation4 + $0x4f0] sm:$0xff]
    %v364 = vld [vmem:[#allocation4 + $0x4f8] sm:$0xff]
    %v365 = vld [vmem:[#allocation4 + $0x500] sm:$0xff]
    %v366 = vld [vmem:[#allocation4 + $0x508] sm:$0xff]
    %v367 = vld [vmem:[#allocation4 + $0x510] sm:$0xff]
    %v368 = vld [vmem:[#allocation4 + $0x518] sm:$0xff]
    %v369 = vld [vmem:[#allocation4 + $0x520] sm:$0xff]
    %v370 = vld [vmem:[#allocation4 + $0x528] sm:$0xff]
    %v371 = vld [vmem:[#allocation4 + $0x530] sm:$0xff]
    %v372 = vld [vmem:[#allocation4 + $0x538] sm:$0xff]
    %v373 = vld [vmem:[#allocation4 + $0x540] sm:$0xff]
    %v374 = vld [vmem:[#allocation4 + $0x548] sm:$0xff]
    %v375 = vld [vmem:[#allocation4 + $0x550] sm:$0xff]
    %v376 = vld [vmem:[#allocation4 + $0x558] sm:$0xff]
    %v377 = vld [vmem:[#allocation4 + $0x560] sm:$0xff]
    %v378 = vld [vmem:[#allocation4 + $0x568] sm:$0xff]
    %v379 = vld [vmem:[#allocation4 + $0x570] sm:$0xff]
    %v380 = vld [vmem:[#allocation4 + $0x578] sm:$0xff]
    %v381 = vld [vmem:[#allocation4 + $0x580] sm:$0xff]
    %v382 = vld [vmem:[#allocation4 + $0x588] sm:$0xff]
    %v383 = vld [vmem:[#allocation4 + $0x590] sm:$0xff]
    %v384 = vld [vmem:[#allocation4 + $0x598] sm:$0xff]
    %v385 = vld [vmem:[#allocation4 + $0x5a0] sm:$0xff]
    %v386 = vld [vmem:[#allocation4 + $0x5a8] sm:$0xff]
    %v387 = vld [vmem:[#allocation4 + $0x5b0] sm:$0xff]
    %v388 = vld [vmem:[#allocation4 + $0x5b8] sm:$0xff]
    %v389 = vld [vmem:[#allocation4 + $0x5c0] sm:$0xff]
    %v390 = vld [vmem:[#allocation4 + $0x5c8] sm:$0xff]
    %v391 = vld [vmem:[#allocation4 + $0x5d0] sm:$0xff]
    %v392 = vld [vmem:[#allocation4 + $0x5d8] sm:$0xff]
    %v393 = vld [vmem:[#allocation4 + $0x5e0] sm:$0xff]
    %v394 = vld [vmem:[#allocation4 + $0x5e8] sm:$0xff]
    %v395 = vld [vmem:[#allocation4 + $0x5f0] sm:$0xff]
    %v396 = vld [vmem:[#allocation4 + $0x5f8] sm:$0xff]
    %v397 = vld [vmem:[#allocation4 + $0x600] sm:$0xff]
    %v398 = vld [vmem:[#allocation4 + $0x608] sm:$0xff]
    %v399 = vld [vmem:[#allocation4 + $0x610] sm:$0xff]
    %v400 = vld [vmem:[#allocation4 + $0x618] sm:$0xff]
    %v401 = vld [vmem:[#allocation4 + $0x620] sm:$0xff]
    %v402 = vld [vmem:[#allocation4 + $0x628] sm:$0xff]
    %v403 = vld [vmem:[#allocation4 + $0x630] sm:$0xff]
    %v404 = vld [vmem:[#allocation4 + $0x638] sm:$0xff]
    %v405 = vld [vmem:[#allocation4 + $0x640] sm:$0xff]
    %v406 = vld [vmem:[#allocation4 + $0x648] sm:$0xff]
    %v407 = vld [vmem:[#allocation4 + $0x650] sm:$0xff]
    %v408 = vld [vmem:[#allocation4 + $0x658] sm:$0xff]
    %v409 = vld [vmem:[#allocation4 + $0x660] sm:$0xff]
    %v410 = vld [vmem:[#allocation4 + $0x668] sm:$0xff]
    %v411 = vld [vmem:[#allocation4 + $0x670] sm:$0xff]
    %v412 = vld [vmem:[#allocation4 + $0x678] sm:$0xff]
    %v413 = vld [vmem:[#allocation4 + $0x680] sm:$0xff]
    %v414 = vld [vmem:[#allocation4 + $0x688] sm:$0xff]
    %v415 = vld [vmem:[#allocation4 + $0x690] sm:$0xff]
    %v416 = vld [vmem:[#allocation4 + $0x698] sm:$0xff]
    %v417 = vld [vmem:[#allocation4 + $0x6a0] sm:$0xff]
    %v418 = vld [vmem:[#allocation4 + $0x6a8] sm:$0xff]
    %v419 = vld [vmem:[#allocation4 + $0x6b0] sm:$0xff]
    %v420 = vld [vmem:[#allocation4 + $0x6b8] sm:$0xff]
    %v421 = vld [vmem:[#allocation4 + $0x6c0] sm:$0xff]
    %v422 = vld [vmem:[#allocation4 + $0x6c8] sm:$0xff]
    %v423 = vld [vmem:[#allocation4 + $0x6d0] sm:$0xff]
    %v424 = vld [vmem:[#allocation4 + $0x6d8] sm:$0xff]
    %v425 = vld [vmem:[#allocation4 + $0x6e0] sm:$0xff]
    %v426 = vld [vmem:[#allocation4 + $0x6e8] sm:$0xff]
    %v427 = vld [vmem:[#allocation4 + $0x6f0] sm:$0xff]
    %v428 = vld [vmem:[#allocation4 + $0x6f8] sm:$0xff]
    %v429 = vld [vmem:[#allocation4 + $0x700] sm:$0xff]
    %v430 = vld [vmem:[#allocation4 + $0x708] sm:$0xff]
    %v431 = vld [vmem:[#allocation4 + $0x710] sm:$0xff]
    %v432 = vld [vmem:[#allocation4 + $0x718] sm:$0xff]
    %v433 = vld [vmem:[#allocation4 + $0x720] sm:$0xff]
    %v434 = vld [vmem:[#allocation4 + $0x728] sm:$0xff]
    %v435 = vld [vmem:[#allocation4 + $0x730] sm:$0xff]
    %v436 = vld [vmem:[#allocation4 + $0x738] sm:$0xff]
    %v437 = vld [vmem:[#allocation4 + $0x740] sm:$0xff]
    %v438 = vld [vmem:[#allocation4 + $0x748] sm:$0xff]
    %v439 = vld [vmem:[#allocation4 + $0x750] sm:$0xff]
    %v440 = vld [vmem:[#allocation4 + $0x758] sm:$0xff]
    %v441 = vld [vmem:[#allocation4 + $0x760] sm:$0xff]
    %v442 = vld [vmem:[#allocation4 + $0x768] sm:$0xff]
    %v443 = vld [vmem:[#allocation4 + $0x770] sm:$0xff]
    %v444 = vld [vmem:[#allocation4 + $0x778] sm:$0xff]
    %v445 = vld [vmem:[#allocation4 + $0x780] sm:$0xff]
    %v446 = vld [vmem:[#allocation4 + $0x788] sm:$0xff]
    %v447 = vld [vmem:[#allocation4 + $0x790] sm:$0xff]
    %v448 = vld [vmem:[#allocation4 + $0x798] sm:$0xff]
    %v449 = vld [vmem:[#allocation4 + $0x7a0] sm:$0xff]
    %v450 = vld [vmem:[#allocation4 + $0x7a8] sm:$0xff]
    %v451 = vld [vmem:[#allocation4 + $0x7b0] sm:$0xff]
    %v452 = vld [vmem:[#allocation4 + $0x7b8] sm:$0xff]
    %v453 = vld [vmem:[#allocation4 + $0x7c0] sm:$0xff]
    %v454 = vld [vmem:[#allocation4 + $0x7c8] sm:$0xff]
    %v455 = vld [vmem:[#allocation4 + $0x7d0] sm:$0xff]
    %v456 = vld [vmem:[#allocation4 + $0x7d8] sm:$0xff]
    %v457 = vld [vmem:[#allocation4 + $0x7e0] sm:$0xff]
    %v458 = vld [vmem:[#allocation4 + $0x7e8] sm:$0xff]
    %v459 = vld [vmem:[#allocation4 + $0x7f0] sm:$0xff]
    %v460 = vld [vmem:[#allocation4 + $0x7f8] sm:$0xff]
    %v461 = vld [vmem:[#allocation4 + $0x800] sm:$0xff]
    %v462 = vld [vmem:[#allocation4 + $0x808] sm:$0xff]
    %v463 = vld [vmem:[#allocation4 + $0x810] sm:$0xff]
    %v464 = vld [vmem:[#allocation4 + $0x818] sm:$0xff]
    %v465 = vld [vmem:[#allocation4 + $0x820] sm:$0xff]
    %v466 = vld [vmem:[#allocation4 + $0x828] sm:$0xff]
    %v467 = vld [vmem:[#allocation4 + $0x830] sm:$0xff]
    %v468 = vld [vmem:[#allocation4 + $0x838] sm:$0xff]
    %v469 = vld [vmem:[#allocation4 + $0x840] sm:$0xff]
    %v470 = vld [vmem:[#allocation4 + $0x848] sm:$0xff]
    %v471 = vld [vmem:[#allocation4 + $0x850] sm:$0xff]
    %v472 = vld [vmem:[#allocation4 + $0x858] sm:$0xff]
    %v473 = vld [vmem:[#allocation4 + $0x860] sm:$0xff]
    %v474 = vld [vmem:[#allocation4 + $0x868] sm:$0xff]
    %v475 = vld [vmem:[#allocation4 + $0x870] sm:$0xff]
    %v476 = vld [vmem:[#allocation4 + $0x878] sm:$0xff]
    %v477 = vld [vmem:[#allocation4 + $0x880] sm:$0xff]
    %v478 = vld [vmem:[#allocation4 + $0x888] sm:$0xff]
    %v479 = vld [vmem:[#allocation4 + $0x890] sm:$0xff]
    %v480 = vld [vmem:[#allocation4 + $0x898] sm:$0xff]
    %v481 = vld [vmem:[#allocation4 + $0x8a0] sm:$0xff]
    %v482 = vld [vmem:[#allocation4 + $0x8a8] sm:$0xff]
    %v483 = vld [vmem:[#allocation4 + $0x8b0] sm:$0xff]
    %v484 = vld [vmem:[#allocation4 + $0x8b8] sm:$0xff]
    %v485 = vld [vmem:[#allocation4 + $0x8c0] sm:$0xff]
    %v486 = vld [vmem:[#allocation4 + $0x8c8] sm:$0xff]
    %v487 = vld [vmem:[#allocation4 + $0x8d0] sm:$0xff]
    %v488 = vld [vmem:[#allocation4 + $0x8d8] sm:$0xff]
    %v489 = vld [vmem:[#allocation4 + $0x8e0] sm:$0xff]
    %v490 = vld [vmem:[#allocation4 + $0x8e8] sm:$0xff]
    %v491 = vld [vmem:[#allocation4 + $0x8f0] sm:$0xff]
    %v492 = vld [vmem:[#allocation4 + $0x8f8] sm:$0xff]
    %v493 = vld [vmem:[#allocation4 + $0x900] sm:$0xff]
    %v494 = vld [vmem:[#allocation4 + $0x908] sm:$0xff]
    %v495 = vld [vmem:[#allocation4 + $0x910] sm:$0xff]
    %v496 = vld [vmem:[#allocation4 + $0x918] sm:$0xff]
    %v497 = vld [vmem:[#allocation4 + $0x920] sm:$0xff]
    %v498 = vld [vmem:[#allocation4 + $0x928] sm:$0xff]
    %v499 = vld [vmem:[#allocation4 + $0x930] sm:$0xff]
    %v500 = vld [vmem:[#allocation4 + $0x938] sm:$0xff]
    %v501 = vld [vmem:[#allocation4 + $0x940] sm:$0xff]
    %v502 = vld [vmem:[#allocation4 + $0x948] sm:$0xff]
    %v503 = vld [vmem:[#allocation4 + $0x950] sm:$0xff]
    %v504 = vld [vmem:[#allocation4 + $0x958] sm:$0xff]
    %v505 = vld [vmem:[#allocation4 + $0x960] sm:$0xff]
    %v506 = vld [vmem:[#allocation4 + $0x968] sm:$0xff]
    %v507 = vld [vmem:[#allocation4 + $0x970] sm:$0xff]
    %v508 = vld [vmem:[#allocation4 + $0x978] sm:$0xff]
    %v509 = vld [vmem:[#allocation4 + $0x980] sm:$0xff]
    %v510 = vld [vmem:[#allocation4 + $0x988] sm:$0xff]
    %v511 = vld [vmem:[#allocation4 + $0x990] sm:$0xff]
    %v512 = vld [vmem:[#allocation4 + $0x998] sm:$0xff]
    %v513 = vld [vmem:[#allocation4 + $0x9a0] sm:$0xff]
    %v514 = vld [vmem:[#allocation4 + $0x9a8] sm:$0xff]
    %v515 = vld [vmem:[#allocation4 + $0x9b0] sm:$0xff]
    %v516 = vld [vmem:[#allocation4 + $0x9b8] sm:$0xff]
    %v517 = vld [vmem:[#allocation4 + $0x9c0] sm:$0xff]
    %v518 = vld [vmem:[#allocation4 + $0x9c8] sm:$0xff]
    %v519 = vld [vmem:[#allocation4 + $0x9d0] sm:$0xff]
    %v520 = vld [vmem:[#allocation4 + $0x9d8] sm:$0xff]
    %v521 = vld [vmem:[#allocation4 + $0x9e0] sm:$0xff]
    %v522 = vld [vmem:[#allocation4 + $0x9e8] sm:$0xff]
    %v523 = vld [vmem:[#allocation4 + $0x9f0] sm:$0xff]
    %v524 = vld [vmem:[#allocation4 + $0x9f8] sm:$0xff]
    %v525 = vld [vmem:[#allocation4 + $0xa00] sm:$0xff]
    %v526 = vld [vmem:[#allocation4 + $0xa08] sm:$0xff]
    %v527 = vld [vmem:[#allocation4 + $0xa10] sm:$0xff]
    %v528 = vld [vmem:[#allocation4 + $0xa18] sm:$0xff]
    %v529 = vld [vmem:[#allocation4 + $0xa20] sm:$0xff]
    %v530 = vld [vmem:[#allocation4 + $0xa28] sm:$0xff]
    %v531 = vld [vmem:[#allocation4 + $0xa30] sm:$0xff]
    %v532 = vld [vmem:[#allocation4 + $0xa38] sm:$0xff]
    %v533 = vld [vmem:[#allocation4 + $0xa40] sm:$0xff]
    %v534 = vld [vmem:[#allocation4 + $0xa48] sm:$0xff]
    %v535 = vld [vmem:[#allocation4 + $0xa50] sm:$0xff]
    %v536 = vld [vmem:[#allocation4 + $0xa58] sm:$0xff]
    %v537 = vld [vmem:[#allocation4 + $0xa60] sm:$0xff]
    %v538 = vld [vmem:[#allocation4 + $0xa68] sm:$0xff]
    %v539 = vld [vmem:[#allocation4 + $0xa70] sm:$0xff]
    %v540 = vld [vmem:[#allocation4 + $0xa78] sm:$0xff]
    %v541 = vld [vmem:[#allocation4 + $0xa80] sm:$0xff]
    %v542 = vld [vmem:[#allocation4 + $0xa88] sm:$0xff]
    %v543 = vld [vmem:[#allocation4 + $0xa90] sm:$0xff]
    %v544 = vld [vmem:[#allocation4 + $0xa98] sm:$0xff]
    %v545 = vld [vmem:[#allocation4 + $0xaa0] sm:$0xff]
    %v546 = vld [vmem:[#allocation4 + $0xaa8] sm:$0xff]
    %v547 = vld [vmem:[#allocation4 + $0xab0] sm:$0xff]
    %v548 = vld [vmem:[#allocation4 + $0xab8] sm:$0xff]
    %v549 = vld [vmem:[#allocation4 + $0xac0] sm:$0xff]
    %v550 = vld [vmem:[#allocation4 + $0xac8] sm:$0xff]
    %v551 = vld [vmem:[#allocation4 + $0xad0] sm:$0xff]
    %v552 = vld [vmem:[#allocation4 + $0xad8] sm:$0xff]
    %v553 = vld [vmem:[#allocation4 + $0xae0] sm:$0xff]
    %v554 = vld [vmem:[#allocation4 + $0xae8] sm:$0xff]
    %v555 = vld [vmem:[#allocation4 + $0xaf0] sm:$0xff]
    %v556 = vld [vmem:[#allocation4 + $0xaf8] sm:$0xff]
    %v557 = vld [vmem:[#allocation4 + $0xb00] sm:$0xff]
    %v558 = vld [vmem:[#allocation4 + $0xb08] sm:$0xff]
    %v559 = vld [vmem:[#allocation4 + $0xb10] sm:$0xff]
    %v560 = vld [vmem:[#allocation4 + $0xb18] sm:$0xff]
    %v561 = vld [vmem:[#allocation4 + $0xb20] sm:$0xff]
    %v562 = vld [vmem:[#allocation4 + $0xb28] sm:$0xff]
    %v563 = vld [vmem:[#allocation4 + $0xb30] sm:$0xff]
    %v564 = vld [vmem:[#allocation4 + $0xb38] sm:$0xff]
    %v565 = vld [vmem:[#allocation4 + $0xb40] sm:$0xff]
    %v566 = vld [vmem:[#allocation4 + $0xb48] sm:$0xff]
    %v567 = vld [vmem:[#allocation4 + $0xb50] sm:$0xff]
    %v568 = vld [vmem:[#allocation4 + $0xb58] sm:$0xff]
    %v569 = vld [vmem:[#allocation4 + $0xb60] sm:$0xff]
    %v570 = vld [vmem:[#allocation4 + $0xb68] sm:$0xff]
    %v571 = vld [vmem:[#allocation4 + $0xb70] sm:$0xff]
    %v572 = vld [vmem:[#allocation4 + $0xb78] sm:$0xff]
    %v573 = vld [vmem:[#allocation4 + $0xb80] sm:$0xff]
    %v574 = vld [vmem:[#allocation4 + $0xb88] sm:$0xff]
    %v575 = vld [vmem:[#allocation4 + $0xb90] sm:$0xff]
    %v576 = vld [vmem:[#allocation4 + $0xb98] sm:$0xff]
    %v577 = vld [vmem:[#allocation4 + $0xba0] sm:$0xff]
    %v578 = vld [vmem:[#allocation4 + $0xba8] sm:$0xff]
    %v579 = vld [vmem:[#allocation4 + $0xbb0] sm:$0xff]
    %v580 = vld [vmem:[#allocation4 + $0xbb8] sm:$0xff]
    %v581 = vld [vmem:[#allocation4 + $0xbc0] sm:$0xff]
    %v582 = vld [vmem:[#allocation4 + $0xbc8] sm:$0xff]
    %v583 = vld [vmem:[#allocation4 + $0xbd0] sm:$0xff]
    %v584 = vld [vmem:[#allocation4 + $0xbd8] sm:$0xff]
    %v585 = vld [vmem:[#allocation4 + $0xbe0] sm:$0xff]
    %v586 = vld [vmem:[#allocation4 + $0xbe8] sm:$0xff]
    %v587 = vld [vmem:[#allocation4 + $0xbf0] sm:$0xff]
    %v588 = vld [vmem:[#allocation4 + $0xbf8] sm:$0xff]
    %v589 = vld [vmem:[#allocation4 + $0xc00] sm:$0xff]
    %v590 = vld [vmem:[#allocation4 + $0xc08] sm:$0xff]
    %v591 = vld [vmem:[#allocation4 + $0xc10] sm:$0xff]
    %v592 = vld [vmem:[#allocation4 + $0xc18] sm:$0xff]
    %v593 = vld [vmem:[#allocation4 + $0xc20] sm:$0xff]
    %v594 = vld [vmem:[#allocation4 + $0xc28] sm:$0xff]
    %v595 = vld [vmem:[#allocation4 + $0xc30] sm:$0xff]
    %v596 = vld [vmem:[#allocation4 + $0xc38] sm:$0xff]
    %v597 = vld [vmem:[#allocation4 + $0xc40] sm:$0xff]
    %v598 = vld [vmem:[#allocation4 + $0xc48] sm:$0xff]
    %v599 = vld [vmem:[#allocation4 + $0xc50] sm:$0xff]
    %v600 = vld [vmem:[#allocation4 + $0xc58] sm:$0xff]
    %v601 = vld [vmem:[#allocation4 + $0xc60] sm:$0xff]
    %v602 = vld [vmem:[#allocation4 + $0xc68] sm:$0xff]
    %v603 = vld [vmem:[#allocation4 + $0xc70] sm:$0xff]
    %v604 = vld [vmem:[#allocation4 + $0xc78] sm:$0xff]
    %v605 = vld [vmem:[#allocation4 + $0xc80] sm:$0xff]
    %v606 = vld [vmem:[#allocation4 + $0xc88] sm:$0xff]
    %v607 = vld [vmem:[#allocation4 + $0xc90] sm:$0xff]
    %v608 = vld [vmem:[#allocation4 + $0xc98] sm:$0xff]
    %v609 = vld [vmem:[#allocation4 + $0xca0] sm:$0xff]
    %v610 = vld [vmem:[#allocation4 + $0xca8] sm:$0xff]
    %v611 = vld [vmem:[#allocation4 + $0xcb0] sm:$0xff]
    %v612 = vld [vmem:[#allocation4 + $0xcb8] sm:$0xff]
    %v613 = vld [vmem:[#allocation4 + $0xcc0] sm:$0xff]
    %v614 = vld [vmem:[#allocation4 + $0xcc8] sm:$0xff]
    %v615 = vld [vmem:[#allocation4 + $0xcd0] sm:$0xff]
    %v616 = vld [vmem:[#allocation4 + $0xcd8] sm:$0xff]
    %v617 = vld [vmem:[#allocation4 + $0xce0] sm:$0xff]
    %v618 = vld [vmem:[#allocation4 + $0xce8] sm:$0xff]
    %v619 = vld [vmem:[#allocation4 + $0xcf0] sm:$0xff]
    %v620 = vld [vmem:[#allocation4 + $0xcf8] sm:$0xff]
    %v621 = vld [vmem:[#allocation4 + $0xd00] sm:$0xff]
    %v622 = vld [vmem:[#allocation4 + $0xd08] sm:$0xff]
    %v623 = vld [vmem:[#allocation4 + $0xd10] sm:$0xff]
    %v624 = vld [vmem:[#allocation4 + $0xd18] sm:$0xff]
    %v625 = vld [vmem:[#allocation4 + $0xd20] sm:$0xff]
    %v626 = vld [vmem:[#allocation4 + $0xd28] sm:$0xff]
    %v627 = vld [vmem:[#allocation4 + $0xd30] sm:$0xff]
    %v628 = vld [vmem:[#allocation4 + $0xd38] sm:$0xff]
    %v629 = vld [vmem:[#allocation4 + $0xd40] sm:$0xff]
    %v630 = vld [vmem:[#allocation4 + $0xd48] sm:$0xff]
    %v631 = vld [vmem:[#allocation4 + $0xd50] sm:$0xff]
    %v632 = vld [vmem:[#allocation4 + $0xd58] sm:$0xff]
    %v633 = vld [vmem:[#allocation4 + $0xd60] sm:$0xff]
    %v634 = vld [vmem:[#allocation4 + $0xd68] sm:$0xff]
    %v635 = vld [vmem:[#allocation4 + $0xd70] sm:$0xff]
    %v636 = vld [vmem:[#allocation4 + $0xd78] sm:$0xff]
    %v637 = vld [vmem:[#allocation4 + $0xd80] sm:$0xff]
    %v638 = vld [vmem:[#allocation4 + $0xd88] sm:$0xff]
    %v639 = vld [vmem:[#allocation4 + $0xd90] sm:$0xff]
    %v640 = vld [vmem:[#allocation4 + $0xd98] sm:$0xff]
    %v641 = vld [vmem:[#allocation4 + $0xda0] sm:$0xff]
    %v642 = vld [vmem:[#allocation4 + $0xda8] sm:$0xff]
    %v643 = vld [vmem:[#allocation4 + $0xdb0] sm:$0xff]
    %v644 = vld [vmem:[#allocation4 + $0xdb8] sm:$0xff]
    %v645 = vld [vmem:[#allocation4 + $0xdc0] sm:$0xff]
    %v646 = vld [vmem:[#allocation4 + $0xdc8] sm:$0xff]
    %v647 = vld [vmem:[#allocation4 + $0xdd0] sm:$0xff]
    %v648 = vld [vmem:[#allocation4 + $0xdd8] sm:$0xff]
    %v649 = vld [vmem:[#allocation4 + $0xde0] sm:$0xff]
    %v650 = vld [vmem:[#allocation4 + $0xde8] sm:$0xff]
    %v651 = vld [vmem:[#allocation4 + $0xdf0] sm:$0xff]
    %v652 = vld [vmem:[#allocation4 + $0xdf8] sm:$0xff]
    %v653 = vld [vmem:[#allocation4 + $0xe00] sm:$0xff]
    %v654 = vld [vmem:[#allocation4 + $0xe08] sm:$0xff]
    %v655 = vld [vmem:[#allocation4 + $0xe10] sm:$0xff]
    %v656 = vld [vmem:[#allocation4 + $0xe18] sm:$0xff]
    %v657 = vld [vmem:[#allocation4 + $0xe20] sm:$0xff]
    %v658 = vld [vmem:[#allocation4 + $0xe28] sm:$0xff]
    %v659 = vld [vmem:[#allocation4 + $0xe30] sm:$0xff]
    %v660 = vld [vmem:[#allocation4 + $0xe38] sm:$0xff]
    %v661 = vld [vmem:[#allocation4 + $0xe40] sm:$0xff]
    %v662 = vld [vmem:[#allocation4 + $0xe48] sm:$0xff]
    %v663 = vld [vmem:[#allocation4 + $0xe50] sm:$0xff]
    %v664 = vld [vmem:[#allocation4 + $0xe58] sm:$0xff]
    %v665 = vld [vmem:[#allocation4 + $0xe60] sm:$0xff]
    %v666 = vld [vmem:[#allocation4 + $0xe68] sm:$0xff]
    %v667 = vld [vmem:[#allocation4 + $0xe70] sm:$0xff]
    %v668 = vld [vmem:[#allocation4 + $0xe78] sm:$0xff]
    %v669 = vld [vmem:[#allocation4 + $0xe80] sm:$0xff]
    %v670 = vld [vmem:[#allocation4 + $0xe88] sm:$0xff]
    %v671 = vld [vmem:[#allocation4 + $0xe90] sm:$0xff]
    %v672 = vld [vmem:[#allocation4 + $0xe98] sm:$0xff]
    %v673 = vld [vmem:[#allocation4 + $0xea0] sm:$0xff]
    %v674 = vld [vmem:[#allocation4 + $0xea8] sm:$0xff]
    %v675 = vld [vmem:[#allocation4 + $0xeb0] sm:$0xff]
    %v676 = vld [vmem:[#allocation4 + $0xeb8] sm:$0xff]
    %v677 = vld [vmem:[#allocation4 + $0xec0] sm:$0xff]
    %v678 = vld [vmem:[#allocation4 + $0xec8] sm:$0xff]
    %v679 = vld [vmem:[#allocation4 + $0xed0] sm:$0xff]
    %v680 = vld [vmem:[#allocation4 + $0xed8] sm:$0xff]
    %v681 = vld [vmem:[#allocation4 + $0xee0] sm:$0xff]
    %v682 = vld [vmem:[#allocation4 + $0xee8] sm:$0xff]
    %v683 = vld [vmem:[#allocation4 + $0xef0] sm:$0xff]
    %v684 = vld [vmem:[#allocation4 + $0xef8] sm:$0xff]
    %685 = vmatpush.msra.mxu0 %v250
    %686 = vmatpush.msra.mxu0 %v247
    %687 = vmatpush.msra.mxu0 %v244
    %688 = vmatpush.msra.mxu0 %v241
    %689 = vmatpush.msra.mxu0 %v238
    %690 = vmatpush.msra.mxu0 %v235
    %691 = vmatpush.msra.mxu0 %v232
    %692 = vmatpush.msra.mxu0 %v229
    %693 = vmatpush.msra.mxu0 %v226
    %694 = vmatpush.msra.mxu0 %v223
    %695 = vmatpush.msra.mxu0 %v220
    %696 = vmatpush.msra.mxu0 %v217
    %697 = vmatpush.msra.mxu0 %v214
    %698 = vmatpush.msra.mxu0 %v211
    %699 = vmatpush.msra.mxu0 %v208
    %700 = vmatpush.msra.mxu0 %v205
    %701 = vmatmul.f32.gmra.mxu0 %v175
    %v702 = vpop.f32.mrf.mxu0
    %v703 = vadd.f32 0.0, %v702
    %704 = vmatmul.f32.gmra.mxu0 %v185
    %v705 = vpop.f32.mrf.mxu0
    %v706 = vadd.f32 0.0, %v705
    %707 = vmatmul.f32.gmra.mxu0 %v195
    %v708 = vpop.f32.mrf.mxu0
    %v709 = vadd.f32 0.0, %v708
    %710 = vdwg.mxu0
    %711 = vmatpush.msra.mxu0 %v298
    %712 = vmatpush.msra.mxu0 %v295
    %713 = vmatpush.msra.mxu0 %v292
    %714 = vmatpush.msra.mxu0 %v289
    %715 = vmatpush.msra.mxu0 %v286
    %716 = vmatpush.msra.mxu0 %v283
    %717 = vmatpush.msra.mxu0 %v280
    %718 = vmatpush.msra.mxu0 %v277
    %719 = vmatpush.msra.mxu0 %v274
    %720 = vmatpush.msra.mxu0 %v271
    %721 = vmatpush.msra.mxu0 %v268
    %722 = vmatpush.msra.mxu0 %v265
    %723 = vmatpush.msra.mxu0 %v262
    %724 = vmatpush.msra.mxu0 %v259
    %725 = vmatpush.msra.mxu0 %v256
    %726 = vmatpush.msra.mxu0 %v253
    %727 = vmatmul.f32.gmra.mxu0 %v176
    %v728 = vpop.f32.mrf.mxu0
    %v729 = vadd.f32 %v703, %v728
    %730 = vmatmul.f32.gmra.mxu0 %v186
    %v731 = vpop.f32.mrf.mxu0
    %v732 = vadd.f32 %v706, %v731
    %733 = vmatmul.f32.gmra.mxu0 %v196
    %v734 = vpop.f32.mrf.mxu0
    %v735 = vadd.f32 %v709, %v734
    %736 = vdwg.mxu0
    %737 = vmatpush.msra.mxu0 %v346
    %738 = vmatpush.msra.mxu0 %v343
    %739 = vmatpush.msra.mxu0 %v340
    %740 = vmatpush.msra.mxu0 %v337
    %741 = vmatpush.msra.mxu0 %v334
    %742 = vmatpush.msra.mxu0 %v331
    %743 = vmatpush.msra.mxu0 %v328
    %744 = vmatpush.msra.mxu0 %v325
    %745 = vmatpush.msra.mxu0 %v322
    %746 = vmatpush.msra.mxu0 %v319
    %747 = vmatpush.msra.mxu0 %v316
    %748 = vmatpush.msra.mxu0 %v313
    %749 = vmatpush.msra.mxu0 %v310
    %750 = vmatpush.msra.mxu0 %v307
    %751 = vmatpush.msra.mxu0 %v304
    %752 = vmatpush.msra.mxu0 %v301
    %753 = vmatmul.f32.gmra.mxu0 %v177
    %v754 = vpop.f32.mrf.mxu0
    %v755 = vadd.f32 %v729, %v754
    %756 = vmatmul.f32.gmra.mxu0 %v187
    %v757 = vpop.f32.mrf.mxu0
    %v758 = vadd.f32 %v732, %v757
    %759 = vmatmul.f32.gmra.mxu0 %v197
    %v760 = vpop.f32.mrf.mxu0
    %v761 = vadd.f32 %v735, %v760
    %762 = vdwg.mxu0
    %763 = vmatpush.msra.mxu0 %v394
    %764 = vmatpush.msra.mxu0 %v391
    %765 = vmatpush.msra.mxu0 %v388
    %766 = vmatpush.msra.mxu0 %v385
    %767 = vmatpush.msra.mxu0 %v382
    %768 = vmatpush.msra.mxu0 %v379
    %769 = vmatpush.msra.mxu0 %v376
    %770 = vmatpush.msra.mxu0 %v373
    %771 = vmatpush.msra.mxu0 %v370
    %772 = vmatpush.msra.mxu0 %v367
    %773 = vmatpush.msra.mxu0 %v364
    %774 = vmatpush.msra.mxu0 %v361
    %775 = vmatpush.msra.mxu0 %v358
    %776 = vmatpush.msra.mxu0 %v355
    %777 = vmatpush.msra.mxu0 %v352
    %778 = vmatpush.msra.mxu0 %v349
    %779 = vmatmul.f32.gmra.mxu0 %v178
    %v780 = vpop.f32.mrf.mxu0
    %v781 = vadd.f32 %v755, %v780
    %782 = vmatmul.f32.gmra.mxu0 %v188
    %v783 = vpop.f32.mrf.mxu0
    %v784 = vadd.f32 %v758, %v783
    %785 = vmatmul.f32.gmra.mxu0 %v198
    %v786 = vpop.f32.mrf.mxu0
    %v787 = vadd.f32 %v761, %v786
    %788 = vdwg.mxu0
    %789 = vmatpush.msra.mxu0 %v442
    %790 = vmatpush.msra.mxu0 %v439
    %791 = vmatpush.msra.mxu0 %v436
    %792 = vmatpush.msra.mxu0 %v433
    %793 = vmatpush.msra.mxu0 %v430
    %794 = vmatpush.msra.mxu0 %v427
    %795 = vmatpush.msra.mxu0 %v424
    %796 = vmatpush.msra.mxu0 %v421
    %797 = vmatpush.msra.mxu0 %v418
    %798 = vmatpush.msra.mxu0 %v415
    %799 = vmatpush.msra.mxu0 %v412
    %800 = vmatpush.msra.mxu0 %v409
    %801 = vmatpush.msra.mxu0 %v406
    %802 = vmatpush.msra.mxu0 %v403
    %803 = vmatpush.msra.mxu0 %v400
    %804 = vmatpush.msra.mxu0 %v397
    %805 = vmatmul.f32.gmra.mxu0 %v179
    %v806 = vpop.f32.mrf.mxu0
    %v807 = vadd.f32 %v781, %v806
    %808 = vmatmul.f32.gmra.mxu0 %v189
    %v809 = vpop.f32.mrf.mxu0
    %v810 = vadd.f32 %v784, %v809
    %811 = vmatmul.f32.gmra.mxu0 %v199
    %v812 = vpop.f32.mrf.mxu0
    %v813 = vadd.f32 %v787, %v812
    %814 = vdwg.mxu0
    %815 = vmatpush.msra.mxu0 %v490
    %816 = vmatpush.msra.mxu0 %v487
    %817 = vmatpush.msra.mxu0 %v484
    %818 = vmatpush.msra.mxu0 %v481
    %819 = vmatpush.msra.mxu0 %v478
    %820 = vmatpush.msra.mxu0 %v475
    %821 = vmatpush.msra.mxu0 %v472
    %822 = vmatpush.msra.mxu0 %v469
    %823 = vmatpush.msra.mxu0 %v466
    %824 = vmatpush.msra.mxu0 %v463
    %825 = vmatpush.msra.mxu0 %v460
    %826 = vmatpush.msra.mxu0 %v457
    %827 = vmatpush.msra.mxu0 %v454
    %828 = vmatpush.msra.mxu0 %v451
    %829 = vmatpush.msra.mxu0 %v448
    %830 = vmatpush.msra.mxu0 %v445
    %831 = vmatmul.f32.gmra.mxu0 %v180
    %v832 = vpop.f32.mrf.mxu0
    %v833 = vadd.f32 %v807, %v832
    %834 = vmatmul.f32.gmra.mxu0 %v190
    %v835 = vpop.f32.mrf.mxu0
    %v836 = vadd.f32 %v810, %v835
    %837 = vmatmul.f32.gmra.mxu0 %v200
    %v838 = vpop.f32.mrf.mxu0
    %v839 = vadd.f32 %v813, %v838
    %840 = vdwg.mxu0
    %841 = vmatpush.msra.mxu0 %v538
    %842 = vmatpush.msra.mxu0 %v535
    %843 = vmatpush.msra.mxu0 %v532
    %844 = vmatpush.msra.mxu0 %v529
    %845 = vmatpush.msra.mxu0 %v526
    %846 = vmatpush.msra.mxu0 %v523
    %847 = vmatpush.msra.mxu0 %v520
    %848 = vmatpush.msra.mxu0 %v517
    %849 = vmatpush.msra.mxu0 %v514
    %850 = vmatpush.msra.mxu0 %v511
    %851 = vmatpush.msra.mxu0 %v508
    %852 = vmatpush.msra.mxu0 %v505
    %853 = vmatpush.msra.mxu0 %v502
    %854 = vmatpush.msra.mxu0 %v499
    %855 = vmatpush.msra.mxu0 %v496
    %856 = vmatpush.msra.mxu0 %v493
    %857 = vmatmul.f32.gmra.mxu0 %v181
    %v858 = vpop.f32.mrf.mxu0
    %v859 = vadd.f32 %v833, %v858
    %860 = vmatmul.f32.gmra.mxu0 %v191
    %v861 = vpop.f32.mrf.mxu0
    %v862 = vadd.f32 %v836, %v861
    %863 = vmatmul.f32.gmra.mxu0 %v201
    %v864 = vpop.f32.mrf.mxu0
    %v865 = vadd.f32 %v839, %v864
    %866 = vdwg.mxu0
    %867 = vmatpush.msra.mxu0 %v586
    %868 = vmatpush.msra.mxu0 %v583
    %869 = vmatpush.msra.mxu0 %v580
    %870 = vmatpush.msra.mxu0 %v577
    %871 = vmatpush.msra.mxu0 %v574
    %872 = vmatpush.msra.mxu0 %v571
    %873 = vmatpush.msra.mxu0 %v568
    %874 = vmatpush.msra.mxu0 %v565
    %875 = vmatpush.msra.mxu0 %v562
    %876 = vmatpush.msra.mxu0 %v559
    %877 = vmatpush.msra.mxu0 %v556
    %878 = vmatpush.msra.mxu0 %v553
    %879 = vmatpush.msra.mxu0 %v550
    %880 = vmatpush.msra.mxu0 %v547
    %881 = vmatpush.msra.mxu0 %v544
    %882 = vmatpush.msra.mxu0 %v541
    %883 = vmatmul.f32.gmra.mxu0 %v182
    %v884 = vpop.f32.mrf.mxu0
    %v885 = vadd.f32 %v859, %v884
    %886 = vmatmul.f32.gmra.mxu0 %v192
    %v887 = vpop.f32.mrf.mxu0
    %v888 = vadd.f32 %v862, %v887
    %889 = vmatmul.f32.gmra.mxu0 %v202
    %v890 = vpop.f32.mrf.mxu0
    %v891 = vadd.f32 %v865, %v890
    %892 = vdwg.mxu0
    %893 = vmatpush.msra.mxu0 %v634
    %894 = vmatpush.msra.mxu0 %v631
    %895 = vmatpush.msra.mxu0 %v628
    %896 = vmatpush.msra.mxu0 %v625
    %897 = vmatpush.msra.mxu0 %v622
    %898 = vmatpush.msra.mxu0 %v619
    %899 = vmatpush.msra.mxu0 %v616
    %900 = vmatpush.msra.mxu0 %v613
    %901 = vmatpush.msra.mxu0 %v610
    %902 = vmatpush.msra.mxu0 %v607
    %903 = vmatpush.msra.mxu0 %v604
    %904 = vmatpush.msra.mxu0 %v601
    %905 = vmatpush.msra.mxu0 %v598
    %906 = vmatpush.msra.mxu0 %v595
    %907 = vmatpush.msra.mxu0 %v592
    %908 = vmatpush.msra.mxu0 %v589
    %909 = vmatmul.f32.gmra.mxu0 %v183
    %v910 = vpop.f32.mrf.mxu0
    %v911 = vadd.f32 %v885, %v910
    %912 = vmatmul.f32.gmra.mxu0 %v193
    %v913 = vpop.f32.mrf.mxu0
    %v914 = vadd.f32 %v888, %v913
    %915 = vmatmul.f32.gmra.mxu0 %v203
    %v916 = vpop.f32.mrf.mxu0
    %v917 = vadd.f32 %v891, %v916
    %918 = vdwg.mxu0
    %919 = vmatpush.msra.mxu0 %v682
    %920 = vmatpush.msra.mxu0 %v679
    %921 = vmatpush.msra.mxu0 %v676
    %922 = vmatpush.msra.mxu0 %v673
    %923 = vmatpush.msra.mxu0 %v670
    %924 = vmatpush.msra.mxu0 %v667
    %925 = vmatpush.msra.mxu0 %v664
    %926 = vmatpush.msra.mxu0 %v661
    %927 = vmatpush.msra.mxu0 %v658
    %928 = vmatpush.msra.mxu0 %v655
    %929 = vmatpush.msra.mxu0 %v652
    %930 = vmatpush.msra.mxu0 %v649
    %931 = vmatpush.msra.mxu0 %v646
    %932 = vmatpush.msra.mxu0 %v643
    %933 = vmatpush.msra.mxu0 %v640
    %934 = vmatpush.msra.mxu0 %v637
    %935 = vmatmul.f32.gmra.mxu0 %v184
    %v936 = vpop.f32.mrf.mxu0
    %v937 = vadd.f32 %v911, %v936
    %938 = vmatmul.f32.gmra.mxu0 %v194
    %v939 = vpop.f32.mrf.mxu0
    %v940 = vadd.f32 %v914, %v939
    %941 = vmatmul.f32.gmra.mxu0 %v204
    %v942 = vpop.f32.mrf.mxu0
    %v943 = vadd.f32 %v917, %v942
    %944 = vdwg.mxu0
    %945 = vmatpush.msra.mxu0 %v251
    %946 = vmatpush.msra.mxu0 %v248
    %947 = vmatpush.msra.mxu0 %v245
    %948 = vmatpush.msra.mxu0 %v242
    %949 = vmatpush.msra.mxu0 %v239
    %950 = vmatpush.msra.mxu0 %v236
    %951 = vmatpush.msra.mxu0 %v233
    %952 = vmatpush.msra.mxu0 %v230
    %953 = vmatpush.msra.mxu0 %v227
    %954 = vmatpush.msra.mxu0 %v224
    %955 = vmatpush.msra.mxu0 %v221
    %956 = vmatpush.msra.mxu0 %v218
    %957 = vmatpush.msra.mxu0 %v215
    %958 = vmatpush.msra.mxu0 %v212
    %959 = vmatpush.msra.mxu0 %v209
    %960 = vmatpush.msra.mxu0 %v206
    %961 = vmatmul.f32.gmra.mxu0 %v175
    %v962 = vpop.f32.mrf.mxu0
    %v963 = vadd.f32 0.0, %v962
    %964 = vmatmul.f32.gmra.mxu0 %v185
    %v965 = vpop.f32.mrf.mxu0
    %v966 = vadd.f32 0.0, %v965
    %967 = vmatmul.f32.gmra.mxu0 %v195
    %v968 = vpop.f32.mrf.mxu0
    %v969 = vadd.f32 0.0, %v968
    %970 = vdwg.mxu0
    %971 = vmatpush.msra.mxu0 %v299
    %972 = vmatpush.msra.mxu0 %v296
    %973 = vmatpush.msra.mxu0 %v293
    %974 = vmatpush.msra.mxu0 %v290
    %975 = vmatpush.msra.mxu0 %v287
    %976 = vmatpush.msra.mxu0 %v284
    %977 = vmatpush.msra.mxu0 %v281
    %978 = vmatpush.msra.mxu0 %v278
    %979 = vmatpush.msra.mxu0 %v275
    %980 = vmatpush.msra.mxu0 %v272
    %981 = vmatpush.msra.mxu0 %v269
    %982 = vmatpush.msra.mxu0 %v266
    %983 = vmatpush.msra.mxu0 %v263
    %984 = vmatpush.msra.mxu0 %v260
    %985 = vmatpush.msra.mxu0 %v257
    %986 = vmatpush.msra.mxu0 %v254
    %987 = vmatmul.f32.gmra.mxu0 %v176
    %v988 = vpop.f32.mrf.mxu0
    %v989 = vadd.f32 %v963, %v988
    %990 = vmatmul.f32.gmra.mxu0 %v186
    %v991 = vpop.f32.mrf.mxu0
    %v992 = vadd.f32 %v966, %v991
    %993 = vmatmul.f32.gmra.mxu0 %v196
    %v994 = vpop.f32.mrf.mxu0
    %v995 = vadd.f32 %v969, %v994
    %996 = vdwg.mxu0
    %997 = vmatpush.msra.mxu0 %v347
    %998 = vmatpush.msra.mxu0 %v344
    %999 = vmatpush.msra.mxu0 %v341
    %1000 = vmatpush.msra.mxu0 %v338
    %1001 = vmatpush.msra.mxu0 %v335
    %1002 = vmatpush.msra.mxu0 %v332
    %1003 = vmatpush.msra.mxu0 %v329
    %1004 = vmatpush.msra.mxu0 %v326
    %1005 = vmatpush.msra.mxu0 %v323
    %1006 = vmatpush.msra.mxu0 %v320
    %1007 = vmatpush.msra.mxu0 %v317
    %1008 = vmatpush.msra.mxu0 %v314
    %1009 = vmatpush.msra.mxu0 %v311
    %1010 = vmatpush.msra.mxu0 %v308
    %1011 = vmatpush.msra.mxu0 %v305
    %1012 = vmatpush.msra.mxu0 %v302
    %1013 = vmatmul.f32.gmra.mxu0 %v177
    %v1014 = vpop.f32.mrf.mxu0
    %v1015 = vadd.f32 %v989, %v1014
    %1016 = vmatmul.f32.gmra.mxu0 %v187
    %v1017 = vpop.f32.mrf.mxu0
    %v1018 = vadd.f32 %v992, %v1017
    %1019 = vmatmul.f32.gmra.mxu0 %v197
    %v1020 = vpop.f32.mrf.mxu0
    %v1021 = vadd.f32 %v995, %v1020
    %1022 = vdwg.mxu0
    %1023 = vmatpush.msra.mxu0 %v395
    %1024 = vmatpush.msra.mxu0 %v392
    %1025 = vmatpush.msra.mxu0 %v389
    %1026 = vmatpush.msra.mxu0 %v386
    %1027 = vmatpush.msra.mxu0 %v383
    %1028 = vmatpush.msra.mxu0 %v380
    %1029 = vmatpush.msra.mxu0 %v377
    %1030 = vmatpush.msra.mxu0 %v374
    %1031 = vmatpush.msra.mxu0 %v371
    %1032 = vmatpush.msra.mxu0 %v368
    %1033 = vmatpush.msra.mxu0 %v365
    %1034 = vmatpush.msra.mxu0 %v362
    %1035 = vmatpush.msra.mxu0 %v359
    %1036 = vmatpush.msra.mxu0 %v356
    %1037 = vmatpush.msra.mxu0 %v353
    %1038 = vmatpush.msra.mxu0 %v350
    %1039 = vmatmul.f32.gmra.mxu0 %v178
    %v1040 = vpop.f32.mrf.mxu0
    %v1041 = vadd.f32 %v1015, %v1040
    %1042 = vmatmul.f32.gmra.mxu0 %v188
    %v1043 = vpop.f32.mrf.mxu0
    %v1044 = vadd.f32 %v1018, %v1043
    %1045 = vmatmul.f32.gmra.mxu0 %v198
    %v1046 = vpop.f32.mrf.mxu0
    %v1047 = vadd.f32 %v1021, %v1046
    %1048 = vdwg.mxu0
    %1049 = vmatpush.msra.mxu0 %v443
    %1050 = vmatpush.msra.mxu0 %v440
    %1051 = vmatpush.msra.mxu0 %v437
    %1052 = vmatpush.msra.mxu0 %v434
    %1053 = vmatpush.msra.mxu0 %v431
    %1054 = vmatpush.msra.mxu0 %v428
    %1055 = vmatpush.msra.mxu0 %v425
    %1056 = vmatpush.msra.mxu0 %v422
    %1057 = vmatpush.msra.mxu0 %v419
    %1058 = vmatpush.msra.mxu0 %v416
    %1059 = vmatpush.msra.mxu0 %v413
    %1060 = vmatpush.msra.mxu0 %v410
    %1061 = vmatpush.msra.mxu0 %v407
    %1062 = vmatpush.msra.mxu0 %v404
    %1063 = vmatpush.msra.mxu0 %v401
    %1064 = vmatpush.msra.mxu0 %v398
    %1065 = vmatmul.f32.gmra.mxu0 %v179
    %v1066 = vpop.f32.mrf.mxu0
    %v1067 = vadd.f32 %v1041, %v1066
    %1068 = vmatmul.f32.gmra.mxu0 %v189
    %v1069 = vpop.f32.mrf.mxu0
    %v1070 = vadd.f32 %v1044, %v1069
    %1071 = vmatmul.f32.gmra.mxu0 %v199
    %v1072 = vpop.f32.mrf.mxu0
    %v1073 = vadd.f32 %v1047, %v1072
    %1074 = vdwg.mxu0
    %1075 = vmatpush.msra.mxu0 %v491
    %1076 = vmatpush.msra.mxu0 %v488
    %1077 = vmatpush.msra.mxu0 %v485
    %1078 = vmatpush.msra.mxu0 %v482
    %1079 = vmatpush.msra.mxu0 %v479
    %1080 = vmatpush.msra.mxu0 %v476
    %1081 = vmatpush.msra.mxu0 %v473
    %1082 = vmatpush.msra.mxu0 %v470
    %1083 = vmatpush.msra.mxu0 %v467
    %1084 = vmatpush.msra.mxu0 %v464
    %1085 = vmatpush.msra.mxu0 %v461
    %1086 = vmatpush.msra.mxu0 %v458
    %1087 = vmatpush.msra.mxu0 %v455
    %1088 = vmatpush.msra.mxu0 %v452
    %1089 = vmatpush.msra.mxu0 %v449
    %1090 = vmatpush.msra.mxu0 %v446
    %1091 = vmatmul.f32.gmra.mxu0 %v180
    %v1092 = vpop.f32.mrf.mxu0
    %v1093 = vadd.f32 %v1067, %v1092
    %1094 = vmatmul.f32.gmra.mxu0 %v190
    %v1095 = vpop.f32.mrf.mxu0
    %v1096 = vadd.f32 %v1070, %v1095
    %1097 = vmatmul.f32.gmra.mxu0 %v200
    %v1098 = vpop.f32.mrf.mxu0
    %v1099 = vadd.f32 %v1073, %v1098
    %1100 = vdwg.mxu0
    %1101 = vmatpush.msra.mxu0 %v539
    %1102 = vmatpush.msra.mxu0 %v536
    %1103 = vmatpush.msra.mxu0 %v533
    %1104 = vmatpush.msra.mxu0 %v530
    %1105 = vmatpush.msra.mxu0 %v527
    %1106 = vmatpush.msra.mxu0 %v524
    %1107 = vmatpush.msra.mxu0 %v521
    %1108 = vmatpush.msra.mxu0 %v518
    %1109 = vmatpush.msra.mxu0 %v515
    %1110 = vmatpush.msra.mxu0 %v512
    %1111 = vmatpush.msra.mxu0 %v509
    %1112 = vmatpush.msra.mxu0 %v506
    %1113 = vmatpush.msra.mxu0 %v503
    %1114 = vmatpush.msra.mxu0 %v500
    %1115 = vmatpush.msra.mxu0 %v497
    %1116 = vmatpush.msra.mxu0 %v494
    %1117 = vmatmul.f32.gmra.mxu0 %v181
    %v1118 = vpop.f32.mrf.mxu0
    %v1119 = vadd.f32 %v1093, %v1118
    %1120 = vmatmul.f32.gmra.mxu0 %v191
    %v1121 = vpop.f32.mrf.mxu0
    %v1122 = vadd.f32 %v1096, %v1121
    %1123 = vmatmul.f32.gmra.mxu0 %v201
    %v1124 = vpop.f32.mrf.mxu0
    %v1125 = vadd.f32 %v1099, %v1124
    %1126 = vdwg.mxu0
    %1127 = vmatpush.msra.mxu0 %v587
    %1128 = vmatpush.msra.mxu0 %v584
    %1129 = vmatpush.msra.mxu0 %v581
    %1130 = vmatpush.msra.mxu0 %v578
    %1131 = vmatpush.msra.mxu0 %v575
    %1132 = vmatpush.msra.mxu0 %v572
    %1133 = vmatpush.msra.mxu0 %v569
    %1134 = vmatpush.msra.mxu0 %v566
    %1135 = vmatpush.msra.mxu0 %v563
    %1136 = vmatpush.msra.mxu0 %v560
    %1137 = vmatpush.msra.mxu0 %v557
    %1138 = vmatpush.msra.mxu0 %v554
    %1139 = vmatpush.msra.mxu0 %v551
    %1140 = vmatpush.msra.mxu0 %v548
    %1141 = vmatpush.msra.mxu0 %v545
    %1142 = vmatpush.msra.mxu0 %v542
    %1143 = vmatmul.f32.gmra.mxu0 %v182
    %v1144 = vpop.f32.mrf.mxu0
    %v1145 = vadd.f32 %v1119, %v1144
    %1146 = vmatmul.f32.gmra.mxu0 %v192
    %v1147 = vpop.f32.mrf.mxu0
    %v1148 = vadd.f32 %v1122, %v1147
    %1149 = vmatmul.f32.gmra.mxu0 %v202
    %v1150 = vpop.f32.mrf.mxu0
    %v1151 = vadd.f32 %v1125, %v1150
    %1152 = vdwg.mxu0
    %1153 = vmatpush.msra.mxu0 %v635
    %1154 = vmatpush.msra.mxu0 %v632
    %1155 = vmatpush.msra.mxu0 %v629
    %1156 = vmatpush.msra.mxu0 %v626
    %1157 = vmatpush.msra.mxu0 %v623
    %1158 = vmatpush.msra.mxu0 %v620
    %1159 = vmatpush.msra.mxu0 %v617
    %1160 = vmatpush.msra.mxu0 %v614
    %1161 = vmatpush.msra.mxu0 %v611
    %1162 = vmatpush.msra.mxu0 %v608
    %1163 = vmatpush.msra.mxu0 %v605
    %1164 = vmatpush.msra.mxu0 %v602
    %1165 = vmatpush.msra.mxu0 %v599
    %1166 = vmatpush.msra.mxu0 %v596
    %1167 = vmatpush.msra.mxu0 %v593
    %1168 = vmatpush.msra.mxu0 %v590
    %1169 = vmatmul.f32.gmra.mxu0 %v183
    %v1170 = vpop.f32.mrf.mxu0
    %v1171 = vadd.f32 %v1145, %v1170
    %1172 = vmatmul.f32.gmra.mxu0 %v193
    %v1173 = vpop.f32.mrf.mxu0
    %v1174 = vadd.f32 %v1148, %v1173
    %1175 = vmatmul.f32.gmra.mxu0 %v203
    %v1176 = vpop.f32.mrf.mxu0
    %v1177 = vadd.f32 %v1151, %v1176
    %1178 = vdwg.mxu0
    %1179 = vmatpush.msra.mxu0 %v683
    %1180 = vmatpush.msra.mxu0 %v680
    %1181 = vmatpush.msra.mxu0 %v677
    %1182 = vmatpush.msra.mxu0 %v674
    %1183 = vmatpush.msra.mxu0 %v671
    %1184 = vmatpush.msra.mxu0 %v668
    %1185 = vmatpush.msra.mxu0 %v665
    %1186 = vmatpush.msra.mxu0 %v662
    %1187 = vmatpush.msra.mxu0 %v659
    %1188 = vmatpush.msra.mxu0 %v656
    %1189 = vmatpush.msra.mxu0 %v653
    %1190 = vmatpush.msra.mxu0 %v650
    %1191 = vmatpush.msra.mxu0 %v647
    %1192 = vmatpush.msra.mxu0 %v644
    %1193 = vmatpush.msra.mxu0 %v641
    %1194 = vmatpush.msra.mxu0 %v638
    %1195 = vmatmul.f32.gmra.mxu0 %v184
    %v1196 = vpop.f32.mrf.mxu0
    %v1197 = vadd.f32 %v1171, %v1196
    %1198 = vmatmul.f32.gmra.mxu0 %v194
    %v1199 = vpop.f32.mrf.mxu0
    %v1200 = vadd.f32 %v1174, %v1199
    %1201 = vmatmul.f32.gmra.mxu0 %v204
    %v1202 = vpop.f32.mrf.mxu0
    %v1203 = vadd.f32 %v1177, %v1202
    %1204 = vdwg.mxu0
    %1205 = vmatpush.msra.mxu0 %v252
    %1206 = vmatpush.msra.mxu0 %v249
    %1207 = vmatpush.msra.mxu0 %v246
    %1208 = vmatpush.msra.mxu0 %v243
    %1209 = vmatpush.msra.mxu0 %v240
    %1210 = vmatpush.msra.mxu0 %v237
    %1211 = vmatpush.msra.mxu0 %v234
    %1212 = vmatpush.msra.mxu0 %v231
    %1213 = vmatpush.msra.mxu0 %v228
    %1214 = vmatpush.msra.mxu0 %v225
    %1215 = vmatpush.msra.mxu0 %v222
    %1216 = vmatpush.msra.mxu0 %v219
    %1217 = vmatpush.msra.mxu0 %v216
    %1218 = vmatpush.msra.mxu0 %v213
    %1219 = vmatpush.msra.mxu0 %v210
    %1220 = vmatpush.msra.mxu0 %v207
    %1221 = vmatmul.f32.gmra.mxu0 %v175
    %v1222 = vpop.f32.mrf.mxu0
    %v1223 = vadd.f32 0.0, %v1222
    %1224 = vmatmul.f32.gmra.mxu0 %v185
    %v1225 = vpop.f32.mrf.mxu0
    %v1226 = vadd.f32 0.0, %v1225
    %1227 = vmatmul.f32.gmra.mxu0 %v195
    %v1228 = vpop.f32.mrf.mxu0
    %v1229 = vadd.f32 0.0, %v1228
    %1230 = vdwg.mxu0
    %1231 = vmatpush.msra.mxu0 %v300
    %1232 = vmatpush.msra.mxu0 %v297
    %1233 = vmatpush.msra.mxu0 %v294
    %1234 = vmatpush.msra.mxu0 %v291
    %1235 = vmatpush.msra.mxu0 %v288
    %1236 = vmatpush.msra.mxu0 %v285
    %1237 = vmatpush.msra.mxu0 %v282
    %1238 = vmatpush.msra.mxu0 %v279
    %1239 = vmatpush.msra.mxu0 %v276
    %1240 = vmatpush.msra.mxu0 %v273
    %1241 = vmatpush.msra.mxu0 %v270
    %1242 = vmatpush.msra.mxu0 %v267
    %1243 = vmatpush.msra.mxu0 %v264
    %1244 = vmatpush.msra.mxu0 %v261
    %1245 = vmatpush.msra.mxu0 %v258
    %1246 = vmatpush.msra.mxu0 %v255
    %1247 = vmatmul.f32.gmra.mxu0 %v176
    %v1248 = vpop.f32.mrf.mxu0
    %v1249 = vadd.f32 %v1223, %v1248
    %1250 = vmatmul.f32.gmra.mxu0 %v186
    %v1251 = vpop.f32.mrf.mxu0
    %v1252 = vadd.f32 %v1226, %v1251
    %1253 = vmatmul.f32.gmra.mxu0 %v196
    %v1254 = vpop.f32.mrf.mxu0
    %v1255 = vadd.f32 %v1229, %v1254
    %1256 = vdwg.mxu0
    %1257 = vmatpush.msra.mxu0 %v348
    %1258 = vmatpush.msra.mxu0 %v345
    %1259 = vmatpush.msra.mxu0 %v342
    %1260 = vmatpush.msra.mxu0 %v339
    %1261 = vmatpush.msra.mxu0 %v336
    %1262 = vmatpush.msra.mxu0 %v333
    %1263 = vmatpush.msra.mxu0 %v330
    %1264 = vmatpush.msra.mxu0 %v327
    %1265 = vmatpush.msra.mxu0 %v324
    %1266 = vmatpush.msra.mxu0 %v321
    %1267 = vmatpush.msra.mxu0 %v318
    %1268 = vmatpush.msra.mxu0 %v315
    %1269 = vmatpush.msra.mxu0 %v312
    %1270 = vmatpush.msra.mxu0 %v309
    %1271 = vmatpush.msra.mxu0 %v306
    %1272 = vmatpush.msra.mxu0 %v303
    %1273 = vmatmul.f32.gmra.mxu0 %v177
    %v1274 = vpop.f32.mrf.mxu0
    %v1275 = vadd.f32 %v1249, %v1274
    %1276 = vmatmul.f32.gmra.mxu0 %v187
    %v1277 = vpop.f32.mrf.mxu0
    %v1278 = vadd.f32 %v1252, %v1277
    %1279 = vmatmul.f32.gmra.mxu0 %v197
    %v1280 = vpop.f32.mrf.mxu0
    %v1281 = vadd.f32 %v1255, %v1280
    %1282 = vdwg.mxu0
    %1283 = vmatpush.msra.mxu0 %v396
    %1284 = vmatpush.msra.mxu0 %v393
    %1285 = vmatpush.msra.mxu0 %v390
    %1286 = vmatpush.msra.mxu0 %v387
    %1287 = vmatpush.msra.mxu0 %v384
    %1288 = vmatpush.msra.mxu0 %v381
    %1289 = vmatpush.msra.mxu0 %v378
    %1290 = vmatpush.msra.mxu0 %v375
    %1291 = vmatpush.msra.mxu0 %v372
    %1292 = vmatpush.msra.mxu0 %v369
    %1293 = vmatpush.msra.mxu0 %v366
    %1294 = vmatpush.msra.mxu0 %v363
    %1295 = vmatpush.msra.mxu0 %v360
    %1296 = vmatpush.msra.mxu0 %v357
    %1297 = vmatpush.msra.mxu0 %v354
    %1298 = vmatpush.msra.mxu0 %v351
    %1299 = vmatmul.f32.gmra.mxu0 %v178
    %v1300 = vpop.f32.mrf.mxu0
    %v1301 = vadd.f32 %v1275, %v1300
    %1302 = vmatmul.f32.gmra.mxu0 %v188
    %v1303 = vpop.f32.mrf.mxu0
    %v1304 = vadd.f32 %v1278, %v1303
    %1305 = vmatmul.f32.gmra.mxu0 %v198
    %v1306 = vpop.f32.mrf.mxu0
    %v1307 = vadd.f32 %v1281, %v1306
    %1308 = vdwg.mxu0
    %1309 = vmatpush.msra.mxu0 %v444
    %1310 = vmatpush.msra.mxu0 %v441
    %1311 = vmatpush.msra.mxu0 %v438
    %1312 = vmatpush.msra.mxu0 %v435
    %1313 = vmatpush.msra.mxu0 %v432
    %1314 = vmatpush.msra.mxu0 %v429
    %1315 = vmatpush.msra.mxu0 %v426
    %1316 = vmatpush.msra.mxu0 %v423
    %1317 = vmatpush.msra.mxu0 %v420
    %1318 = vmatpush.msra.mxu0 %v417
    %1319 = vmatpush.msra.mxu0 %v414
    %1320 = vmatpush.msra.mxu0 %v411
    %1321 = vmatpush.msra.mxu0 %v408
    %1322 = vmatpush.msra.mxu0 %v405
    %1323 = vmatpush.msra.mxu0 %v402
    %1324 = vmatpush.msra.mxu0 %v399
    %1325 = vmatmul.f32.gmra.mxu0 %v179
    %v1326 = vpop.f32.mrf.mxu0
    %v1327 = vadd.f32 %v1301, %v1326
    %1328 = vmatmul.f32.gmra.mxu0 %v189
    %v1329 = vpop.f32.mrf.mxu0
    %v1330 = vadd.f32 %v1304, %v1329
    %1331 = vmatmul.f32.gmra.mxu0 %v199
    %v1332 = vpop.f32.mrf.mxu0
    %v1333 = vadd.f32 %v1307, %v1332
    %1334 = vdwg.mxu0
    %1335 = vmatpush.msra.mxu0 %v492
    %1336 = vmatpush.msra.mxu0 %v489
    %1337 = vmatpush.msra.mxu0 %v486
    %1338 = vmatpush.msra.mxu0 %v483
    %1339 = vmatpush.msra.mxu0 %v480
    %1340 = vmatpush.msra.mxu0 %v477
    %1341 = vmatpush.msra.mxu0 %v474
    %1342 = vmatpush.msra.mxu0 %v471
    %1343 = vmatpush.msra.mxu0 %v468
    %1344 = vmatpush.msra.mxu0 %v465
    %1345 = vmatpush.msra.mxu0 %v462
    %1346 = vmatpush.msra.mxu0 %v459
    %1347 = vmatpush.msra.mxu0 %v456
    %1348 = vmatpush.msra.mxu0 %v453
    %1349 = vmatpush.msra.mxu0 %v450
    %1350 = vmatpush.msra.mxu0 %v447
    %1351 = vmatmul.f32.gmra.mxu0 %v180
    %v1352 = vpop.f32.mrf.mxu0
    %v1353 = vadd.f32 %v1327, %v1352
    %1354 = vmatmul.f32.gmra.mxu0 %v190
    %v1355 = vpop.f32.mrf.mxu0
    %v1356 = vadd.f32 %v1330, %v1355
    %1357 = vmatmul.f32.gmra.mxu0 %v200
    %v1358 = vpop.f32.mrf.mxu0
    %v1359 = vadd.f32 %v1333, %v1358
    %1360 = vdwg.mxu0
    %1361 = vmatpush.msra.mxu0 %v540
    %1362 = vmatpush.msra.mxu0 %v537
    %1363 = vmatpush.msra.mxu0 %v534
    %1364 = vmatpush.msra.mxu0 %v531
    %1365 = vmatpush.msra.mxu0 %v528
    %1366 = vmatpush.msra.mxu0 %v525
    %1367 = vmatpush.msra.mxu0 %v522
    %1368 = vmatpush.msra.mxu0 %v519
    %1369 = vmatpush.msra.mxu0 %v516
    %1370 = vmatpush.msra.mxu0 %v513
    %1371 = vmatpush.msra.mxu0 %v510
    %1372 = vmatpush.msra.mxu0 %v507
    %1373 = vmatpush.msra.mxu0 %v504
    %1374 = vmatpush.msra.mxu0 %v501
    %1375 = vmatpush.msra.mxu0 %v498
    %1376 = vmatpush.msra.mxu0 %v495
    %1377 = vmatmul.f32.gmra.mxu0 %v181
    %v1378 = vpop.f32.mrf.mxu0
    %v1379 = vadd.f32 %v1353, %v1378
    %1380 = vmatmul.f32.gmra.mxu0 %v191
    %v1381 = vpop.f32.mrf.mxu0
    %v1382 = vadd.f32 %v1356, %v1381
    %1383 = vmatmul.f32.gmra.mxu0 %v201
    %v1384 = vpop.f32.mrf.mxu0
    %v1385 = vadd.f32 %v1359, %v1384
    %1386 = vdwg.mxu0
    %1387 = vmatpush.msra.mxu0 %v588
    %1388 = vmatpush.msra.mxu0 %v585
    %1389 = vmatpush.msra.mxu0 %v582
    %1390 = vmatpush.msra.mxu0 %v579
    %1391 = vmatpush.msra.mxu0 %v576
    %1392 = vmatpush.msra.mxu0 %v573
    %1393 = vmatpush.msra.mxu0 %v570
    %1394 = vmatpush.msra.mxu0 %v567
    %1395 = vmatpush.msra.mxu0 %v564
    %1396 = vmatpush.msra.mxu0 %v561
    %1397 = vmatpush.msra.mxu0 %v558
    %1398 = vmatpush.msra.mxu0 %v555
    %1399 = vmatpush.msra.mxu0 %v552
    %1400 = vmatpush.msra.mxu0 %v549
    %1401 = vmatpush.msra.mxu0 %v546
    %1402 = vmatpush.msra.mxu0 %v543
    %1403 = vmatmul.f32.gmra.mxu0 %v182
    %v1404 = vpop.f32.mrf.mxu0
    %v1405 = vadd.f32 %v1379, %v1404
    %1406 = vmatmul.f32.gmra.mxu0 %v192
    %v1407 = vpop.f32.mrf.mxu0
    %v1408 = vadd.f32 %v1382, %v1407
    %1409 = vmatmul.f32.gmra.mxu0 %v202
    %v1410 = vpop.f32.mrf.mxu0
    %v1411 = vadd.f32 %v1385, %v1410
    %1412 = vdwg.mxu0
    %1413 = vmatpush.msra.mxu0 %v636
    %1414 = vmatpush.msra.mxu0 %v633
    %1415 = vmatpush.msra.mxu0 %v630
    %1416 = vmatpush.msra.mxu0 %v627
    %1417 = vmatpush.msra.mxu0 %v624
    %1418 = vmatpush.msra.mxu0 %v621
    %1419 = vmatpush.msra.mxu0 %v618
    %1420 = vmatpush.msra.mxu0 %v615
    %1421 = vmatpush.msra.mxu0 %v612
    %1422 = vmatpush.msra.mxu0 %v609
    %1423 = vmatpush.msra.mxu0 %v606
    %1424 = vmatpush.msra.mxu0 %v603
    %1425 = vmatpush.msra.mxu0 %v600
    %1426 = vmatpush.msra.mxu0 %v597
    %1427 = vmatpush.msra.mxu0 %v594
    %1428 = vmatpush.msra.mxu0 %v591
    %1429 = vmatmul.f32.gmra.mxu0 %v183
    %v1430 = vpop.f32.mrf.mxu0
    %v1431 = vadd.f32 %v1405, %v1430
    %1432 = vmatmul.f32.gmra.mxu0 %v193
    %v1433 = vpop.f32.mrf.mxu0
    %v1434 = vadd.f32 %v1408, %v1433
    %1435 = vmatmul.f32.gmra.mxu0 %v203
    %v1436 = vpop.f32.mrf.mxu0
    %v1437 = vadd.f32 %v1411, %v1436
    %1438 = vdwg.mxu0
    %1439 = vmatpush.msra.mxu0 %v684
    %1440 = vmatpush.msra.mxu0 %v681
    %1441 = vmatpush.msra.mxu0 %v678
    %1442 = vmatpush.msra.mxu0 %v675
    %1443 = vmatpush.msra.mxu0 %v672
    %1444 = vmatpush.msra.mxu0 %v669
    %1445 = vmatpush.msra.mxu0 %v666
    %1446 = vmatpush.msra.mxu0 %v663
    %1447 = vmatpush.msra.mxu0 %v660
    %1448 = vmatpush.msra.mxu0 %v657
    %1449 = vmatpush.msra.mxu0 %v654
    %1450 = vmatpush.msra.mxu0 %v651
    %1451 = vmatpush.msra.mxu0 %v648
    %1452 = vmatpush.msra.mxu0 %v645
    %1453 = vmatpush.msra.mxu0 %v642
    %1454 = vmatpush.msra.mxu0 %v639
    %1455 = vmatmul.f32.gmra.mxu0 %v184
    %v1456 = vpop.f32.mrf.mxu0
    %v1457 = vadd.f32 %v1431, %v1456
    %1458 = vmatmul.f32.gmra.mxu0 %v194
    %v1459 = vpop.f32.mrf.mxu0
    %v1460 = vadd.f32 %v1434, %v1459
    %1461 = vmatmul.f32.gmra.mxu0 %v204
    %v1462 = vpop.f32.mrf.mxu0
    %v1463 = vadd.f32 %v1437, %v1462
    %1464 = vdwg.mxu0
    %v1465 = vtanh.pop %v937
    %v1466 = vtanh.pop %v1197
    %v1467 = vtanh.pop %v1457
    %v1468 = vtanh.pop %v940
    %v1469 = vtanh.pop %v1200
    %v1470 = vtanh.pop %v1460
    %v1471 = vtanh.pop %v943
    %v1472 = vtanh.pop %v1203
    %v1473 = vtanh.pop %v1463
    %1474 = vst [vmem:[#allocation3] sm:$0xff] %v1465
    %1475 = vst [vmem:[#allocation3 + $0x8] sm:$0xff] %v1466
    %1476 = vst [vmem:[#allocation3 + $0x10] sm:$0xff] %v1467
    %1477 = vst [vmem:[#allocation3 + $0x18] sm:$0xff] %v1468
    %1478 = vst [vmem:[#allocation3 + $0x20] sm:$0xff] %v1469
    %1479 = vst [vmem:[#allocation3 + $0x28] sm:$0xff] %v1470
    %1480 = vst [vmem:[#allocation3 + $0x30] sm:$0xf] %v1471
    %1481 = vst [vmem:[#allocation3 + $0x38] sm:$0xf] %v1472
    %1482 = vst [vmem:[#allocation3 + $0x40] sm:$0xf] %v1473
    %v1483 = vld [vmem:[#allocation2] sm:$0xfc]
    %v1484 = vld [vmem:[#allocation2 + $0x8] sm:$0xfc]
    %v1485 = vld [vmem:[#allocation2 + $0x10] sm:$0xfc]
    %v1486 = vld [vmem:[#allocation2 + $0x18] sm:$0xfc]
    %v1487 = vld [vmem:[#allocation2 + $0x20] sm:$0xfc]
    %v1488 = vld [vmem:[#allocation2 + $0x28] sm:$0xfc]
    %v1489 = vld [vmem:[#allocation2 + $0x30] sm:$0xfc]
    %v1490 = vld [vmem:[#allocation2 + $0x38] sm:$0xfc]
    %v1491 = vld [vmem:[#allocation2 + $0x40] sm:$0xfc]
    %v1492 = vld [vmem:[#allocation2 + $0x48] sm:$0xfc]
    %v1493 = vld [vmem:[#allocation2 + $0x50] sm:$0xff]
    %v1494 = vld [vmem:[#allocation2 + $0x58] sm:$0xff]
    %v1495 = vld [vmem:[#allocation2 + $0x60] sm:$0xff]
    %v1496 = vld [vmem:[#allocation2 + $0x68] sm:$0xff]
    %v1497 = vld [vmem:[#allocation2 + $0x70] sm:$0xff]
    %v1498 = vld [vmem:[#allocation2 + $0x78] sm:$0xff]
    %v1499 = vld [vmem:[#allocation2 + $0x80] sm:$0xff]
    %v1500 = vld [vmem:[#allocation2 + $0x88] sm:$0xff]
    %v1501 = vld [vmem:[#allocation2 + $0x90] sm:$0xff]
    %v1502 = vld [vmem:[#allocation2 + $0x98] sm:$0xff]
    %v1503 = vld [vmem:[#allocation2 + $0xa0] sm:$0x3]
    %v1504 = vld [vmem:[#allocation2 + $0xa8] sm:$0x3]
    %v1505 = vld [vmem:[#allocation2 + $0xb0] sm:$0x3]
    %v1506 = vld [vmem:[#allocation2 + $0xb8] sm:$0x3]
    %v1507 = vld [vmem:[#allocation2 + $0xc0] sm:$0x3]
    %v1508 = vld [vmem:[#allocation2 + $0xc8] sm:$0x3]
    %v1509 = vld [vmem:[#allocation2 + $0xd0] sm:$0x3]
    %v1510 = vld [vmem:[#allocation2 + $0xd8] sm:$0x3]
    %v1511 = vld [vmem:[#allocation2 + $0xe0] sm:$0x3]
    %v1512 = vld [vmem:[#allocation2 + $0xe8] sm:$0x3]
    %v1513 = vld [vmem:[#allocation7] sm:$0xff]
    %v1514 = vld [vmem:[#allocation7 + $0x8] sm:$0xff]
    %v1515 = vld [vmem:[#allocation7 + $0x10] sm:$0xff]
    %v1516 = vld [vmem:[#allocation7 + $0x18] sm:$0xff]
    %v1517 = vld [vmem:[#allocation7 + $0x20] sm:$0xff]
    %v1518 = vld [vmem:[#allocation7 + $0x28] sm:$0xff]
    %v1519 = vld [vmem:[#allocation7 + $0x30] sm:$0xff]
    %v1520 = vld [vmem:[#allocation7 + $0x38] sm:$0xff]
    %v1521 = vld [vmem:[#allocation7 + $0x40] sm:$0xff]
    %v1522 = vld [vmem:[#allocation7 + $0x48] sm:$0xff]
    %v1523 = vld [vmem:[#allocation7 + $0x50] sm:$0xff]
    %v1524 = vld [vmem:[#allocation7 + $0x58] sm:$0xff]
    %v1525 = vld [vmem:[#allocation7 + $0x60] sm:$0xff]
    %v1526 = vld [vmem:[#allocation7 + $0x68] sm:$0xff]
    %v1527 = vld [vmem:[#allocation7 + $0x70] sm:$0xff]
    %v1528 = vld [vmem:[#allocation7 + $0x78] sm:$0xff]
    %v1529 = vld [vmem:[#allocation7 + $0x80] sm:$0xff]
    %v1530 = vld [vmem:[#allocation7 + $0x88] sm:$0xff]
    %v1531 = vld [vmem:[#allocation7 + $0x90] sm:$0xff]
    %v1532 = vld [vmem:[#allocation7 + $0x98] sm:$0xff]
    %v1533 = vld [vmem:[#allocation7 + $0xa0] sm:$0xff]
    %v1534 = vld [vmem:[#allocation7 + $0xa8] sm:$0xff]
    %v1535 = vld [vmem:[#allocation7 + $0xb0] sm:$0xff]
    %v1536 = vld [vmem:[#allocation7 + $0xb8] sm:$0xff]
    %v1537 = vld [vmem:[#allocation7 + $0xc0] sm:$0xff]
    %v1538 = vld [vmem:[#allocation7 + $0xc8] sm:$0xff]
    %v1539 = vld [vmem:[#allocation7 + $0xd0] sm:$0xff]
    %v1540 = vld [vmem:[#allocation7 + $0xd8] sm:$0xff]
    %v1541 = vld [vmem:[#allocation7 + $0xe0] sm:$0xff]
    %v1542 = vld [vmem:[#allocation7 + $0xe8] sm:$0xff]
    %v1543 = vld [vmem:[#allocation7 + $0xf0] sm:$0xff]
    %v1544 = vld [vmem:[#allocation7 + $0xf8] sm:$0xff]
    %v1545 = vld [vmem:[#allocation7 + $0x100] sm:$0xff]
    %v1546 = vld [vmem:[#allocation7 + $0x108] sm:$0xff]
    %v1547 = vld [vmem:[#allocation7 + $0x110] sm:$0xff]
    %v1548 = vld [vmem:[#allocation7 + $0x118] sm:$0xff]
    %v1549 = vld [vmem:[#allocation7 + $0x120] sm:$0xff]
    %v1550 = vld [vmem:[#allocation7 + $0x128] sm:$0xff]
    %v1551 = vld [vmem:[#allocation7 + $0x130] sm:$0xff]
    %v1552 = vld [vmem:[#allocation7 + $0x138] sm:$0xff]
    %v1553 = vld [vmem:[#allocation7 + $0x140] sm:$0xff]
    %v1554 = vld [vmem:[#allocation7 + $0x148] sm:$0xff]
    %v1555 = vld [vmem:[#allocation7 + $0x150] sm:$0xff]
    %v1556 = vld [vmem:[#allocation7 + $0x158] sm:$0xff]
    %v1557 = vld [vmem:[#allocation7 + $0x160] sm:$0xff]
    %v1558 = vld [vmem:[#allocation7 + $0x168] sm:$0xff]
    %v1559 = vld [vmem:[#allocation7 + $0x170] sm:$0xff]
    %v1560 = vld [vmem:[#allocation7 + $0x178] sm:$0xff]
    %v1561 = vld [vmem:[#allocation7 + $0x180] sm:$0xff]
    %v1562 = vld [vmem:[#allocation7 + $0x188] sm:$0xff]
    %v1563 = vld [vmem:[#allocation7 + $0x190] sm:$0xff]
    %v1564 = vld [vmem:[#allocation7 + $0x198] sm:$0xff]
    %v1565 = vld [vmem:[#allocation7 + $0x1a0] sm:$0xff]
    %v1566 = vld [vmem:[#allocation7 + $0x1a8] sm:$0xff]
    %v1567 = vld [vmem:[#allocation7 + $0x1b0] sm:$0xff]
    %v1568 = vld [vmem:[#allocation7 + $0x1b8] sm:$0xff]
    %v1569 = vld [vmem:[#allocation7 + $0x1c0] sm:$0xff]
    %v1570 = vld [vmem:[#allocation7 + $0x1c8] sm:$0xff]
    %v1571 = vld [vmem:[#allocation7 + $0x1d0] sm:$0xff]
    %v1572 = vld [vmem:[#allocation7 + $0x1d8] sm:$0xff]
    %v1573 = vld [vmem:[#allocation7 + $0x1e0] sm:$0xff]
    %v1574 = vld [vmem:[#allocation7 + $0x1e8] sm:$0xff]
    %v1575 = vld [vmem:[#allocation7 + $0x1f0] sm:$0xff]
    %v1576 = vld [vmem:[#allocation7 + $0x1f8] sm:$0xff]
    %v1577 = vld [vmem:[#allocation7 + $0x200] sm:$0xff]
    %v1578 = vld [vmem:[#allocation7 + $0x208] sm:$0xff]
    %v1579 = vld [vmem:[#allocation7 + $0x210] sm:$0xff]
    %v1580 = vld [vmem:[#allocation7 + $0x218] sm:$0xff]
    %v1581 = vld [vmem:[#allocation7 + $0x220] sm:$0xff]
    %v1582 = vld [vmem:[#allocation7 + $0x228] sm:$0xff]
    %v1583 = vld [vmem:[#allocation7 + $0x230] sm:$0xff]
    %v1584 = vld [vmem:[#allocation7 + $0x238] sm:$0xff]
    %v1585 = vld [vmem:[#allocation7 + $0x240] sm:$0xff]
    %v1586 = vld [vmem:[#allocation7 + $0x248] sm:$0xff]
    %v1587 = vld [vmem:[#allocation7 + $0x250] sm:$0xff]
    %v1588 = vld [vmem:[#allocation7 + $0x258] sm:$0xff]
    %v1589 = vld [vmem:[#allocation7 + $0x260] sm:$0xff]
    %v1590 = vld [vmem:[#allocation7 + $0x268] sm:$0xff]
    %v1591 = vld [vmem:[#allocation7 + $0x270] sm:$0xff]
    %v1592 = vld [vmem:[#allocation7 + $0x278] sm:$0xff]
    %v1593 = vld [vmem:[#allocation7 + $0x280] sm:$0xff]
    %v1594 = vld [vmem:[#allocation7 + $0x288] sm:$0xff]
    %v1595 = vld [vmem:[#allocation7 + $0x290] sm:$0xff]
    %v1596 = vld [vmem:[#allocation7 + $0x298] sm:$0xff]
    %v1597 = vld [vmem:[#allocation7 + $0x2a0] sm:$0xff]
    %v1598 = vld [vmem:[#allocation7 + $0x2a8] sm:$0xff]
    %v1599 = vld [vmem:[#allocation7 + $0x2b0] sm:$0xff]
    %v1600 = vld [vmem:[#allocation7 + $0x2b8] sm:$0xff]
    %v1601 = vld [vmem:[#allocation7 + $0x2c0] sm:$0xff]
    %v1602 = vld [vmem:[#allocation7 + $0x2c8] sm:$0xff]
    %v1603 = vld [vmem:[#allocation7 + $0x2d0] sm:$0xff]
    %v1604 = vld [vmem:[#allocation7 + $0x2d8] sm:$0xff]
    %v1605 = vld [vmem:[#allocation7 + $0x2e0] sm:$0xff]
    %v1606 = vld [vmem:[#allocation7 + $0x2e8] sm:$0xff]
    %v1607 = vld [vmem:[#allocation7 + $0x2f0] sm:$0xff]
    %v1608 = vld [vmem:[#allocation7 + $0x2f8] sm:$0xff]
    %v1609 = vld [vmem:[#allocation7 + $0x300] sm:$0xff]
    %v1610 = vld [vmem:[#allocation7 + $0x308] sm:$0xff]
    %v1611 = vld [vmem:[#allocation7 + $0x310] sm:$0xff]
    %v1612 = vld [vmem:[#allocation7 + $0x318] sm:$0xff]
    %v1613 = vld [vmem:[#allocation7 + $0x320] sm:$0xff]
    %v1614 = vld [vmem:[#allocation7 + $0x328] sm:$0xff]
    %v1615 = vld [vmem:[#allocation7 + $0x330] sm:$0xff]
    %v1616 = vld [vmem:[#allocation7 + $0x338] sm:$0xff]
    %v1617 = vld [vmem:[#allocation7 + $0x340] sm:$0xff]
    %v1618 = vld [vmem:[#allocation7 + $0x348] sm:$0xff]
    %v1619 = vld [vmem:[#allocation7 + $0x350] sm:$0xff]
    %v1620 = vld [vmem:[#allocation7 + $0x358] sm:$0xff]
    %v1621 = vld [vmem:[#allocation7 + $0x360] sm:$0xff]
    %v1622 = vld [vmem:[#allocation7 + $0x368] sm:$0xff]
    %v1623 = vld [vmem:[#allocation7 + $0x370] sm:$0xff]
    %v1624 = vld [vmem:[#allocation7 + $0x378] sm:$0xff]
    %v1625 = vld [vmem:[#allocation7 + $0x380] sm:$0xff]
    %v1626 = vld [vmem:[#allocation7 + $0x388] sm:$0xff]
    %v1627 = vld [vmem:[#allocation7 + $0x390] sm:$0xff]
    %v1628 = vld [vmem:[#allocation7 + $0x398] sm:$0xff]
    %v1629 = vld [vmem:[#allocation7 + $0x3a0] sm:$0xff]
    %v1630 = vld [vmem:[#allocation7 + $0x3a8] sm:$0xff]
    %v1631 = vld [vmem:[#allocation7 + $0x3b0] sm:$0xff]
    %v1632 = vld [vmem:[#allocation7 + $0x3b8] sm:$0xff]
    %v1633 = vld [vmem:[#allocation7 + $0x3c0] sm:$0xff]
    %v1634 = vld [vmem:[#allocation7 + $0x3c8] sm:$0xff]
    %v1635 = vld [vmem:[#allocation7 + $0x3d0] sm:$0xff]
    %v1636 = vld [vmem:[#allocation7 + $0x3d8] sm:$0xff]
    %v1637 = vld [vmem:[#allocation7 + $0x3e0] sm:$0xff]
    %v1638 = vld [vmem:[#allocation7 + $0x3e8] sm:$0xff]
    %v1639 = vld [vmem:[#allocation7 + $0x3f0] sm:$0xff]
    %v1640 = vld [vmem:[#allocation7 + $0x3f8] sm:$0xff]
    %v1641 = vld [vmem:[#allocation7 + $0x400] sm:$0xff]
    %v1642 = vld [vmem:[#allocation7 + $0x408] sm:$0xff]
    %v1643 = vld [vmem:[#allocation7 + $0x410] sm:$0xff]
    %v1644 = vld [vmem:[#allocation7 + $0x418] sm:$0xff]
    %v1645 = vld [vmem:[#allocation7 + $0x420] sm:$0xff]
    %v1646 = vld [vmem:[#allocation7 + $0x428] sm:$0xff]
    %v1647 = vld [vmem:[#allocation7 + $0x430] sm:$0xff]
    %v1648 = vld [vmem:[#allocation7 + $0x438] sm:$0xff]
    %v1649 = vld [vmem:[#allocation7 + $0x440] sm:$0xff]
    %v1650 = vld [vmem:[#allocation7 + $0x448] sm:$0xff]
    %v1651 = vld [vmem:[#allocation7 + $0x450] sm:$0xff]
    %v1652 = vld [vmem:[#allocation7 + $0x458] sm:$0xff]
    %v1653 = vld [vmem:[#allocation7 + $0x460] sm:$0xff]
    %v1654 = vld [vmem:[#allocation7 + $0x468] sm:$0xff]
    %v1655 = vld [vmem:[#allocation7 + $0x470] sm:$0xff]
    %v1656 = vld [vmem:[#allocation7 + $0x478] sm:$0xff]
    %v1657 = vld [vmem:[#allocation7 + $0x480] sm:$0xff]
    %v1658 = vld [vmem:[#allocation7 + $0x488] sm:$0xff]
    %v1659 = vld [vmem:[#allocation7 + $0x490] sm:$0xff]
    %v1660 = vld [vmem:[#allocation7 + $0x498] sm:$0xff]
    %v1661 = vld [vmem:[#allocation7 + $0x4a0] sm:$0xff]
    %v1662 = vld [vmem:[#allocation7 + $0x4a8] sm:$0xff]
    %v1663 = vld [vmem:[#allocation7 + $0x4b0] sm:$0xff]
    %v1664 = vld [vmem:[#allocation7 + $0x4b8] sm:$0xff]
    %v1665 = vld [vmem:[#allocation7 + $0x4c0] sm:$0xff]
    %v1666 = vld [vmem:[#allocation7 + $0x4c8] sm:$0xff]
    %v1667 = vld [vmem:[#allocation7 + $0x4d0] sm:$0xff]
    %v1668 = vld [vmem:[#allocation7 + $0x4d8] sm:$0xff]
    %v1669 = vld [vmem:[#allocation7 + $0x4e0] sm:$0xff]
    %v1670 = vld [vmem:[#allocation7 + $0x4e8] sm:$0xff]
    %v1671 = vld [vmem:[#allocation7 + $0x4f0] sm:$0xff]
    %v1672 = vld [vmem:[#allocation7 + $0x4f8] sm:$0xff]
    %vm1703 = vcmask 1045504
    %v1704 = vrot.slane %v1483, 2
    %v1705 = vrot.slane %v1493, 2
    %v1706 = vsel %vm1703, %v1704, %v1705
    %v1707 = vrot.slane %v1484, 2
    %v1708 = vrot.slane %v1494, 2
    %v1709 = vsel %vm1703, %v1707, %v1708
    %v1710 = vrot.slane %v1485, 2
    %v1711 = vrot.slane %v1495, 2
    %v1712 = vsel %vm1703, %v1710, %v1711
    %v1713 = vrot.slane %v1486, 2
    %v1714 = vrot.slane %v1496, 2
    %v1715 = vsel %vm1703, %v1713, %v1714
    %v1716 = vrot.slane %v1487, 2
    %v1717 = vrot.slane %v1497, 2
    %v1718 = vsel %vm1703, %v1716, %v1717
    %v1719 = vrot.slane %v1488, 2
    %v1720 = vrot.slane %v1498, 2
    %v1721 = vsel %vm1703, %v1719, %v1720
    %v1722 = vrot.slane %v1489, 2
    %v1723 = vrot.slane %v1499, 2
    %v1724 = vsel %vm1703, %v1722, %v1723
    %v1725 = vrot.slane %v1490, 2
    %v1726 = vrot.slane %v1500, 2
    %v1727 = vsel %vm1703, %v1725, %v1726
    %v1728 = vrot.slane %v1491, 2
    %v1729 = vrot.slane %v1501, 2
    %v1730 = vsel %vm1703, %v1728, %v1729
    %v1731 = vrot.slane %v1492, 2
    %v1732 = vrot.slane %v1502, 2
    %v1733 = vsel %vm1703, %v1731, %v1732
    %v1734 = vrot.slane %v1503, 2
    %v1735 = vsel %vm1703, %v1705, %v1734
    %v1736 = vrot.slane %v1504, 2
    %v1737 = vsel %vm1703, %v1708, %v1736
    %v1738 = vrot.slane %v1505, 2
    %v1739 = vsel %vm1703, %v1711, %v1738
    %v1740 = vrot.slane %v1506, 2
    %v1741 = vsel %vm1703, %v1714, %v1740
    %v1742 = vrot.slane %v1507, 2
    %v1743 = vsel %vm1703, %v1717, %v1742
    %v1744 = vrot.slane %v1508, 2
    %v1745 = vsel %vm1703, %v1720, %v1744
    %v1746 = vrot.slane %v1509, 2
    %v1747 = vsel %vm1703, %v1723, %v1746
    %v1748 = vrot.slane %v1510, 2
    %v1749 = vsel %vm1703, %v1726, %v1748
    %v1750 = vrot.slane %v1511, 2
    %v1751 = vsel %vm1703, %v1729, %v1750
    %v1752 = vrot.slane %v1512, 2
    %v1753 = vsel %vm1703, %v1732, %v1752
    %1774 = vmatpush.msra.mxu0 %v1528
    %1775 = vmatpush.msra.mxu0 %v1527
    %1776 = vmatpush.msra.mxu0 %v1526
    %1777 = vmatpush.msra.mxu0 %v1525
    %1778 = vmatpush.msra.mxu0 %v1524
    %1779 = vmatpush.msra.mxu0 %v1523
    %1780 = vmatpush.msra.mxu0 %v1522
    %1781 = vmatpush.msra.mxu0 %v1521
    %1782 = vmatpush.msra.mxu0 %v1520
    %1783 = vmatpush.msra.mxu0 %v1519
    %1784 = vmatpush.msra.mxu0 %v1518
    %1785 = vmatpush.msra.mxu0 %v1517
    %1786 = vmatpush.msra.mxu0 %v1516
    %1787 = vmatpush.msra.mxu0 %v1515
    %1788 = vmatpush.msra.mxu0 %v1514
    %1789 = vmatpush.msra.mxu0 %v1513
    %1790 = vmatmul.f32.gmra.mxu0 %v1706
    %v1791 = vpop.f32.mrf.mxu0
    %v1792 = vadd.f32 0.0, %v1791
    %1793 = vmatmul.f32.gmra.mxu0 %v1735
    %v1794 = vpop.f32.mrf.mxu0
    %v1795 = vadd.f32 0.0, %v1794
    %1796 = vdwg.mxu0
    %1797 = vmatpush.msra.mxu0 %v1544
    %1798 = vmatpush.msra.mxu0 %v1543
    %1799 = vmatpush.msra.mxu0 %v1542
    %1800 = vmatpush.msra.mxu0 %v1541
    %1801 = vmatpush.msra.mxu0 %v1540
    %1802 = vmatpush.msra.mxu0 %v1539
    %1803 = vmatpush.msra.mxu0 %v1538
    %1804 = vmatpush.msra.mxu0 %v1537
    %1805 = vmatpush.msra.mxu0 %v1536
    %1806 = vmatpush.msra.mxu0 %v1535
    %1807 = vmatpush.msra.mxu0 %v1534
    %1808 = vmatpush.msra.mxu0 %v1533
    %1809 = vmatpush.msra.mxu0 %v1532
    %1810 = vmatpush.msra.mxu0 %v1531
    %1811 = vmatpush.msra.mxu0 %v1530
    %1812 = vmatpush.msra.mxu0 %v1529
    %1813 = vmatmul.f32.gmra.mxu0 %v1709
    %v1814 = vpop.f32.mrf.mxu0
    %v1815 = vadd.f32 %v1792, %v1814
    %1816 = vmatmul.f32.gmra.mxu0 %v1737
    %v1817 = vpop.f32.mrf.mxu0
    %v1818 = vadd.f32 %v1795, %v1817
    %1819 = vdwg.mxu0
    %1820 = vmatpush.msra.mxu0 %v1560
    %1821 = vmatpush.msra.mxu0 %v1559
    %1822 = vmatpush.msra.mxu0 %v1558
    %1823 = vmatpush.msra.mxu0 %v1557
    %1824 = vmatpush.msra.mxu0 %v1556
    %1825 = vmatpush.msra.mxu0 %v1555
    %1826 = vmatpush.msra.mxu0 %v1554
    %1827 = vmatpush.msra.mxu0 %v1553
    %1828 = vmatpush.msra.mxu0 %v1552
    %1829 = vmatpush.msra.mxu0 %v1551
    %1830 = vmatpush.msra.mxu0 %v1550
    %1831 = vmatpush.msra.mxu0 %v1549
    %1832 = vmatpush.msra.mxu0 %v1548
    %1833 = vmatpush.msra.mxu0 %v1547
    %1834 = vmatpush.msra.mxu0 %v1546
    %1835 = vmatpush.msra.mxu0 %v1545
    %1836 = vmatmul.f32.gmra.mxu0 %v1712
    %v1837 = vpop.f32.mrf.mxu0
    %v1838 = vadd.f32 %v1815, %v1837
    %1839 = vmatmul.f32.gmra.mxu0 %v1739
    %v1840 = vpop.f32.mrf.mxu0
    %v1841 = vadd.f32 %v1818, %v1840
    %1842 = vdwg.mxu0
    %1843 = vmatpush.msra.mxu0 %v1576
    %1844 = vmatpush.msra.mxu0 %v1575
    %1845 = vmatpush.msra.mxu0 %v1574
    %1846 = vmatpush.msra.mxu0 %v1573
    %1847 = vmatpush.msra.mxu0 %v1572
    %1848 = vmatpush.msra.mxu0 %v1571
    %1849 = vmatpush.msra.mxu0 %v1570
    %1850 = vmatpush.msra.mxu0 %v1569
    %1851 = vmatpush.msra.mxu0 %v1568
    %1852 = vmatpush.msra.mxu0 %v1567
    %1853 = vmatpush.msra.mxu0 %v1566
    %1854 = vmatpush.msra.mxu0 %v1565
    %1855 = vmatpush.msra.mxu0 %v1564
    %1856 = vmatpush.msra.mxu0 %v1563
    %1857 = vmatpush.msra.mxu0 %v1562
    %1858 = vmatpush.msra.mxu0 %v1561
    %1859 = vmatmul.f32.gmra.mxu0 %v1715
    %v1860 = vpop.f32.mrf.mxu0
    %v1861 = vadd.f32 %v1838, %v1860
    %1862 = vmatmul.f32.gmra.mxu0 %v1741
    %v1863 = vpop.f32.mrf.mxu0
    %v1864 = vadd.f32 %v1841, %v1863
    %1865 = vdwg.mxu0
    %1866 = vmatpush.msra.mxu0 %v1592
    %1867 = vmatpush.msra.mxu0 %v1591
    %1868 = vmatpush.msra.mxu0 %v1590
    %1869 = vmatpush.msra.mxu0 %v1589
    %1870 = vmatpush.msra.mxu0 %v1588
    %1871 = vmatpush.msra.mxu0 %v1587
    %1872 = vmatpush.msra.mxu0 %v1586
    %1873 = vmatpush.msra.mxu0 %v1585
    %1874 = vmatpush.msra.mxu0 %v1584
    %1875 = vmatpush.msra.mxu0 %v1583
    %1876 = vmatpush.msra.mxu0 %v1582
    %1877 = vmatpush.msra.mxu0 %v1581
    %1878 = vmatpush.msra.mxu0 %v1580
    %1879 = vmatpush.msra.mxu0 %v1579
    %1880 = vmatpush.msra.mxu0 %v1578
    %1881 = vmatpush.msra.mxu0 %v1577
    %1882 = vmatmul.f32.gmra.mxu0 %v1718
    %v1883 = vpop.f32.mrf.mxu0
    %v1884 = vadd.f32 %v1861, %v1883
    %1885 = vmatmul.f32.gmra.mxu0 %v1743
    %v1886 = vpop.f32.mrf.mxu0
    %v1887 = vadd.f32 %v1864, %v1886
    %1888 = vdwg.mxu0
    %1889 = vmatpush.msra.mxu0 %v1608
    %1890 = vmatpush.msra.mxu0 %v1607
    %1891 = vmatpush.msra.mxu0 %v1606
    %1892 = vmatpush.msra.mxu0 %v1605
    %1893 = vmatpush.msra.mxu0 %v1604
    %1894 = vmatpush.msra.mxu0 %v1603
    %1895 = vmatpush.msra.mxu0 %v1602
    %1896 = vmatpush.msra.mxu0 %v1601
    %1897 = vmatpush.msra.mxu0 %v1600
    %1898 = vmatpush.msra.mxu0 %v1599
    %1899 = vmatpush.msra.mxu0 %v1598
    %1900 = vmatpush.msra.mxu0 %v1597
    %1901 = vmatpush.msra.mxu0 %v1596
    %1902 = vmatpush.msra.mxu0 %v1595
    %1903 = vmatpush.msra.mxu0 %v1594
    %1904 = vmatpush.msra.mxu0 %v1593
    %1905 = vmatmul.f32.gmra.mxu0 %v1721
    %v1906 = vpop.f32.mrf.mxu0
    %v1907 = vadd.f32 %v1884, %v1906
    %1908 = vmatmul.f32.gmra.mxu0 %v1745
    %v1909 = vpop.f32.mrf.mxu0
    %v1910 = vadd.f32 %v1887, %v1909
    %1911 = vdwg.mxu0
    %1912 = vmatpush.msra.mxu0 %v1624
    %1913 = vmatpush.msra.mxu0 %v1623
    %1914 = vmatpush.msra.mxu0 %v1622
    %1915 = vmatpush.msra.mxu0 %v1621
    %1916 = vmatpush.msra.mxu0 %v1620
    %1917 = vmatpush.msra.mxu0 %v1619
    %1918 = vmatpush.msra.mxu0 %v1618
    %1919 = vmatpush.msra.mxu0 %v1617
    %1920 = vmatpush.msra.mxu0 %v1616
    %1921 = vmatpush.msra.mxu0 %v1615
    %1922 = vmatpush.msra.mxu0 %v1614
    %1923 = vmatpush.msra.mxu0 %v1613
    %1924 = vmatpush.msra.mxu0 %v1612
    %1925 = vmatpush.msra.mxu0 %v1611
    %1926 = vmatpush.msra.mxu0 %v1610
    %1927 = vmatpush.msra.mxu0 %v1609
    %1928 = vmatmul.f32.gmra.mxu0 %v1724
    %v1929 = vpop.f32.mrf.mxu0
    %v1930 = vadd.f32 %v1907, %v1929
    %1931 = vmatmul.f32.gmra.mxu0 %v1747
    %v1932 = vpop.f32.mrf.mxu0
    %v1933 = vadd.f32 %v1910, %v1932
    %1934 = vdwg.mxu0
    %1935 = vmatpush.msra.mxu0 %v1640
    %1936 = vmatpush.msra.mxu0 %v1639
    %1937 = vmatpush.msra.mxu0 %v1638
    %1938 = vmatpush.msra.mxu0 %v1637
    %1939 = vmatpush.msra.mxu0 %v1636
    %1940 = vmatpush.msra.mxu0 %v1635
    %1941 = vmatpush.msra.mxu0 %v1634
    %1942 = vmatpush.msra.mxu0 %v1633
    %1943 = vmatpush.msra.mxu0 %v1632
    %1944 = vmatpush.msra.mxu0 %v1631
    %1945 = vmatpush.msra.mxu0 %v1630
    %1946 = vmatpush.msra.mxu0 %v1629
    %1947 = vmatpush.msra.mxu0 %v1628
    %1948 = vmatpush.msra.mxu0 %v1627
    %1949 = vmatpush.msra.mxu0 %v1626
    %1950 = vmatpush.msra.mxu0 %v1625
    %1951 = vmatmul.f32.gmra.mxu0 %v1727
    %v1952 = vpop.f32.mrf.mxu0
    %v1953 = vadd.f32 %v1930, %v1952
    %1954 = vmatmul.f32.gmra.mxu0 %v1749
    %v1955 = vpop.f32.mrf.mxu0
    %v1956 = vadd.f32 %v1933, %v1955
    %1957 = vdwg.mxu0
    %1958 = vmatpush.msra.mxu0 %v1656
    %1959 = vmatpush.msra.mxu0 %v1655
    %1960 = vmatpush.msra.mxu0 %v1654
    %1961 = vmatpush.msra.mxu0 %v1653
    %1962 = vmatpush.msra.mxu0 %v1652
    %1963 = vmatpush.msra.mxu0 %v1651
    %1964 = vmatpush.msra.mxu0 %v1650
    %1965 = vmatpush.msra.mxu0 %v1649
    %1966 = vmatpush.msra.mxu0 %v1648
    %1967 = vmatpush.msra.mxu0 %v1647
    %1968 = vmatpush.msra.mxu0 %v1646
    %1969 = vmatpush.msra.mxu0 %v1645
    %1970 = vmatpush.msra.mxu0 %v1644
    %1971 = vmatpush.msra.mxu0 %v1643
    %1972 = vmatpush.msra.mxu0 %v1642
    %1973 = vmatpush.msra.mxu0 %v1641
    %1974 = vmatmul.f32.gmra.mxu0 %v1730
    %v1975 = vpop.f32.mrf.mxu0
    %v1976 = vadd.f32 %v1953, %v1975
    %1977 = vmatmul.f32.gmra.mxu0 %v1751
    %v1978 = vpop.f32.mrf.mxu0
    %v1979 = vadd.f32 %v1956, %v1978
    %1980 = vdwg.mxu0
    %1981 = vmatpush.msra.mxu0 %v1672
    %1982 = vmatpush.msra.mxu0 %v1671
    %1983 = vmatpush.msra.mxu0 %v1670
    %1984 = vmatpush.msra.mxu0 %v1669
    %1985 = vmatpush.msra.mxu0 %v1668
    %1986 = vmatpush.msra.mxu0 %v1667
    %1987 = vmatpush.msra.mxu0 %v1666
    %1988 = vmatpush.msra.mxu0 %v1665
    %1989 = vmatpush.msra.mxu0 %v1664
    %1990 = vmatpush.msra.mxu0 %v1663
    %1991 = vmatpush.msra.mxu0 %v1662
    %1992 = vmatpush.msra.mxu0 %v1661
    %1993 = vmatpush.msra.mxu0 %v1660
    %1994 = vmatpush.msra.mxu0 %v1659
    %1995 = vmatpush.msra.mxu0 %v1658
    %1996 = vmatpush.msra.mxu0 %v1657
    %1997 = vmatmul.f32.gmra.mxu0 %v1733
    %v1998 = vpop.f32.mrf.mxu0
    %v1999 = vadd.f32 %v1976, %v1998
    %2000 = vmatmul.f32.gmra.mxu0 %v1753
    %v2001 = vpop.f32.mrf.mxu0
    %v2002 = vadd.f32 %v1979, %v2001
    %2003 = vdwg.mxu0
    %v2004 = vld [vmem:[#allocation3] sm:$0xff]
    %v2005 = vld [vmem:[#allocation3 + $0x8] sm:$0xff]
    %v2006 = vld [vmem:[#allocation3 + $0x10] sm:$0xff]
    %v2007 = vld [vmem:[#allocation3 + $0x18] sm:$0xff]
    %v2008 = vld [vmem:[#allocation3 + $0x20] sm:$0xff]
    %v2009 = vld [vmem:[#allocation3 + $0x28] sm:$0xff]
    %v2010 = vld [vmem:[#allocation3] sm:$0xfe]
    %v2011 = vld [vmem:[#allocation3 + $0x8] sm:$0xfe]
    %v2012 = vld [vmem:[#allocation3 + $0x10] sm:$0xfe]
    %v2013 = vld [vmem:[#allocation3 + $0x30] sm:$0x1]
    %v2014 = vld [vmem:[#allocation3 + $0x38] sm:$0x1]
    %v2015 = vld [vmem:[#allocation3 + $0x40] sm:$0x1]
    %v2016 = vld [vmem:[#allocation3] sm:$0xfc]
    %v2017 = vld [vmem:[#allocation3 + $0x8] sm:$0xfc]
    %v2018 = vld [vmem:[#allocation3 + $0x10] sm:$0xfc]
    %v2019 = vld [vmem:[#allocation3 + $0x30] sm:$0x3]
    %v2020 = vld [vmem:[#allocation3 + $0x38] sm:$0x3]
    %v2021 = vld [vmem:[#allocation3 + $0x40] sm:$0x3]
    %v2022 = vld [vmem:[#allocation3] sm:$0xf8]
    %v2023 = vld [vmem:[#allocation3 + $0x8] sm:$0xf8]
    %v2024 = vld [vmem:[#allocation3 + $0x10] sm:$0xf8]
    %v2025 = vld [vmem:[#allocation3 + $0x30] sm:$0x7]
    %v2026 = vld [vmem:[#allocation3 + $0x38] sm:$0x7]
    %v2027 = vld [vmem:[#allocation3 + $0x40] sm:$0x7]
    %v2028 = vld [vmem:[#allocation3] sm:$0xf0]
    %v2029 = vld [vmem:[#allocation3 + $0x8] sm:$0xf0]
    %v2030 = vld [vmem:[#allocation3 + $0x10] sm:$0xf0]
    %v2031 = vld [vmem:[#allocation3 + $0x30] sm:$0xf]
    %v2032 = vld [vmem:[#allocation3 + $0x38] sm:$0xf]
    %v2033 = vld [vmem:[#allocation3 + $0x40] sm:$0xf]
    %vm2043 = vcmask 1046528
    %v2044 = vrot.slane %v2010, 1
    %v2045 = vrot.slane %v2007, 1
    %v2046 = vsel %vm2043, %v2044, %v2045
    %v2047 = vrot.slane %v2011, 1
    %v2048 = vrot.slane %v2008, 1
    %v2049 = vsel %vm2043, %v2047, %v2048
    %v2050 = vrot.slane %v2012, 1
    %v2051 = vrot.slane %v2009, 1
    %v2052 = vsel %vm2043, %v2050, %v2051
    %v2053 = vrot.slane %v2013, 1
    %v2054 = vsel %vm2043, %v2045, %v2053
    %v2055 = vrot.slane %v2014, 1
    %v2056 = vsel %vm2043, %v2048, %v2055
    %v2057 = vrot.slane %v2015, 1
    %v2058 = vsel %vm2043, %v2051, %v2057
    %v2071 = vrot.slane %v2016, 2
    %v2072 = vrot.slane %v2007, 2
    %v2073 = vsel %vm1703, %v2071, %v2072
    %v2074 = vrot.slane %v2017, 2
    %v2075 = vrot.slane %v2008, 2
    %v2076 = vsel %vm1703, %v2074, %v2075
    %v2077 = vrot.slane %v2018, 2
    %v2078 = vrot.slane %v2009, 2
    %v2079 = vsel %vm1703, %v2077, %v2078
    %v2080 = vrot.slane %v2019, 2
    %v2081 = vsel %vm1703, %v2072, %v2080
    %v2082 = vrot.slane %v2020, 2
    %v2083 = vsel %vm1703, %v2075, %v2082
    %v2084 = vrot.slane %v2021, 2
    %v2085 = vsel %vm1703, %v2078, %v2084
    %vm2098 = vcmask 1044480
    %v2099 = vrot.slane %v2022, 3
    %v2100 = vrot.slane %v2007, 3
    %v2101 = vsel %vm2098, %v2099, %v2100
    %v2102 = vrot.slane %v2023, 3
    %v2103 = vrot.slane %v2008, 3
    %v2104 = vsel %vm2098, %v2102, %v2103
    %v2105 = vrot.slane %v2024, 3
    %v2106 = vrot.slane %v2009, 3
    %v2107 = vsel %vm2098, %v2105, %v2106
    %v2108 = vrot.slane %v2025, 3
    %v2109 = vsel %vm2098, %v2100, %v2108
    %v2110 = vrot.slane %v2026, 3
    %v2111 = vsel %vm2098, %v2103, %v2110
    %v2112 = vrot.slane %v2027, 3
    %v2113 = vsel %vm2098, %v2106, %v2112
    %v2126 = vrot.slane %v2028, 4
    %v2127 = vrot.slane %v2007, 4
    %v2128 = vsel %vm75, %v2126, %v2127
    %v2129 = vrot.slane %v2029, 4
    %v2130 = vrot.slane %v2008, 4
    %v2131 = vsel %vm75, %v2129, %v2130
    %v2132 = vrot.slane %v2030, 4
    %v2133 = vrot.slane %v2009, 4
    %v2134 = vsel %vm75, %v2132, %v2133
    %v2135 = vrot.slane %v2031, 4
    %v2136 = vsel %vm75, %v2127, %v2135
    %v2137 = vrot.slane %v2032, 4
    %v2138 = vsel %vm75, %v2130, %v2137
    %v2139 = vrot.slane %v2033, 4
    %v2140 = vsel %vm75, %v2133, %v2139
    %v2147 = vld [vmem:[#allocation9] sm:$0xff]
    %v2148 = vld [vmem:[#allocation9 + $0x8] sm:$0xff]
    %v2149 = vld [vmem:[#allocation9 + $0x10] sm:$0xff]
    %v2150 = vld [vmem:[#allocation9 + $0x18] sm:$0xff]
    %v2151 = vld [vmem:[#allocation9 + $0x20] sm:$0xff]
    %v2152 = vld [vmem:[#allocation9 + $0x28] sm:$0xff]
    %v2153 = vld [vmem:[#allocation9 + $0x30] sm:$0xff]
    %v2154 = vld [vmem:[#allocation9 + $0x38] sm:$0xff]
    %v2155 = vld [vmem:[#allocation9 + $0x40] sm:$0xff]
    %v2156 = vld [vmem:[#allocation9 + $0x48] sm:$0xff]
    %v2157 = vld [vmem:[#allocation9 + $0x50] sm:$0xff]
    %v2158 = vld [vmem:[#allocation9 + $0x58] sm:$0xff]
    %v2159 = vld [vmem:[#allocation9 + $0x60] sm:$0xff]
    %v2160 = vld [vmem:[#allocation9 + $0x68] sm:$0xff]
    %v2161 = vld [vmem:[#allocation9 + $0x70] sm:$0xff]
    %v2162 = vld [vmem:[#allocation9 + $0x78] sm:$0xff]
    %v2163 = vld [vmem:[#allocation9 + $0x80] sm:$0xff]
    %v2164 = vld [vmem:[#allocation9 + $0x88] sm:$0xff]
    %v2165 = vld [vmem:[#allocation9 + $0x90] sm:$0xff]
    %v2166 = vld [vmem:[#allocation9 + $0x98] sm:$0xff]
    %v2167 = vld [vmem:[#allocation9 + $0xa0] sm:$0xff]
    %v2168 = vld [vmem:[#allocation9 + $0xa8] sm:$0xff]
    %v2169 = vld [vmem:[#allocation9 + $0xb0] sm:$0xff]
    %v2170 = vld [vmem:[#allocation9 + $0xb8] sm:$0xff]
    %v2171 = vld [vmem:[#allocation9 + $0xc0] sm:$0xff]
    %v2172 = vld [vmem:[#allocation9 + $0xc8] sm:$0xff]
    %v2173 = vld [vmem:[#allocation9 + $0xd0] sm:$0xff]
    %v2174 = vld [vmem:[#allocation9 + $0xd8] sm:$0xff]
    %v2175 = vld [vmem:[#allocation9 + $0xe0] sm:$0xff]
    %v2176 = vld [vmem:[#allocation9 + $0xe8] sm:$0xff]
    %v2177 = vld [vmem:[#allocation9 + $0xf0] sm:$0xff]
    %v2178 = vld [vmem:[#allocation9 + $0xf8] sm:$0xff]
    %v2179 = vld [vmem:[#allocation9 + $0x100] sm:$0xff]
    %v2180 = vld [vmem:[#allocation9 + $0x108] sm:$0xff]
    %v2181 = vld [vmem:[#allocation9 + $0x110] sm:$0xff]
    %v2182 = vld [vmem:[#allocation9 + $0x118] sm:$0xff]
    %v2183 = vld [vmem:[#allocation9 + $0x120] sm:$0xff]
    %v2184 = vld [vmem:[#allocation9 + $0x128] sm:$0xff]
    %v2185 = vld [vmem:[#allocation9 + $0x130] sm:$0xff]
    %v2186 = vld [vmem:[#allocation9 + $0x138] sm:$0xff]
    %v2187 = vld [vmem:[#allocation9 + $0x140] sm:$0xff]
    %v2188 = vld [vmem:[#allocation9 + $0x148] sm:$0xff]
    %v2189 = vld [vmem:[#allocation9 + $0x150] sm:$0xff]
    %v2190 = vld [vmem:[#allocation9 + $0x158] sm:$0xff]
    %v2191 = vld [vmem:[#allocation9 + $0x160] sm:$0xff]
    %v2192 = vld [vmem:[#allocation9 + $0x168] sm:$0xff]
    %v2193 = vld [vmem:[#allocation9 + $0x170] sm:$0xff]
    %v2194 = vld [vmem:[#allocation9 + $0x178] sm:$0xff]
    %v2195 = vld [vmem:[#allocation9 + $0x180] sm:$0xff]
    %v2196 = vld [vmem:[#allocation9 + $0x188] sm:$0xff]
    %v2197 = vld [vmem:[#allocation9 + $0x190] sm:$0xff]
    %v2198 = vld [vmem:[#allocation9 + $0x198] sm:$0xff]
    %v2199 = vld [vmem:[#allocation9 + $0x1a0] sm:$0xff]
    %v2200 = vld [vmem:[#allocation9 + $0x1a8] sm:$0xff]
    %v2201 = vld [vmem:[#allocation9 + $0x1b0] sm:$0xff]
    %v2202 = vld [vmem:[#allocation9 + $0x1b8] sm:$0xff]
    %v2203 = vld [vmem:[#allocation9 + $0x1c0] sm:$0xff]
    %v2204 = vld [vmem:[#allocation9 + $0x1c8] sm:$0xff]
    %v2205 = vld [vmem:[#allocation9 + $0x1d0] sm:$0xff]
    %v2206 = vld [vmem:[#allocation9 + $0x1d8] sm:$0xff]
    %v2207 = vld [vmem:[#allocation9 + $0x1e0] sm:$0xff]
    %v2208 = vld [vmem:[#allocation9 + $0x1e8] sm:$0xff]
    %v2209 = vld [vmem:[#allocation9 + $0x1f0] sm:$0xff]
    %v2210 = vld [vmem:[#allocation9 + $0x1f8] sm:$0xff]
    %v2211 = vld [vmem:[#allocation9 + $0x200] sm:$0xff]
    %v2212 = vld [vmem:[#allocation9 + $0x208] sm:$0xff]
    %v2213 = vld [vmem:[#allocation9 + $0x210] sm:$0xff]
    %v2214 = vld [vmem:[#allocation9 + $0x218] sm:$0xff]
    %v2215 = vld [vmem:[#allocation9 + $0x220] sm:$0xff]
    %v2216 = vld [vmem:[#allocation9 + $0x228] sm:$0xff]
    %v2217 = vld [vmem:[#allocation9 + $0x230] sm:$0xff]
    %v2218 = vld [vmem:[#allocation9 + $0x238] sm:$0xff]
    %v2219 = vld [vmem:[#allocation9 + $0x240] sm:$0xff]
    %v2220 = vld [vmem:[#allocation9 + $0x248] sm:$0xff]
    %v2221 = vld [vmem:[#allocation9 + $0x250] sm:$0xff]
    %v2222 = vld [vmem:[#allocation9 + $0x258] sm:$0xff]
    %v2223 = vld [vmem:[#allocation9 + $0x260] sm:$0xff]
    %v2224 = vld [vmem:[#allocation9 + $0x268] sm:$0xff]
    %v2225 = vld [vmem:[#allocation9 + $0x270] sm:$0xff]
    %v2226 = vld [vmem:[#allocation9 + $0x278] sm:$0xff]
    %v2227 = vld [vmem:[#allocation9 + $0x280] sm:$0xff]
    %v2228 = vld [vmem:[#allocation9 + $0x288] sm:$0xff]
    %v2229 = vld [vmem:[#allocation9 + $0x290] sm:$0xff]
    %v2230 = vld [vmem:[#allocation9 + $0x298] sm:$0xff]
    %v2231 = vld [vmem:[#allocation9 + $0x2a0] sm:$0xff]
    %v2232 = vld [vmem:[#allocation9 + $0x2a8] sm:$0xff]
    %v2233 = vld [vmem:[#allocation9 + $0x2b0] sm:$0xff]
    %v2234 = vld [vmem:[#allocation9 + $0x2b8] sm:$0xff]
    %v2235 = vld [vmem:[#allocation9 + $0x2c0] sm:$0xff]
    %v2236 = vld [vmem:[#allocation9 + $0x2c8] sm:$0xff]
    %v2237 = vld [vmem:[#allocation9 + $0x2d0] sm:$0xff]
    %v2238 = vld [vmem:[#allocation9 + $0x2d8] sm:$0xff]
    %v2239 = vld [vmem:[#allocation9 + $0x2e0] sm:$0xff]
    %v2240 = vld [vmem:[#allocation9 + $0x2e8] sm:$0xff]
    %v2241 = vld [vmem:[#allocation9 + $0x2f0] sm:$0xff]
    %v2242 = vld [vmem:[#allocation9 + $0x2f8] sm:$0xff]
    %v2243 = vld [vmem:[#allocation9 + $0x300] sm:$0xff]
    %v2244 = vld [vmem:[#allocation9 + $0x308] sm:$0xff]
    %v2245 = vld [vmem:[#allocation9 + $0x310] sm:$0xff]
    %v2246 = vld [vmem:[#allocation9 + $0x318] sm:$0xff]
    %v2247 = vld [vmem:[#allocation9 + $0x320] sm:$0xff]
    %v2248 = vld [vmem:[#allocation9 + $0x328] sm:$0xff]
    %v2249 = vld [vmem:[#allocation9 + $0x330] sm:$0xff]
    %v2250 = vld [vmem:[#allocation9 + $0x338] sm:$0xff]
    %v2251 = vld [vmem:[#allocation9 + $0x340] sm:$0xff]
    %v2252 = vld [vmem:[#allocation9 + $0x348] sm:$0xff]
    %v2253 = vld [vmem:[#allocation9 + $0x350] sm:$0xff]
    %v2254 = vld [vmem:[#allocation9 + $0x358] sm:$0xff]
    %v2255 = vld [vmem:[#allocation9 + $0x360] sm:$0xff]
    %v2256 = vld [vmem:[#allocation9 + $0x368] sm:$0xff]
    %v2257 = vld [vmem:[#allocation9 + $0x370] sm:$0xff]
    %v2258 = vld [vmem:[#allocation9 + $0x378] sm:$0xff]
    %v2259 = vld [vmem:[#allocation9 + $0x380] sm:$0xff]
    %v2260 = vld [vmem:[#allocation9 + $0x388] sm:$0xff]
    %v2261 = vld [vmem:[#allocation9 + $0x390] sm:$0xff]
    %v2262 = vld [vmem:[#allocation9 + $0x398] sm:$0xff]
    %v2263 = vld [vmem:[#allocation9 + $0x3a0] sm:$0xff]
    %v2264 = vld [vmem:[#allocation9 + $0x3a8] sm:$0xff]
    %v2265 = vld [vmem:[#allocation9 + $0x3b0] sm:$0xff]
    %v2266 = vld [vmem:[#allocation9 + $0x3b8] sm:$0xff]
    %v2267 = vld [vmem:[#allocation9 + $0x3c0] sm:$0xff]
    %v2268 = vld [vmem:[#allocation9 + $0x3c8] sm:$0xff]
    %v2269 = vld [vmem:[#allocation9 + $0x3d0] sm:$0xff]
    %v2270 = vld [vmem:[#allocation9 + $0x3d8] sm:$0xff]
    %v2271 = vld [vmem:[#allocation9 + $0x3e0] sm:$0xff]
    %v2272 = vld [vmem:[#allocation9 + $0x3e8] sm:$0xff]
    %v2273 = vld [vmem:[#allocation9 + $0x3f0] sm:$0xff]
    %v2274 = vld [vmem:[#allocation9 + $0x3f8] sm:$0xff]
    %v2275 = vld [vmem:[#allocation9 + $0x400] sm:$0xff]
    %v2276 = vld [vmem:[#allocation9 + $0x408] sm:$0xff]
    %v2277 = vld [vmem:[#allocation9 + $0x410] sm:$0xff]
    %v2278 = vld [vmem:[#allocation9 + $0x418] sm:$0xff]
    %v2279 = vld [vmem:[#allocation9 + $0x420] sm:$0xff]
    %v2280 = vld [vmem:[#allocation9 + $0x428] sm:$0xff]
    %v2281 = vld [vmem:[#allocation9 + $0x430] sm:$0xff]
    %v2282 = vld [vmem:[#allocation9 + $0x438] sm:$0xff]
    %v2283 = vld [vmem:[#allocation9 + $0x440] sm:$0xff]
    %v2284 = vld [vmem:[#allocation9 + $0x448] sm:$0xff]
    %v2285 = vld [vmem:[#allocation9 + $0x450] sm:$0xff]
    %v2286 = vld [vmem:[#allocation9 + $0x458] sm:$0xff]
    %v2287 = vld [vmem:[#allocation9 + $0x460] sm:$0xff]
    %v2288 = vld [vmem:[#allocation9 + $0x468] sm:$0xff]
    %v2289 = vld [vmem:[#allocation9 + $0x470] sm:$0xff]
    %v2290 = vld [vmem:[#allocation9 + $0x478] sm:$0xff]
    %v2291 = vld [vmem:[#allocation9 + $0x480] sm:$0xff]
    %v2292 = vld [vmem:[#allocation9 + $0x488] sm:$0xff]
    %v2293 = vld [vmem:[#allocation9 + $0x490] sm:$0xff]
    %v2294 = vld [vmem:[#allocation9 + $0x498] sm:$0xff]
    %v2295 = vld [vmem:[#allocation9 + $0x4a0] sm:$0xff]
    %v2296 = vld [vmem:[#allocation9 + $0x4a8] sm:$0xff]
    %v2297 = vld [vmem:[#allocation9 + $0x4b0] sm:$0xff]
    %v2298 = vld [vmem:[#allocation9 + $0x4b8] sm:$0xff]
    %v2299 = vld [vmem:[#allocation9 + $0x4c0] sm:$0xff]
    %v2300 = vld [vmem:[#allocation9 + $0x4c8] sm:$0xff]
    %v2301 = vld [vmem:[#allocation9 + $0x4d0] sm:$0xff]
    %v2302 = vld [vmem:[#allocation9 + $0x4d8] sm:$0xff]
    %v2303 = vld [vmem:[#allocation9 + $0x4e0] sm:$0xff]
    %v2304 = vld [vmem:[#allocation9 + $0x4e8] sm:$0xff]
    %v2305 = vld [vmem:[#allocation9 + $0x4f0] sm:$0xff]
    %v2306 = vld [vmem:[#allocation9 + $0x4f8] sm:$0xff]
    %v2307 = vld [vmem:[#allocation9 + $0x500] sm:$0xff]
    %v2308 = vld [vmem:[#allocation9 + $0x508] sm:$0xff]
    %v2309 = vld [vmem:[#allocation9 + $0x510] sm:$0xff]
    %v2310 = vld [vmem:[#allocation9 + $0x518] sm:$0xff]
    %v2311 = vld [vmem:[#allocation9 + $0x520] sm:$0xff]
    %v2312 = vld [vmem:[#allocation9 + $0x528] sm:$0xff]
    %v2313 = vld [vmem:[#allocation9 + $0x530] sm:$0xff]
    %v2314 = vld [vmem:[#allocation9 + $0x538] sm:$0xff]
    %v2315 = vld [vmem:[#allocation9 + $0x540] sm:$0xff]
    %v2316 = vld [vmem:[#allocation9 + $0x548] sm:$0xff]
    %v2317 = vld [vmem:[#allocation9 + $0x550] sm:$0xff]
    %v2318 = vld [vmem:[#allocation9 + $0x558] sm:$0xff]
    %v2319 = vld [vmem:[#allocation9 + $0x560] sm:$0xff]
    %v2320 = vld [vmem:[#allocation9 + $0x568] sm:$0xff]
    %v2321 = vld [vmem:[#allocation9 + $0x570] sm:$0xff]
    %v2322 = vld [vmem:[#allocation9 + $0x578] sm:$0xff]
    %v2323 = vld [vmem:[#allocation9 + $0x580] sm:$0xff]
    %v2324 = vld [vmem:[#allocation9 + $0x588] sm:$0xff]
    %v2325 = vld [vmem:[#allocation9 + $0x590] sm:$0xff]
    %v2326 = vld [vmem:[#allocation9 + $0x598] sm:$0xff]
    %v2327 = vld [vmem:[#allocation9 + $0x5a0] sm:$0xff]
    %v2328 = vld [vmem:[#allocation9 + $0x5a8] sm:$0xff]
    %v2329 = vld [vmem:[#allocation9 + $0x5b0] sm:$0xff]
    %v2330 = vld [vmem:[#allocation9 + $0x5b8] sm:$0xff]
    %v2331 = vld [vmem:[#allocation9 + $0x5c0] sm:$0xff]
    %v2332 = vld [vmem:[#allocation9 + $0x5c8] sm:$0xff]
    %v2333 = vld [vmem:[#allocation9 + $0x5d0] sm:$0xff]
    %v2334 = vld [vmem:[#allocation9 + $0x5d8] sm:$0xff]
    %v2335 = vld [vmem:[#allocation9 + $0x5e0] sm:$0xff]
    %v2336 = vld [vmem:[#allocation9 + $0x5e8] sm:$0xff]
    %v2337 = vld [vmem:[#allocation9 + $0x5f0] sm:$0xff]
    %v2338 = vld [vmem:[#allocation9 + $0x5f8] sm:$0xff]
    %v2339 = vld [vmem:[#allocation9 + $0x600] sm:$0xff]
    %v2340 = vld [vmem:[#allocation9 + $0x608] sm:$0xff]
    %v2341 = vld [vmem:[#allocation9 + $0x610] sm:$0xff]
    %v2342 = vld [vmem:[#allocation9 + $0x618] sm:$0xff]
    %v2343 = vld [vmem:[#allocation9 + $0x620] sm:$0xff]
    %v2344 = vld [vmem:[#allocation9 + $0x628] sm:$0xff]
    %v2345 = vld [vmem:[#allocation9 + $0x630] sm:$0xff]
    %v2346 = vld [vmem:[#allocation9 + $0x638] sm:$0xff]
    %v2347 = vld [vmem:[#allocation9 + $0x640] sm:$0xff]
    %v2348 = vld [vmem:[#allocation9 + $0x648] sm:$0xff]
    %v2349 = vld [vmem:[#allocation9 + $0x650] sm:$0xff]
    %v2350 = vld [vmem:[#allocation9 + $0x658] sm:$0xff]
    %v2351 = vld [vmem:[#allocation9 + $0x660] sm:$0xff]
    %v2352 = vld [vmem:[#allocation9 + $0x668] sm:$0xff]
    %v2353 = vld [vmem:[#allocation9 + $0x670] sm:$0xff]
    %v2354 = vld [vmem:[#allocation9 + $0x678] sm:$0xff]
    %v2355 = vld [vmem:[#allocation9 + $0x680] sm:$0xff]
    %v2356 = vld [vmem:[#allocation9 + $0x688] sm:$0xff]
    %v2357 = vld [vmem:[#allocation9 + $0x690] sm:$0xff]
    %v2358 = vld [vmem:[#allocation9 + $0x698] sm:$0xff]
    %v2359 = vld [vmem:[#allocation9 + $0x6a0] sm:$0xff]
    %v2360 = vld [vmem:[#allocation9 + $0x6a8] sm:$0xff]
    %v2361 = vld [vmem:[#allocation9 + $0x6b0] sm:$0xff]
    %v2362 = vld [vmem:[#allocation9 + $0x6b8] sm:$0xff]
    %v2363 = vld [vmem:[#allocation9 + $0x6c0] sm:$0xff]
    %v2364 = vld [vmem:[#allocation9 + $0x6c8] sm:$0xff]
    %v2365 = vld [vmem:[#allocation9 + $0x6d0] sm:$0xff]
    %v2366 = vld [vmem:[#allocation9 + $0x6d8] sm:$0xff]
    %v2367 = vld [vmem:[#allocation9 + $0x6e0] sm:$0xff]
    %v2368 = vld [vmem:[#allocation9 + $0x6e8] sm:$0xff]
    %v2369 = vld [vmem:[#allocation9 + $0x6f0] sm:$0xff]
    %v2370 = vld [vmem:[#allocation9 + $0x6f8] sm:$0xff]
    %v2371 = vld [vmem:[#allocation9 + $0x700] sm:$0xff]
    %v2372 = vld [vmem:[#allocation9 + $0x708] sm:$0xff]
    %v2373 = vld [vmem:[#allocation9 + $0x710] sm:$0xff]
    %v2374 = vld [vmem:[#allocation9 + $0x718] sm:$0xff]
    %v2375 = vld [vmem:[#allocation9 + $0x720] sm:$0xff]
    %v2376 = vld [vmem:[#allocation9 + $0x728] sm:$0xff]
    %v2377 = vld [vmem:[#allocation9 + $0x730] sm:$0xff]
    %v2378 = vld [vmem:[#allocation9 + $0x738] sm:$0xff]
    %v2379 = vld [vmem:[#allocation9 + $0x740] sm:$0xff]
    %v2380 = vld [vmem:[#allocation9 + $0x748] sm:$0xff]
    %v2381 = vld [vmem:[#allocation9 + $0x750] sm:$0xff]
    %v2382 = vld [vmem:[#allocation9 + $0x758] sm:$0xff]
    %v2383 = vld [vmem:[#allocation9 + $0x760] sm:$0xff]
    %v2384 = vld [vmem:[#allocation9 + $0x768] sm:$0xff]
    %v2385 = vld [vmem:[#allocation9 + $0x770] sm:$0xff]
    %v2386 = vld [vmem:[#allocation9 + $0x778] sm:$0xff]
    %2387 = vmatpush.msra.mxu0 %v2162
    %2388 = vmatpush.msra.mxu0 %v2161
    %2389 = vmatpush.msra.mxu0 %v2160
    %2390 = vmatpush.msra.mxu0 %v2159
    %2391 = vmatpush.msra.mxu0 %v2158
    %2392 = vmatpush.msra.mxu0 %v2157
    %2393 = vmatpush.msra.mxu0 %v2156
    %2394 = vmatpush.msra.mxu0 %v2155
    %2395 = vmatpush.msra.mxu0 %v2154
    %2396 = vmatpush.msra.mxu0 %v2153
    %2397 = vmatpush.msra.mxu0 %v2152
    %2398 = vmatpush.msra.mxu0 %v2151
    %2399 = vmatpush.msra.mxu0 %v2150
    %2400 = vmatpush.msra.mxu0 %v2149
    %2401 = vmatpush.msra.mxu0 %v2148
    %2402 = vmatpush.msra.mxu0 %v2147
    %2403 = vmatmul.f32.gmra.mxu0 %v2004
    %v2404 = vpop.f32.mrf.mxu0
    %v2405 = vadd.f32 0.0, %v2404
    %2406 = vmatmul.f32.gmra.mxu0 %v2007
    %v2407 = vpop.f32.mrf.mxu0
    %v2408 = vadd.f32 0.0, %v2407
    %2409 = vdwg.mxu0
    %2410 = vmatpush.msra.mxu0 %v2178
    %2411 = vmatpush.msra.mxu0 %v2177
    %2412 = vmatpush.msra.mxu0 %v2176
    %2413 = vmatpush.msra.mxu0 %v2175
    %2414 = vmatpush.msra.mxu0 %v2174
    %2415 = vmatpush.msra.mxu0 %v2173
    %2416 = vmatpush.msra.mxu0 %v2172
    %2417 = vmatpush.msra.mxu0 %v2171
    %2418 = vmatpush.msra.mxu0 %v2170
    %2419 = vmatpush.msra.mxu0 %v2169
    %2420 = vmatpush.msra.mxu0 %v2168
    %2421 = vmatpush.msra.mxu0 %v2167
    %2422 = vmatpush.msra.mxu0 %v2166
    %2423 = vmatpush.msra.mxu0 %v2165
    %2424 = vmatpush.msra.mxu0 %v2164
    %2425 = vmatpush.msra.mxu0 %v2163
    %2426 = vmatmul.f32.gmra.mxu0 %v2005
    %v2427 = vpop.f32.mrf.mxu0
    %v2428 = vadd.f32 %v2405, %v2427
    %2429 = vmatmul.f32.gmra.mxu0 %v2008
    %v2430 = vpop.f32.mrf.mxu0
    %v2431 = vadd.f32 %v2408, %v2430
    %2432 = vdwg.mxu0
    %2433 = vmatpush.msra.mxu0 %v2194
    %2434 = vmatpush.msra.mxu0 %v2193
    %2435 = vmatpush.msra.mxu0 %v2192
    %2436 = vmatpush.msra.mxu0 %v2191
    %2437 = vmatpush.msra.mxu0 %v2190
    %2438 = vmatpush.msra.mxu0 %v2189
    %2439 = vmatpush.msra.mxu0 %v2188
    %2440 = vmatpush.msra.mxu0 %v2187
    %2441 = vmatpush.msra.mxu0 %v2186
    %2442 = vmatpush.msra.mxu0 %v2185
    %2443 = vmatpush.msra.mxu0 %v2184
    %2444 = vmatpush.msra.mxu0 %v2183
    %2445 = vmatpush.msra.mxu0 %v2182
    %2446 = vmatpush.msra.mxu0 %v2181
    %2447 = vmatpush.msra.mxu0 %v2180
    %2448 = vmatpush.msra.mxu0 %v2179
    %2449 = vmatmul.f32.gmra.mxu0 %v2006
    %v2450 = vpop.f32.mrf.mxu0
    %v2451 = vadd.f32 %v2428, %v2450
    %2452 = vmatmul.f32.gmra.mxu0 %v2009
    %v2453 = vpop.f32.mrf.mxu0
    %v2454 = vadd.f32 %v2431, %v2453
    %2455 = vdwg.mxu0
    %2456 = vmatpush.msra.mxu0 %v2210
    %2457 = vmatpush.msra.mxu0 %v2209
    %2458 = vmatpush.msra.mxu0 %v2208
    %2459 = vmatpush.msra.mxu0 %v2207
    %2460 = vmatpush.msra.mxu0 %v2206
    %2461 = vmatpush.msra.mxu0 %v2205
    %2462 = vmatpush.msra.mxu0 %v2204
    %2463 = vmatpush.msra.mxu0 %v2203
    %2464 = vmatpush.msra.mxu0 %v2202
    %2465 = vmatpush.msra.mxu0 %v2201
    %2466 = vmatpush.msra.mxu0 %v2200
    %2467 = vmatpush.msra.mxu0 %v2199
    %2468 = vmatpush.msra.mxu0 %v2198
    %2469 = vmatpush.msra.mxu0 %v2197
    %2470 = vmatpush.msra.mxu0 %v2196
    %2471 = vmatpush.msra.mxu0 %v2195
    %2472 = vmatmul.f32.gmra.mxu0 %v2046
    %v2473 = vpop.f32.mrf.mxu0
    %v2474 = vadd.f32 %v2451, %v2473
    %2475 = vmatmul.f32.gmra.mxu0 %v2054
    %v2476 = vpop.f32.mrf.mxu0
    %v2477 = vadd.f32 %v2454, %v2476
    %2478 = vdwg.mxu0
    %2479 = vmatpush.msra.mxu0 %v2226
    %2480 = vmatpush.msra.mxu0 %v2225
    %2481 = vmatpush.msra.mxu0 %v2224
    %2482 = vmatpush.msra.mxu0 %v2223
    %2483 = vmatpush.msra.mxu0 %v2222
    %2484 = vmatpush.msra.mxu0 %v2221
    %2485 = vmatpush.msra.mxu0 %v2220
    %2486 = vmatpush.msra.mxu0 %v2219
    %2487 = vmatpush.msra.mxu0 %v2218
    %2488 = vmatpush.msra.mxu0 %v2217
    %2489 = vmatpush.msra.mxu0 %v2216
    %2490 = vmatpush.msra.mxu0 %v2215
    %2491 = vmatpush.msra.mxu0 %v2214
    %2492 = vmatpush.msra.mxu0 %v2213
    %2493 = vmatpush.msra.mxu0 %v2212
    %2494 = vmatpush.msra.mxu0 %v2211
    %2495 = vmatmul.f32.gmra.mxu0 %v2049
    %v2496 = vpop.f32.mrf.mxu0
    %v2497 = vadd.f32 %v2474, %v2496
    %2498 = vmatmul.f32.gmra.mxu0 %v2056
    %v2499 = vpop.f32.mrf.mxu0
    %v2500 = vadd.f32 %v2477, %v2499
    %2501 = vdwg.mxu0
    %2502 = vmatpush.msra.mxu0 %v2242
    %2503 = vmatpush.msra.mxu0 %v2241
    %2504 = vmatpush.msra.mxu0 %v2240
    %2505 = vmatpush.msra.mxu0 %v2239
    %2506 = vmatpush.msra.mxu0 %v2238
    %2507 = vmatpush.msra.mxu0 %v2237
    %2508 = vmatpush.msra.mxu0 %v2236
    %2509 = vmatpush.msra.mxu0 %v2235
    %2510 = vmatpush.msra.mxu0 %v2234
    %2511 = vmatpush.msra.mxu0 %v2233
    %2512 = vmatpush.msra.mxu0 %v2232
    %2513 = vmatpush.msra.mxu0 %v2231
    %2514 = vmatpush.msra.mxu0 %v2230
    %2515 = vmatpush.msra.mxu0 %v2229
    %2516 = vmatpush.msra.mxu0 %v2228
    %2517 = vmatpush.msra.mxu0 %v2227
    %2518 = vmatmul.f32.gmra.mxu0 %v2052
    %v2519 = vpop.f32.mrf.mxu0
    %v2520 = vadd.f32 %v2497, %v2519
    %2521 = vmatmul.f32.gmra.mxu0 %v2058
    %v2522 = vpop.f32.mrf.mxu0
    %v2523 = vadd.f32 %v2500, %v2522
    %2524 = vdwg.mxu0
    %2525 = vmatpush.msra.mxu0 %v2258
    %2526 = vmatpush.msra.mxu0 %v2257
    %2527 = vmatpush.msra.mxu0 %v2256
    %2528 = vmatpush.msra.mxu0 %v2255
    %2529 = vmatpush.msra.mxu0 %v2254
    %2530 = vmatpush.msra.mxu0 %v2253
    %2531 = vmatpush.msra.mxu0 %v2252
    %2532 = vmatpush.msra.mxu0 %v2251
    %2533 = vmatpush.msra.mxu0 %v2250
    %2534 = vmatpush.msra.mxu0 %v2249
    %2535 = vmatpush.msra.mxu0 %v2248
    %2536 = vmatpush.msra.mxu0 %v2247
    %2537 = vmatpush.msra.mxu0 %v2246
    %2538 = vmatpush.msra.mxu0 %v2245
    %2539 = vmatpush.msra.mxu0 %v2244
    %2540 = vmatpush.msra.mxu0 %v2243
    %2541 = vmatmul.f32.gmra.mxu0 %v2073
    %v2542 = vpop.f32.mrf.mxu0
    %v2543 = vadd.f32 %v2520, %v2542
    %2544 = vmatmul.f32.gmra.mxu0 %v2081
    %v2545 = vpop.f32.mrf.mxu0
    %v2546 = vadd.f32 %v2523, %v2545
    %2547 = vdwg.mxu0
    %2548 = vmatpush.msra.mxu0 %v2274
    %2549 = vmatpush.msra.mxu0 %v2273
    %2550 = vmatpush.msra.mxu0 %v2272
    %2551 = vmatpush.msra.mxu0 %v2271
    %2552 = vmatpush.msra.mxu0 %v2270
    %2553 = vmatpush.msra.mxu0 %v2269
    %2554 = vmatpush.msra.mxu0 %v2268
    %2555 = vmatpush.msra.mxu0 %v2267
    %2556 = vmatpush.msra.mxu0 %v2266
    %2557 = vmatpush.msra.mxu0 %v2265
    %2558 = vmatpush.msra.mxu0 %v2264
    %2559 = vmatpush.msra.mxu0 %v2263
    %2560 = vmatpush.msra.mxu0 %v2262
    %2561 = vmatpush.msra.mxu0 %v2261
    %2562 = vmatpush.msra.mxu0 %v2260
    %2563 = vmatpush.msra.mxu0 %v2259
    %2564 = vmatmul.f32.gmra.mxu0 %v2076
    %v2565 = vpop.f32.mrf.mxu0
    %v2566 = vadd.f32 %v2543, %v2565
    %2567 = vmatmul.f32.gmra.mxu0 %v2083
    %v2568 = vpop.f32.mrf.mxu0
    %v2569 = vadd.f32 %v2546, %v2568
    %2570 = vdwg.mxu0
    %2571 = vmatpush.msra.mxu0 %v2290
    %2572 = vmatpush.msra.mxu0 %v2289
    %2573 = vmatpush.msra.mxu0 %v2288
    %2574 = vmatpush.msra.mxu0 %v2287
    %2575 = vmatpush.msra.mxu0 %v2286
    %2576 = vmatpush.msra.mxu0 %v2285
    %2577 = vmatpush.msra.mxu0 %v2284
    %2578 = vmatpush.msra.mxu0 %v2283
    %2579 = vmatpush.msra.mxu0 %v2282
    %2580 = vmatpush.msra.mxu0 %v2281
    %2581 = vmatpush.msra.mxu0 %v2280
    %2582 = vmatpush.msra.mxu0 %v2279
    %2583 = vmatpush.msra.mxu0 %v2278
    %2584 = vmatpush.msra.mxu0 %v2277
    %2585 = vmatpush.msra.mxu0 %v2276
    %2586 = vmatpush.msra.mxu0 %v2275
    %2587 = vmatmul.f32.gmra.mxu0 %v2079
    %v2588 = vpop.f32.mrf.mxu0
    %v2589 = vadd.f32 %v2566, %v2588
    %2590 = vmatmul.f32.gmra.mxu0 %v2085
    %v2591 = vpop.f32.mrf.mxu0
    %v2592 = vadd.f32 %v2569, %v2591
    %2593 = vdwg.mxu0
    %2594 = vmatpush.msra.mxu0 %v2306
    %2595 = vmatpush.msra.mxu0 %v2305
    %2596 = vmatpush.msra.mxu0 %v2304
    %2597 = vmatpush.msra.mxu0 %v2303
    %2598 = vmatpush.msra.mxu0 %v2302
    %2599 = vmatpush.msra.mxu0 %v2301
    %2600 = vmatpush.msra.mxu0 %v2300
    %2601 = vmatpush.msra.mxu0 %v2299
    %2602 = vmatpush.msra.mxu0 %v2298
    %2603 = vmatpush.msra.mxu0 %v2297
    %2604 = vmatpush.msra.mxu0 %v2296
    %2605 = vmatpush.msra.mxu0 %v2295
    %2606 = vmatpush.msra.mxu0 %v2294
    %2607 = vmatpush.msra.mxu0 %v2293
    %2608 = vmatpush.msra.mxu0 %v2292
    %2609 = vmatpush.msra.mxu0 %v2291
    %2610 = vmatmul.f32.gmra.mxu0 %v2101
    %v2611 = vpop.f32.mrf.mxu0
    %v2612 = vadd.f32 %v2589, %v2611
    %2613 = vmatmul.f32.gmra.mxu0 %v2109
    %v2614 = vpop.f32.mrf.mxu0
    %v2615 = vadd.f32 %v2592, %v2614
    %2616 = vdwg.mxu0
    %2617 = vmatpush.msra.mxu0 %v2322
    %2618 = vmatpush.msra.mxu0 %v2321
    %2619 = vmatpush.msra.mxu0 %v2320
    %2620 = vmatpush.msra.mxu0 %v2319
    %2621 = vmatpush.msra.mxu0 %v2318
    %2622 = vmatpush.msra.mxu0 %v2317
    %2623 = vmatpush.msra.mxu0 %v2316
    %2624 = vmatpush.msra.mxu0 %v2315
    %2625 = vmatpush.msra.mxu0 %v2314
    %2626 = vmatpush.msra.mxu0 %v2313
    %2627 = vmatpush.msra.mxu0 %v2312
    %2628 = vmatpush.msra.mxu0 %v2311
    %2629 = vmatpush.msra.mxu0 %v2310
    %2630 = vmatpush.msra.mxu0 %v2309
    %2631 = vmatpush.msra.mxu0 %v2308
    %2632 = vmatpush.msra.mxu0 %v2307
    %2633 = vmatmul.f32.gmra.mxu0 %v2104
    %v2634 = vpop.f32.mrf.mxu0
    %v2635 = vadd.f32 %v2612, %v2634
    %2636 = vmatmul.f32.gmra.mxu0 %v2111
    %v2637 = vpop.f32.mrf.mxu0
    %v2638 = vadd.f32 %v2615, %v2637
    %2639 = vdwg.mxu0
    %2640 = vmatpush.msra.mxu0 %v2338
    %2641 = vmatpush.msra.mxu0 %v2337
    %2642 = vmatpush.msra.mxu0 %v2336
    %2643 = vmatpush.msra.mxu0 %v2335
    %2644 = vmatpush.msra.mxu0 %v2334
    %2645 = vmatpush.msra.mxu0 %v2333
    %2646 = vmatpush.msra.mxu0 %v2332
    %2647 = vmatpush.msra.mxu0 %v2331
    %2648 = vmatpush.msra.mxu0 %v2330
    %2649 = vmatpush.msra.mxu0 %v2329
    %2650 = vmatpush.msra.mxu0 %v2328
    %2651 = vmatpush.msra.mxu0 %v2327
    %2652 = vmatpush.msra.mxu0 %v2326
    %2653 = vmatpush.msra.mxu0 %v2325
    %2654 = vmatpush.msra.mxu0 %v2324
    %2655 = vmatpush.msra.mxu0 %v2323
    %2656 = vmatmul.f32.gmra.mxu0 %v2107
    %v2657 = vpop.f32.mrf.mxu0
    %v2658 = vadd.f32 %v2635, %v2657
    %2659 = vmatmul.f32.gmra.mxu0 %v2113
    %v2660 = vpop.f32.mrf.mxu0
    %v2661 = vadd.f32 %v2638, %v2660
    %2662 = vdwg.mxu0
    %2663 = vmatpush.msra.mxu0 %v2354
    %2664 = vmatpush.msra.mxu0 %v2353
    %2665 = vmatpush.msra.mxu0 %v2352
    %2666 = vmatpush.msra.mxu0 %v2351
    %2667 = vmatpush.msra.mxu0 %v2350
    %2668 = vmatpush.msra.mxu0 %v2349
    %2669 = vmatpush.msra.mxu0 %v2348
    %2670 = vmatpush.msra.mxu0 %v2347
    %2671 = vmatpush.msra.mxu0 %v2346
    %2672 = vmatpush.msra.mxu0 %v2345
    %2673 = vmatpush.msra.mxu0 %v2344
    %2674 = vmatpush.msra.mxu0 %v2343
    %2675 = vmatpush.msra.mxu0 %v2342
    %2676 = vmatpush.msra.mxu0 %v2341
    %2677 = vmatpush.msra.mxu0 %v2340
    %2678 = vmatpush.msra.mxu0 %v2339
    %2679 = vmatmul.f32.gmra.mxu0 %v2128
    %v2680 = vpop.f32.mrf.mxu0
    %v2681 = vadd.f32 %v2658, %v2680
    %2682 = vmatmul.f32.gmra.mxu0 %v2136
    %v2683 = vpop.f32.mrf.mxu0
    %v2684 = vadd.f32 %v2661, %v2683
    %2685 = vdwg.mxu0
    %2686 = vmatpush.msra.mxu0 %v2370
    %2687 = vmatpush.msra.mxu0 %v2369
    %2688 = vmatpush.msra.mxu0 %v2368
    %2689 = vmatpush.msra.mxu0 %v2367
    %2690 = vmatpush.msra.mxu0 %v2366
    %2691 = vmatpush.msra.mxu0 %v2365
    %2692 = vmatpush.msra.mxu0 %v2364
    %2693 = vmatpush.msra.mxu0 %v2363
    %2694 = vmatpush.msra.mxu0 %v2362
    %2695 = vmatpush.msra.mxu0 %v2361
    %2696 = vmatpush.msra.mxu0 %v2360
    %2697 = vmatpush.msra.mxu0 %v2359
    %2698 = vmatpush.msra.mxu0 %v2358
    %2699 = vmatpush.msra.mxu0 %v2357
    %2700 = vmatpush.msra.mxu0 %v2356
    %2701 = vmatpush.msra.mxu0 %v2355
    %2702 = vmatmul.f32.gmra.mxu0 %v2131
    %v2703 = vpop.f32.mrf.mxu0
    %v2704 = vadd.f32 %v2681, %v2703
    %2705 = vmatmul.f32.gmra.mxu0 %v2138
    %v2706 = vpop.f32.mrf.mxu0
    %v2707 = vadd.f32 %v2684, %v2706
    %2708 = vdwg.mxu0
    %2709 = vmatpush.msra.mxu0 %v2386
    %2710 = vmatpush.msra.mxu0 %v2385
    %2711 = vmatpush.msra.mxu0 %v2384
    %2712 = vmatpush.msra.mxu0 %v2383
    %2713 = vmatpush.msra.mxu0 %v2382
    %2714 = vmatpush.msra.mxu0 %v2381
    %2715 = vmatpush.msra.mxu0 %v2380
    %2716 = vmatpush.msra.mxu0 %v2379
    %2717 = vmatpush.msra.mxu0 %v2378
    %2718 = vmatpush.msra.mxu0 %v2377
    %2719 = vmatpush.msra.mxu0 %v2376
    %2720 = vmatpush.msra.mxu0 %v2375
    %2721 = vmatpush.msra.mxu0 %v2374
    %2722 = vmatpush.msra.mxu0 %v2373
    %2723 = vmatpush.msra.mxu0 %v2372
    %2724 = vmatpush.msra.mxu0 %v2371
    %2725 = vmatmul.f32.gmra.mxu0 %v2134
    %v2726 = vpop.f32.mrf.mxu0
    %v2727 = vadd.f32 %v2704, %v2726
    %2728 = vmatmul.f32.gmra.mxu0 %v2140
    %v2729 = vpop.f32.mrf.mxu0
    %v2730 = vadd.f32 %v2707, %v2729
    %2731 = vdwg.mxu0
    %v2732 = vsub.f32 %v1999, %v2727
    %v2733 = vsub.f32 %v2002, %v2730
    %v2734 = vmul.f32 %v2732, %v2732
    %v2735 = vmul.f32 %v2733, %v2733
    %v2736 = vadd.f32 %v2734, %v2735
    %2737 = vadd.xlane.f32.xlu0 %v2736
    %v2738 = vpop.xlane.xlu0 %2737
    %v2739 = vrot.slane %v2738, 4
    %v2740 = vadd.f32 %v2738, %v2739
    %v2741 = vrot.slane %v2740, 2
    %v2742 = vadd.f32 %v2740, %v2741
    %v2743 = vrot.slane %v2742, 1
    %v2744 = vadd.f32 %v2742, %v2743
    %s2745 = vtos %v2744
    %v2746 = vstv %s2745
    %vm2747 = vcmask 0
    %2748 = vst.msk [vmem:[#allocation10] sm:$0x1] %vm2747, %v2746
    // Predicated region
    $region30: #{loss_fn.1} parent=1 // pred_check
      _
    $region31: #{loss_fn.1} parent=1 // pred_check_branch
      %2750 = sbr.rel (0) target = $region33
    $region32: #{loss_fn.1} parent=1 // pred_region
      %2752 = vsyncadd [#allocation6], 0
      %s2754 = sshll.u32 [#allocation10], 4
      %s2755 = int_to_ptr.vmem [resolvable:$true] %s2754
      %s2756 = sshll.u32 %s4, 4
      %s2757 = int_to_ptr.hbm [resolvable:$true] %s2756
      %2759 = dma.vmem_to_hbm [thread:$0]  %s2755, 16, %s2757, [#allocation6]
    $region33: #{loss_fn.1} parent=1 // pred_fallthru
      _
    // Predicated region
    $region34: #{loss_fn.1} parent=1 // pred_check
      _
    $region35: #{loss_fn.1} parent=1 // pred_check_branch
      %2761 = sbr.rel (0) target = $region37
    $region36: #{loss_fn.1} parent=1 // pred_region
      %2763 = dma.done [#allocation6], 16
    $region37: #{loss_fn.1} parent=1 // pred_fallthru
      _
    %2764 = vsyncpa [#allocation5], 1
    %2765 = vsyncpa [#allocation8], 1
    %2766 = vsyncpa [#allocation6], 1

</llo_original>
